<compile_context>
chip_gen: v5e
topology: v5e:2x2
jax: 0.10.0
libtpu: 0.0.40
codegen_flags: <defaults>
</compile_context>

<pallas_src>
import functools

import jax
import jax.numpy as jnp
from jax.experimental import pallas as pl
from jax.experimental.pallas import tpu as pltpu

N_INPUT = 784
H1, H2, H3, H4 = 1024, 512, 256, 1
LEAKY_SLOPE = 0.2


def _round_up(n, m):
    return ((n + m - 1) // m) * m


def _pick_batch_tile(B):
    """>= 2 tiles whenever possible (megacore / v7x 'parallel' axis), 8-row grain,
    capped at 512 rows per tile."""
    if B <= 8:
        return 8
    return min(512, _round_up((B + 1) // 2, 8))


def _epilogue_dtype():
    """bf16 epilogues on chips with a bf16 VPU (v6e / v7x); f32 on v5-and-older."""
    try:
        kind = jax.devices()[0].device_kind.lower()
    except Exception:
        return jnp.bfloat16
    if any(old in kind for old in ("v2", "v3", "v4", "v5")):
        return jnp.float32
    return jnp.bfloat16


def _make_kernel(epilogue_dtype):
    def kernel(x_ref,
               w1_ref, b1_ref,
               w2_ref, b2_ref,
               w3_ref, b3_ref,
               w4_ref, b4_ref,
               o_ref):
        # x_ref: (batch_tile, 784) f32; weights bf16; b1..b3 in epilogue dtype;
        # w4/b4 f32.  Matmuls accumulate in f32 on the MXU.

        def bias_leaky(acc_f32, b_ref):
            # Dropout(0.3): identity (eval mode).
            a = acc_f32.astype(epilogue_dtype) + b_ref[...]
            return jnp.maximum(a, a * LEAKY_SLOPE)          # LeakyReLU(0.2)

        x = x_ref[...].astype(jnp.bfloat16)                  # in-kernel cast (no wrapper pass)
        h = bias_leaky(jnp.dot(x, w1_ref[...],
                               preferred_element_type=jnp.float32), b1_ref)
        h = bias_leaky(jnp.dot(h.astype(jnp.bfloat16), w2_ref[...],
                               preferred_element_type=jnp.float32), b2_ref)
        h = bias_leaky(jnp.dot(h.astype(jnp.bfloat16), w3_ref[...],
                               preferred_element_type=jnp.float32), b3_ref)

        # Final layer (out_features = 1): lane-wise multiply + cross-lane reduce
        # on the VPU/XLU instead of a 1-column MXU matmul.  Emitted as a
        # lane-dense (1, batch_tile) row so the store is a full-lane vst.
        h32 = h.astype(jnp.float32)
        logits = jnp.sum(h32 * w4_ref[...], axis=-1)         # (batch_tile,)
        row = logits.reshape(1, -1) + b4_ref[...]            # (1, batch_tile)
        o_ref[...] = jax.nn.sigmoid(row).reshape(o_ref.shape)

    return kernel


@functools.partial(jax.jit, static_argnames=("batch_tile",))
def discriminator_forward(x, params, batch_tile=None):
    """x: any shape whose trailing elements flatten to 784 per row (torch .view(-1, 784))."""
    x2d = x.reshape(-1, N_INPUT)                             # view-style reshape, no pad/cast pass
    B = x2d.shape[0]
    if batch_tile is None:
        batch_tile = _pick_batch_tile(B)
    num_tiles = (B + batch_tile - 1) // batch_tile

    (w1, b1), (w2, b2), (w3, b3), (w4, b4) = params
    ep_dtype = _epilogue_dtype()

    # Weight-only casts (a few MB total; the large input array is untouched here).
    w1b = w1.astype(jnp.bfloat16)                            # (784, 1024)
    w2b = w2.astype(jnp.bfloat16)                            # (1024, 512)
    w3b = w3.astype(jnp.bfloat16)                            # (512, 256)
    w4f = w4.astype(jnp.float32).reshape(1, H3)              # (1, 256)
    b1e = b1.astype(ep_dtype).reshape(1, H1)
    b2e = b2.astype(ep_dtype).reshape(1, H2)
    b3e = b3.astype(ep_dtype).reshape(1, H3)
    b4f = b4.astype(jnp.float32).reshape(1, 1)

    # Weights/biases: full-array blocks, constant index_map (resident across tiles).
    def const_spec(shape):
        return pl.BlockSpec(shape, lambda i: (0,) * len(shape))

    operands = (x2d, w1b, b1e, w2b, b2e, w3b, b3e, w4f, b4f)
    bytes_accessed = (sum(int(a.size) * a.dtype.itemsize for a in operands)
                      + num_tiles * batch_tile * 4)
    flops = 2 * num_tiles * batch_tile * (N_INPUT * H1 + H1 * H2 + H2 * H3 + H3 * H4)

    out = pl.pallas_call(
        _make_kernel(ep_dtype),
        out_shape=jax.ShapeDtypeStruct((num_tiles, 1, batch_tile), jnp.float32),
        grid_spec=pltpu.PrefetchScalarGridSpec(
            num_scalar_prefetch=0,
            grid=(num_tiles,),
            in_specs=[
                pl.BlockSpec((batch_tile, N_INPUT), lambda i: (i, 0)),   # x tile (f32)
                const_spec(w1b.shape), const_spec(b1e.shape),
                const_spec(w2b.shape), const_spec(b2e.shape),
                const_spec(w3b.shape), const_spec(b3e.shape),
                const_spec(w4f.shape), const_spec(b4f.shape),
            ],
            out_specs=pl.BlockSpec((1, 1, batch_tile), lambda i: (i, 0, 0)),
        ),
        compiler_params=pltpu.CompilerParams(
            dimension_semantics=("parallel",),
            vmem_limit_bytes=32 << 20,
        ),
        cost_estimate=pl.CostEstimate(
            flops=flops,
            transcendentals=num_tiles * batch_tile,          # one sigmoid per row
            bytes_accessed=bytes_accessed,
        ),
    )(*operands)

    # (num_tiles, 1, batch_tile) lane-dense rows -> (B, 1); ragged-tail garbage
    # rows (never materialized in HBM beyond this tiny output) are sliced off.
    return out.reshape(-1)[:B].reshape(B, 1)


def init_params(key):
    """Deterministic init mimicking nn.Linear's uniform(-1/sqrt(fan_in), 1/sqrt(fan_in))."""
    dims = [(N_INPUT, H1), (H1, H2), (H2, H3), (H3, H4)]
    params = []
    for (fan_in, fan_out) in dims:
        key, kw, kb = jax.random.split(key, 3)
        bound = 1.0 / jnp.sqrt(jnp.float32(fan_in))
        w = jax.random.uniform(kw, (fan_in, fan_out), jnp.float32, -bound, bound)
        b = jax.random.uniform(kb, (1, fan_out), jnp.float32, -bound, bound)
        params.append((w, b))
    return tuple(params)


def reference_forward(x, params):
    """Pure-JAX f32 reference matching the PyTorch module (eval mode)."""
    h = x.reshape(-1, N_INPUT)
    (w1, b1), (w2, b2), (w3, b3), (w4, b4) = params
    for (w, b) in ((w1, b1), (w2, b2), (w3, b3)):
        h = h @ w + b
        h = jnp.where(h > 0, h, LEAKY_SLOPE * h)
    h = h @ w4 + b4
    return jax.nn.sigmoid(h)


if __name__ == "__main__":
    key = jax.random.PRNGKey(0)
    k_params, k_x = jax.random.split(key)

    params = init_params(k_params)

    # Small batch of MNIST-shaped inputs (B, 1, 28, 28); forward flattens to (B, 784).
    # B=20 exercises 2 grid tiles (batch_tile=16) including a ragged last block.
    B = 20
    x = jax.random.normal(k_x, (B, 1, 28, 28), jnp.float32)

    out = jax.block_until_ready(discriminator_forward(x, params))

    ref = reference_forward(x, params)
    assert out.shape == (B, 1)
    # Loose tolerance: kernel uses bf16 matmul inputs (f32 accumulation) and, on
    # v6e/v7x, bf16 inter-layer epilogues vs the f32 reference.
    assert jnp.allclose(out, ref, atol=4e-2, rtol=0.0), "mismatch vs pure-JAX reference"

    print("KERNEL_OK")
</pallas_src>

<mosaic_0001>
module attributes {stable_mosaic.version = 11 : i64} {
  func.func @kernel(%arg0: i32, %arg1: memref<16x784xf32, #tpu.memory_space<vmem>>, %arg2: memref<784x1024xbf16, #tpu.memory_space<vmem>>, %arg3: memref<1x1024xbf16, #tpu.memory_space<vmem>>, %arg4: memref<1024x512xbf16, #tpu.memory_space<vmem>>, %arg5: memref<1x512xbf16, #tpu.memory_space<vmem>>, %arg6: memref<512x256xbf16, #tpu.memory_space<vmem>>, %arg7: memref<1x256xbf16, #tpu.memory_space<vmem>>, %arg8: memref<1x256xf32, #tpu.memory_space<vmem>>, %arg9: memref<1x1xf32, #tpu.memory_space<vmem>>, %arg10: memref<1x1x16xf32, #tpu.memory_space<vmem>>) attributes {dimension_semantics = [#tpu.dimension_semantics<parallel>], iteration_bounds = array<i64: 2>, scalar_prefetch = 0 : i64, scratch_operands = 0 : i64, tpu.core_type = #tpu.core_type<tc>, window_params = [{transform_indices = @transform_0, window_bounds = array<i64: 16, 784>}, {pipeline_mode = #tpu.pipeline_mode<synchronous>, transform_indices = @transform_1, window_bounds = array<i64: 784, 1024>}, {pipeline_mode = #tpu.pipeline_mode<synchronous>, transform_indices = @transform_2, window_bounds = array<i64: 1, 1024>}, {pipeline_mode = #tpu.pipeline_mode<synchronous>, transform_indices = @transform_3, window_bounds = array<i64: 1024, 512>}, {pipeline_mode = #tpu.pipeline_mode<synchronous>, transform_indices = @transform_4, window_bounds = array<i64: 1, 512>}, {pipeline_mode = #tpu.pipeline_mode<synchronous>, transform_indices = @transform_5, window_bounds = array<i64: 512, 256>}, {pipeline_mode = #tpu.pipeline_mode<synchronous>, transform_indices = @transform_6, window_bounds = array<i64: 1, 256>}, {pipeline_mode = #tpu.pipeline_mode<synchronous>, transform_indices = @transform_7, window_bounds = array<i64: 1, 256>}, {pipeline_mode = #tpu.pipeline_mode<synchronous>, transform_indices = @transform_8, window_bounds = array<i64: 1, 1>}, {transform_indices = @transform_9, window_bounds = array<i64: 1, 1, 16>}]} {
    %c0 = arith.constant 0 : index
    %c0_0 = arith.constant 0 : index
    %0 = vector.load %arg1[%c0, %c0_0] : memref<16x784xf32, #tpu.memory_space<vmem>>, vector<16x784xf32>
    %1 = arith.truncf %0 : vector<16x784xf32> to vector<16x784xbf16>
    %c0_1 = arith.constant 0 : index
    %c0_2 = arith.constant 0 : index
    %2 = vector.load %arg2[%c0_1, %c0_2] : memref<784x1024xbf16, #tpu.memory_space<vmem>>, vector<784x1024xbf16>
    %cst = arith.constant dense<0.000000e+00> : vector<16x1024xf32>
    %3 = tpu.matmul %1, %2, %cst {dimension_numbers = #tpu.dot_dimension_numbers<[1], [0], [0], [1], [0, 0, 1, 1], [], []>} : vector<16x784xbf16>, vector<784x1024xbf16>, vector<16x1024xf32> -> vector<16x1024xf32>
    %4 = arith.truncf %3 : vector<16x1024xf32> to vector<16x1024xbf16>
    %c0_3 = arith.constant 0 : index
    %c0_4 = arith.constant 0 : index
    %5 = vector.load %arg3[%c0_3, %c0_4] : memref<1x1024xbf16, #tpu.memory_space<vmem>>, vector<1x1024xbf16>
    %6 = vector.broadcast %5 : vector<1x1024xbf16> to vector<16x1024xbf16>
    %7 = arith.addf %4, %6 : vector<16x1024xbf16>
    %cst_5 = arith.constant 2.001950e-01 : bf16
    %8 = vector.broadcast %cst_5 : bf16 to vector<16x1024xbf16>
    %9 = arith.mulf %7, %8 : vector<16x1024xbf16>
    %10 = arith.maximumf %7, %9 : vector<16x1024xbf16>
    %c0_6 = arith.constant 0 : index
    %c0_7 = arith.constant 0 : index
    %11 = vector.load %arg4[%c0_6, %c0_7] : memref<1024x512xbf16, #tpu.memory_space<vmem>>, vector<1024x512xbf16>
    %cst_8 = arith.constant dense<0.000000e+00> : vector<16x512xf32>
    %12 = tpu.matmul %10, %11, %cst_8 {dimension_numbers = #tpu.dot_dimension_numbers<[1], [0], [0], [1], [0, 0, 1, 1], [], []>} : vector<16x1024xbf16>, vector<1024x512xbf16>, vector<16x512xf32> -> vector<16x512xf32>
    %13 = arith.truncf %12 : vector<16x512xf32> to vector<16x512xbf16>
    %c0_9 = arith.constant 0 : index
    %c0_10 = arith.constant 0 : index
    %14 = vector.load %arg5[%c0_9, %c0_10] : memref<1x512xbf16, #tpu.memory_space<vmem>>, vector<1x512xbf16>
    %15 = vector.broadcast %14 : vector<1x512xbf16> to vector<16x512xbf16>
    %16 = arith.addf %13, %15 : vector<16x512xbf16>
    %cst_11 = arith.constant 2.001950e-01 : bf16
    %17 = vector.broadcast %cst_11 : bf16 to vector<16x512xbf16>
    %18 = arith.mulf %16, %17 : vector<16x512xbf16>
    %19 = arith.maximumf %16, %18 : vector<16x512xbf16>
    %c0_12 = arith.constant 0 : index
    %c0_13 = arith.constant 0 : index
    %20 = vector.load %arg6[%c0_12, %c0_13] : memref<512x256xbf16, #tpu.memory_space<vmem>>, vector<512x256xbf16>
    %cst_14 = arith.constant dense<0.000000e+00> : vector<16x256xf32>
    %21 = tpu.matmul %19, %20, %cst_14 {dimension_numbers = #tpu.dot_dimension_numbers<[1], [0], [0], [1], [0, 0, 1, 1], [], []>} : vector<16x512xbf16>, vector<512x256xbf16>, vector<16x256xf32> -> vector<16x256xf32>
    %22 = arith.truncf %21 : vector<16x256xf32> to vector<16x256xbf16>
    %c0_15 = arith.constant 0 : index
    %c0_16 = arith.constant 0 : index
    %23 = vector.load %arg7[%c0_15, %c0_16] : memref<1x256xbf16, #tpu.memory_space<vmem>>, vector<1x256xbf16>
    %24 = vector.broadcast %23 : vector<1x256xbf16> to vector<16x256xbf16>
    %25 = arith.addf %22, %24 : vector<16x256xbf16>
    %cst_17 = arith.constant 2.001950e-01 : bf16
    %26 = vector.broadcast %cst_17 : bf16 to vector<16x256xbf16>
    %27 = arith.mulf %25, %26 : vector<16x256xbf16>
    %28 = arith.maximumf %25, %27 : vector<16x256xbf16>
    %29 = arith.extf %28 : vector<16x256xbf16> to vector<16x256xf32>
    %c0_18 = arith.constant 0 : index
    %c0_19 = arith.constant 0 : index
    %30 = vector.load %arg8[%c0_18, %c0_19] : memref<1x256xf32, #tpu.memory_space<vmem>>, vector<1x256xf32>
    %31 = vector.broadcast %30 : vector<1x256xf32> to vector<16x256xf32>
    %32 = arith.mulf %29, %31 : vector<16x256xf32>
    %cst_20 = arith.constant dense<0.000000e+00> : vector<16xf32>
    %33 = vector.multi_reduction <add>, %32, %cst_20 [1] : vector<16x256xf32> to vector<16xf32>
    %34 = vector.shape_cast %33 : vector<16xf32> to vector<1x16xf32>
    %c0_21 = arith.constant 0 : index
    %c0_22 = arith.constant 0 : index
    %35 = vector.load %arg9[%c0_21, %c0_22] : memref<1x1xf32, #tpu.memory_space<vmem>>, vector<1x1xf32>
    %36 = vector.broadcast %35 : vector<1x1xf32> to vector<1x16xf32>
    %37 = arith.addf %34, %36 : vector<1x16xf32>
    %38 = arith.negf %37 : vector<1x16xf32>
    %39 = math.exp %38 : vector<1x16xf32>
    %cst_23 = arith.constant 1.000000e+00 : f32
    %40 = vector.broadcast %cst_23 : f32 to vector<1x16xf32>
    %41 = arith.addf %40, %39 : vector<1x16xf32>
    %42 = arith.divf %40, %41 : vector<1x16xf32>
    %43 = vector.shape_cast %42 : vector<1x16xf32> to vector<1x1x16xf32>
    %c0_24 = arith.constant 0 : index
    %c0_25 = arith.constant 0 : index
    %c0_26 = arith.constant 0 : index
    %44 = vector.load %arg10[%c0_24, %c0_25, %c0_26] : memref<1x1x16xf32, #tpu.memory_space<vmem>>, vector<1x1x16xf32>
    tpu.vector_store %arg10[%c0_24, %c0_25, %c0_26], %43 {strides = array<i32>} : memref<1x1x16xf32, #tpu.memory_space<vmem>>, vector<1x1x16xf32>,
    return
  }
  func.func @transform_0(%arg0: i32) -> (i32, i32) {
    %c0_i32 = arith.constant 0 : i32
    %c0_i32_0 = arith.constant 0 : i32
    return %arg0, %c0_i32 : i32, i32
  }
  func.func @transform_1(%arg0: i32) -> (i32, i32) {
    %c0_i32 = arith.constant 0 : i32
    %c0_i32_0 = arith.constant 0 : i32
    %c0_i32_1 = arith.constant 0 : i32
    return %c0_i32, %c0_i32_0 : i32, i32
  }
  func.func @transform_2(%arg0: i32) -> (i32, i32) {
    %c0_i32 = arith.constant 0 : i32
    %c0_i32_0 = arith.constant 0 : i32
    %c0_i32_1 = arith.constant 0 : i32
    return %c0_i32, %c0_i32_0 : i32, i32
  }
  func.func @transform_3(%arg0: i32) -> (i32, i32) {
    %c0_i32 = arith.constant 0 : i32
    %c0_i32_0 = arith.constant 0 : i32
    %c0_i32_1 = arith.constant 0 : i32
    return %c0_i32, %c0_i32_0 : i32, i32
  }
  func.func @transform_4(%arg0: i32) -> (i32, i32) {
    %c0_i32 = arith.constant 0 : i32
    %c0_i32_0 = arith.constant 0 : i32
    %c0_i32_1 = arith.constant 0 : i32
    return %c0_i32, %c0_i32_0 : i32, i32
  }
  func.func @transform_5(%arg0: i32) -> (i32, i32) {
    %c0_i32 = arith.constant 0 : i32
    %c0_i32_0 = arith.constant 0 : i32
    %c0_i32_1 = arith.constant 0 : i32
    return %c0_i32, %c0_i32_0 : i32, i32
  }
  func.func @transform_6(%arg0: i32) -> (i32, i32) {
    %c0_i32 = arith.constant 0 : i32
    %c0_i32_0 = arith.constant 0 : i32
    %c0_i32_1 = arith.constant 0 : i32
    return %c0_i32, %c0_i32_0 : i32, i32
  }
  func.func @transform_7(%arg0: i32) -> (i32, i32) {
    %c0_i32 = arith.constant 0 : i32
    %c0_i32_0 = arith.constant 0 : i32
    %c0_i32_1 = arith.constant 0 : i32
    return %c0_i32, %c0_i32_0 : i32, i32
  }
  func.func @transform_8(%arg0: i32) -> (i32, i32) {
    %c0_i32 = arith.constant 0 : i32
    %c0_i32_0 = arith.constant 0 : i32
    %c0_i32_1 = arith.constant 0 : i32
    return %c0_i32, %c0_i32_0 : i32, i32
  }
  func.func @transform_9(%arg0: i32) -> (i32, i32, i32) {
    %c0_i32 = arith.constant 0 : i32
    %c0_i32_0 = arith.constant 0 : i32
    %c0_i32_1 = arith.constant 0 : i32
    return %arg0, %c0_i32, %c0_i32_0 : i32, i32, i32
  }
}

</mosaic_0001>

<llo_original>
// kernel: discriminator_forward.1
$region0: #{discriminator_forward.1}
  #allocation0 [shape = 'u32[]', space=smem, size = 0x4, offset = 0x4, fixed_abs, tag = 'smem constant byte address 0x4 - core index']
  #allocation1 [shape = 'u32[72,128]{1,0:T(1,128)}', space=vmem, size = 0x9000, scoped, tag = 'internal scratch']
  #allocation2 [shape = 'f32[1,1]{1,0:T(1,128)S(1)}', space=vmem, size = 0x200, scoped, tag = 'scoped memory for discriminator_forward.1']
  %s0 = inlined_call_operand.vmem [shape: f32[20,784], index: 0, kind: input, shape index: {}]
  %s1 = inlined_call_operand.vmem [shape: bf16[784,1024], index: 1, kind: input, shape index: {}]
  %s2 = inlined_call_operand.vmem [shape: bf16[1,1024], index: 2, kind: input, shape index: {}]
  %s3 = inlined_call_operand.vmem [shape: bf16[1024,512], index: 3, kind: input, shape index: {}]
  %s4 = inlined_call_operand.vmem [shape: bf16[1,512], index: 4, kind: input, shape index: {}]
  %s5 = inlined_call_operand.vmem [shape: bf16[512,256], index: 5, kind: input, shape index: {}]
  %s6 = inlined_call_operand.vmem [shape: bf16[1,256], index: 6, kind: input, shape index: {}]
  %s7 = inlined_call_operand.vmem [shape: f32[1,256], index: 7, kind: input, shape index: {}]
  %s8 = inlined_call_operand.<no memory space> [shape: f32[1,1], index: 8, kind: input, shape index: {}]
  %s9 = inlined_call_operand.vmem [shape: f32[2,1,16], index: 9, kind: output, shape index: {}]
  %s10 = sld [smem:[#allocation0]]
  $region69: #{discriminator_forward.1} parent=0
    _
  %s12 = ssub.s32 1, %s10
  %s13 = scalar_select 0, %s12, %s10
  %v14 = vstv %s8
  %15 = vst [vmem:[#allocation2] sm:$0x1] %v14
  loop: start=0, step=1, limit=4
  $region2: #{discriminator_forward.1} parent=0 // loop_pre_header
    _
  $region3: #{discriminator_forward.1} parent=0 // loop_header
    %s17 = sphi 0, %s21
    %p18 = scmp.ge.s32.totalorder %s17, 4
    %s27 = sphi 0, %s29
    %s30 = sphi 0, %s27
    %s31 = sphi 0, %s30
    %s47 = sphi 0, %s31
    %s51 = sphi 0, %s51
    %s53 = sphi 0, %s51
    %s54 = sphi 0, %s53
    %s68 = sphi 0, %s54
    %s72 = sphi 0, %s72
    %s74 = sphi 0, %s72
    %s75 = sphi 0, %s74
    %s89 = sphi 0, %s75
    %s93 = sphi 0, %s93
    %s95 = sphi 0, %s93
    %s96 = sphi 0, %s95
    %s110 = sphi 0, %s96
    %s114 = sphi 0, %s114
    %s116 = sphi 0, %s114
    %s117 = sphi 0, %s116
    %s131 = sphi 0, %s117
    %s135 = sphi 0, %s135
    %s137 = sphi 0, %s135
    %s138 = sphi 0, %s137
    %s152 = sphi 0, %s138
    %s156 = sphi 0, %s156
    %s158 = sphi 0, %s156
    %s159 = sphi 0, %s158
    %s173 = sphi 0, %s159
    %s177 = sphi 0, %s177
    %s179 = sphi 0, %s177
    %s180 = sphi 0, %s179
    %s194 = sphi 0, %s180
    %s198 = sphi 0, %s198
    %s200 = sphi 0, %s198
    %s201 = sphi 0, %s200
    %s215 = sphi 0, %s201
    %s221 = sphi 0, %s223
    %s224 = sphi 0, %s221
    %s225 = sphi 0, %s224
    %s241 = sphi 0, %s225
  $region4: #{discriminator_forward.1} parent=0 // loop_header_branch
    %20 = sbr.rel (%p18) target = $region8
  $region5: #{discriminator_forward.1} parent=0 // loop_body
    %s22 = ssub.s32 %s17, 1
    %s23 = ssub.s32 %s17, 2
    %s24 = sadd.s32 %s17, 1
    %s25 = ssub.s32 %s17, %s24
    %p26 = scmp.eq.s32.totalorder %s25, 0
    %s28 = sadd.s32 %s27, 1
    %s29 = scalar_select %p26, %s27, %s28
    %p32 = pneg %p26
    %p33 = scmp.eq.s32.totalorder %s17, 1
    %p34 = por %p32, %p33
    %p35 = scmp.ne.s32.totalorder %s27, %s30
    %p36 = scmp.eq.s32.totalorder %s17, 0
    %p37 = por %p35, %p36
    %p38 = scmp.ne.s32.totalorder %s27, %s30
    %p39 = scmp.eq.s32.totalorder %s22, 1
    %p40 = por %p38, %p39
    %p41 = scmp.ne.s32.totalorder %s30, %s31
    %p42 = scmp.eq.s32.totalorder %s22, 0
    %p43 = por %p41, %p42
    %p44 = scmp.ne.s32.totalorder %s30, %s31
    %p45 = scmp.eq.s32.totalorder %s23, 1
    %p46 = por %p44, %p45
    %p48 = scmp.ne.s32.totalorder %s31, %s47
    %p49 = scmp.eq.s32.totalorder %s23, 0
    %p50 = por %p48, %p49
    %s52 = sadd.s32 %s51, 1
    %p55 = scmp.eq.s32.totalorder %s17, 1
    %p56 = scmp.ne.s32.totalorder %s51, %s53
    %p57 = scmp.eq.s32.totalorder %s17, 0
    %p58 = por %p56, %p57
    %p59 = scmp.ne.s32.totalorder %s51, %s53
    %p60 = scmp.eq.s32.totalorder %s22, 1
    %p61 = por %p59, %p60
    %p62 = scmp.ne.s32.totalorder %s53, %s54
    %p63 = scmp.eq.s32.totalorder %s22, 0
    %p64 = por %p62, %p63
    %p65 = scmp.ne.s32.totalorder %s53, %s54
    %p66 = scmp.eq.s32.totalorder %s23, 1
    %p67 = por %p65, %p66
    %p69 = scmp.ne.s32.totalorder %s54, %s68
    %p70 = scmp.eq.s32.totalorder %s23, 0
    %p71 = por %p69, %p70
    %s73 = sadd.s32 %s72, 1
    %p76 = scmp.eq.s32.totalorder %s17, 1
    %p77 = scmp.ne.s32.totalorder %s72, %s74
    %p78 = scmp.eq.s32.totalorder %s17, 0
    %p79 = por %p77, %p78
    %p80 = scmp.ne.s32.totalorder %s72, %s74
    %p81 = scmp.eq.s32.totalorder %s22, 1
    %p82 = por %p80, %p81
    %p83 = scmp.ne.s32.totalorder %s74, %s75
    %p84 = scmp.eq.s32.totalorder %s22, 0
    %p85 = por %p83, %p84
    %p86 = scmp.ne.s32.totalorder %s74, %s75
    %p87 = scmp.eq.s32.totalorder %s23, 1
    %p88 = por %p86, %p87
    %p90 = scmp.ne.s32.totalorder %s75, %s89
    %p91 = scmp.eq.s32.totalorder %s23, 0
    %p92 = por %p90, %p91
    %s94 = sadd.s32 %s93, 1
    %p97 = scmp.eq.s32.totalorder %s17, 1
    %p98 = scmp.ne.s32.totalorder %s93, %s95
    %p99 = scmp.eq.s32.totalorder %s17, 0
    %p100 = por %p98, %p99
    %p101 = scmp.ne.s32.totalorder %s93, %s95
    %p102 = scmp.eq.s32.totalorder %s22, 1
    %p103 = por %p101, %p102
    %p104 = scmp.ne.s32.totalorder %s95, %s96
    %p105 = scmp.eq.s32.totalorder %s22, 0
    %p106 = por %p104, %p105
    %p107 = scmp.ne.s32.totalorder %s95, %s96
    %p108 = scmp.eq.s32.totalorder %s23, 1
    %p109 = por %p107, %p108
    %p111 = scmp.ne.s32.totalorder %s96, %s110
    %p112 = scmp.eq.s32.totalorder %s23, 0
    %p113 = por %p111, %p112
    %s115 = sadd.s32 %s114, 1
    %p118 = scmp.eq.s32.totalorder %s17, 1
    %p119 = scmp.ne.s32.totalorder %s114, %s116
    %p120 = scmp.eq.s32.totalorder %s17, 0
    %p121 = por %p119, %p120
    %p122 = scmp.ne.s32.totalorder %s114, %s116
    %p123 = scmp.eq.s32.totalorder %s22, 1
    %p124 = por %p122, %p123
    %p125 = scmp.ne.s32.totalorder %s116, %s117
    %p126 = scmp.eq.s32.totalorder %s22, 0
    %p127 = por %p125, %p126
    %p128 = scmp.ne.s32.totalorder %s116, %s117
    %p129 = scmp.eq.s32.totalorder %s23, 1
    %p130 = por %p128, %p129
    %p132 = scmp.ne.s32.totalorder %s117, %s131
    %p133 = scmp.eq.s32.totalorder %s23, 0
    %p134 = por %p132, %p133
    %s136 = sadd.s32 %s135, 1
    %p139 = scmp.eq.s32.totalorder %s17, 1
    %p140 = scmp.ne.s32.totalorder %s135, %s137
    %p141 = scmp.eq.s32.totalorder %s17, 0
    %p142 = por %p140, %p141
    %p143 = scmp.ne.s32.totalorder %s135, %s137
    %p144 = scmp.eq.s32.totalorder %s22, 1
    %p145 = por %p143, %p144
    %p146 = scmp.ne.s32.totalorder %s137, %s138
    %p147 = scmp.eq.s32.totalorder %s22, 0
    %p148 = por %p146, %p147
    %p149 = scmp.ne.s32.totalorder %s137, %s138
    %p150 = scmp.eq.s32.totalorder %s23, 1
    %p151 = por %p149, %p150
    %p153 = scmp.ne.s32.totalorder %s138, %s152
    %p154 = scmp.eq.s32.totalorder %s23, 0
    %p155 = por %p153, %p154
    %s157 = sadd.s32 %s156, 1
    %p160 = scmp.eq.s32.totalorder %s17, 1
    %p161 = scmp.ne.s32.totalorder %s156, %s158
    %p162 = scmp.eq.s32.totalorder %s17, 0
    %p163 = por %p161, %p162
    %p164 = scmp.ne.s32.totalorder %s156, %s158
    %p165 = scmp.eq.s32.totalorder %s22, 1
    %p166 = por %p164, %p165
    %p167 = scmp.ne.s32.totalorder %s158, %s159
    %p168 = scmp.eq.s32.totalorder %s22, 0
    %p169 = por %p167, %p168
    %p170 = scmp.ne.s32.totalorder %s158, %s159
    %p171 = scmp.eq.s32.totalorder %s23, 1
    %p172 = por %p170, %p171
    %p174 = scmp.ne.s32.totalorder %s159, %s173
    %p175 = scmp.eq.s32.totalorder %s23, 0
    %p176 = por %p174, %p175
    %s178 = sadd.s32 %s177, 1
    %p181 = scmp.eq.s32.totalorder %s17, 1
    %p182 = scmp.ne.s32.totalorder %s177, %s179
    %p183 = scmp.eq.s32.totalorder %s17, 0
    %p184 = por %p182, %p183
    %p185 = scmp.ne.s32.totalorder %s177, %s179
    %p186 = scmp.eq.s32.totalorder %s22, 1
    %p187 = por %p185, %p186
    %p188 = scmp.ne.s32.totalorder %s179, %s180
    %p189 = scmp.eq.s32.totalorder %s22, 0
    %p190 = por %p188, %p189
    %p191 = scmp.ne.s32.totalorder %s179, %s180
    %p192 = scmp.eq.s32.totalorder %s23, 1
    %p193 = por %p191, %p192
    %p195 = scmp.ne.s32.totalorder %s180, %s194
    %p196 = scmp.eq.s32.totalorder %s23, 0
    %p197 = por %p195, %p196
    %s199 = sadd.s32 %s198, 1
    %p202 = scmp.eq.s32.totalorder %s17, 1
    %p203 = scmp.ne.s32.totalorder %s198, %s200
    %p204 = scmp.eq.s32.totalorder %s17, 0
    %p205 = por %p203, %p204
    %p206 = scmp.ne.s32.totalorder %s198, %s200
    %p207 = scmp.eq.s32.totalorder %s22, 1
    %p208 = por %p206, %p207
    %p209 = scmp.ne.s32.totalorder %s200, %s201
    %p210 = scmp.eq.s32.totalorder %s22, 0
    %p211 = por %p209, %p210
    %p212 = scmp.ne.s32.totalorder %s200, %s201
    %p213 = scmp.eq.s32.totalorder %s23, 1
    %p214 = por %p212, %p213
    %p216 = scmp.ne.s32.totalorder %s201, %s215
    %p217 = scmp.eq.s32.totalorder %s23, 0
    %p218 = por %p216, %p217
    %s219 = ssub.s32 %s17, %s24
    %p220 = scmp.eq.s32.totalorder %s219, 0
    %s222 = sadd.s32 %s221, 1
    %s223 = scalar_select %p220, %s221, %s222
    %p226 = pneg %p220
    %p227 = scmp.eq.s32.totalorder %s17, 1
    %p228 = por %p226, %p227
    %p229 = scmp.ne.s32.totalorder %s221, %s224
    %p230 = scmp.eq.s32.totalorder %s17, 0
    %p231 = por %p229, %p230
    %p232 = scmp.ne.s32.totalorder %s221, %s224
    %p233 = scmp.eq.s32.totalorder %s22, 1
    %p234 = por %p232, %p233
    %p235 = scmp.ne.s32.totalorder %s224, %s225
    %p236 = scmp.eq.s32.totalorder %s22, 0
    %p237 = por %p235, %p236
    %p238 = scmp.ne.s32.totalorder %s224, %s225
    %p239 = scmp.eq.s32.totalorder %s23, 1
    %p240 = por %p238, %p239
    %p242 = scmp.ne.s32.totalorder %s225, %s241
    %p243 = scmp.eq.s32.totalorder %s23, 0
    %p244 = por %p242, %p243
    %p245 = scmp.le.s32.totalorder 1, %s17
    %p246 = scmp.lt.s32.totalorder %s17, 3
    %p247 = pnand %p245, %p246
    %p248 = pneg %p247
    // Predicated region
    $region9: #{discriminator_forward.1} parent=5 // pred_check
      _
    $region10: #{discriminator_forward.1} parent=5 // pred_check_branch
      %250 = sbr.rel (%p247) target = $region12
    $region11: #{discriminator_forward.1} parent=5 // pred_region
      %s251 = ssub.s32 %s17, 1
      // Predicated region
      $region13: #{discriminator_forward.1} parent=11 // pred_check
        %p252 = pneg %p64
      $region14: #{discriminator_forward.1} parent=11 // pred_check_branch
        %254 = sbr.rel (%p252) target = $region16
      $region15: #{discriminator_forward.1} parent=11 // pred_region
        _
      $region16: #{discriminator_forward.1} parent=11 // pred_fallthru
        _
      // Predicated region
      $region17: #{discriminator_forward.1} parent=11 // pred_check
        %p255 = pneg %p85
      $region18: #{discriminator_forward.1} parent=11 // pred_check_branch
        %257 = sbr.rel (%p255) target = $region20
      $region19: #{discriminator_forward.1} parent=11 // pred_region
        _
      $region20: #{discriminator_forward.1} parent=11 // pred_fallthru
        _
      // Predicated region
      $region21: #{discriminator_forward.1} parent=11 // pred_check
        %p258 = pneg %p106
      $region22: #{discriminator_forward.1} parent=11 // pred_check_branch
        %260 = sbr.rel (%p258) target = $region24
      $region23: #{discriminator_forward.1} parent=11 // pred_region
        _
      $region24: #{discriminator_forward.1} parent=11 // pred_fallthru
        _
      // Predicated region
      $region25: #{discriminator_forward.1} parent=11 // pred_check
        %p261 = pneg %p127
      $region26: #{discriminator_forward.1} parent=11 // pred_check_branch
        %263 = sbr.rel (%p261) target = $region28
      $region27: #{discriminator_forward.1} parent=11 // pred_region
        _
      $region28: #{discriminator_forward.1} parent=11 // pred_fallthru
        _
      // Predicated region
      $region29: #{discriminator_forward.1} parent=11 // pred_check
        %p264 = pneg %p148
      $region30: #{discriminator_forward.1} parent=11 // pred_check_branch
        %266 = sbr.rel (%p264) target = $region32
      $region31: #{discriminator_forward.1} parent=11 // pred_region
        _
      $region32: #{discriminator_forward.1} parent=11 // pred_fallthru
        _
      // Predicated region
      $region33: #{discriminator_forward.1} parent=11 // pred_check
        %p267 = pneg %p169
      $region34: #{discriminator_forward.1} parent=11 // pred_check_branch
        %269 = sbr.rel (%p267) target = $region36
      $region35: #{discriminator_forward.1} parent=11 // pred_region
        _
      $region36: #{discriminator_forward.1} parent=11 // pred_fallthru
        _
      // Predicated region
      $region37: #{discriminator_forward.1} parent=11 // pred_check
        %p270 = pneg %p190
      $region38: #{discriminator_forward.1} parent=11 // pred_check_branch
        %272 = sbr.rel (%p270) target = $region40
      $region39: #{discriminator_forward.1} parent=11 // pred_region
        _
      $region40: #{discriminator_forward.1} parent=11 // pred_fallthru
        _
      // Predicated region
      $region41: #{discriminator_forward.1} parent=11 // pred_check
        %p273 = pneg %p211
      $region42: #{discriminator_forward.1} parent=11 // pred_check_branch
        %275 = sbr.rel (%p273) target = $region44
      $region43: #{discriminator_forward.1} parent=11 // pred_region
        _
      $region44: #{discriminator_forward.1} parent=11 // pred_fallthru
        _
    $region12: #{discriminator_forward.1} parent=5 // pred_fallthru
      _
    %p276 = scmp.lt.s32.totalorder %s17, 2
    // Predicated region
    $region45: #{discriminator_forward.1} parent=5 // pred_check
      %p277 = pneg %p276
    $region46: #{discriminator_forward.1} parent=5 // pred_check_branch
      %279 = sbr.rel (%p277) target = $region48
    $region47: #{discriminator_forward.1} parent=5 // pred_region
      // Predicated region
      $region49: #{discriminator_forward.1} parent=47 // pred_check
        %p280 = pneg %p37
      $region50: #{discriminator_forward.1} parent=47 // pred_check_branch
        %282 = sbr.rel (%p280) target = $region52
      $region51: #{discriminator_forward.1} parent=47 // pred_region
        %s283 = smul.u32 2, %s17
        %s284 = ssub.s32 3, %s283
        %p285 = scmp.lt.s32.totalorder %s284, 2
        %s286 = scalar_select %p285, %s284, 2
        %s287 = smul.u32 8, %s286
        %s288 = smul.u32 %s287, 7
        %p289 = scmp.lt.s32.totalorder %s283, 2
        %s290 = scalar_select %p289, %s283, 2
        %s291 = smul.addr %s290, 7
        %s292 = smul.addr %s291, 8
        %s293 = scalar_lea.vmem %s0, %s292
        %s294 = smul.u32 2, %s17
        %s295 = ssub.s32 3, %s294
        %p296 = scmp.lt.s32.totalorder %s295, 2
        %s297 = scalar_select %p296, %s295, 2
        %s298 = smul.u32 8, %s297
        %s299 = smul.u32 %s298, 7
      $region52: #{discriminator_forward.1} parent=47 // pred_fallthru
        _
    $region48: #{discriminator_forward.1} parent=5 // pred_fallthru
      _
    %p300 = scmp.le.s32.totalorder 1, %s17
    %p301 = scmp.lt.s32.totalorder %s17, 3
    %p302 = pnand %p300, %p301
    %p303 = pneg %p302
    // Predicated region
    $region53: #{discriminator_forward.1} parent=5 // pred_check
      _
    $region54: #{discriminator_forward.1} parent=5 // pred_check_branch
      %305 = sbr.rel (%p302) target = $region56
    $region55: #{discriminator_forward.1} parent=5 // pred_region
      %s306 = ssub.s32 %s17, 1
      %s307 = smul.u32 2, %s22
      %s308 = ssub.s32 3, %s307
      %p309 = scmp.lt.s32.totalorder %s308, 2
      %s310 = scalar_select %p309, %s308, 2
      %s311 = smul.u32 8, %s310
      %s312 = smul.u32 %s311, 7
      %p313 = scmp.lt.s32.totalorder %s307, 2
      %s314 = scalar_select %p313, %s307, 2
      %s315 = smul.addr %s314, 7
      %s316 = smul.addr %s315, 8
      %s317 = scalar_lea.vmem %s0, %s316
      %p318 = pneg %p43
      %p319 = pneg %p40
      %p320 = pneg %p64
      %p321 = pneg %p61
      %p322 = pneg %p85
      %p323 = pneg %p82
      %p324 = pneg %p106
      %p325 = pneg %p103
      %p326 = pneg %p127
      %p327 = pneg %p124
      %p328 = pneg %p148
      %p329 = pneg %p145
      %p330 = pneg %p169
      %p331 = pneg %p166
      %p332 = pneg %p190
      %p333 = pneg %p187
      %p334 = pneg %p211
      %p335 = pneg %p208
      %p336 = pneg %p237
      %p337 = pneg %p234
      %p338 = scmp.lt.s32.totalorder %s22, 1
      %s339 = scalar_select %p338, %s22, 1
      %s340 = scalar_lea.vmem %s9, %s339
      %s341 = smul.u32 2, %s22
      %s342 = ssub.s32 3, %s341
      %p343 = scmp.lt.s32.totalorder %s342, 2
      %s344 = scalar_select %p343, %s342, 2
      %s345 = smul.u32 8, %s344
      %s346 = smul.u32 %s345, 7
      %p347 = scmp.lt.s32.totalorder %s341, 2
      %s348 = scalar_select %p347, %s341, 2
      %s349 = smul.addr %s348, 7
      %s350 = smul.addr %s349, 8
      %s351 = scalar_lea.vmem %s0, %s350
      %s352 = smul.u32 2, %s22
      %s353 = ssub.s32 3, %s352
      %p354 = scmp.lt.s32.totalorder %s353, 2
      %s355 = scalar_select %p354, %s353, 2
      %s356 = smul.u32 8, %s355
      %s357 = smul.u32 %s356, 7
      %p358 = scmp.lt.s32.totalorder %s22, 1
      %s359 = scalar_select %p358, %s22, 1
      %s360 = scalar_lea.vmem %s9, %s359
      %v362 = vld [vmem:[%s351] sm:$0xff]
      %v363 = vld [vmem:[%s351 + $0x8] sm:$0xff]
      %v364 = vld [vmem:[%s351 + $0x10] sm:$0xff]
      %v365 = vld [vmem:[%s351 + $0x18] sm:$0xff]
      %v366 = vld [vmem:[%s351 + $0x20] sm:$0xff]
      %v367 = vld [vmem:[%s351 + $0x28] sm:$0xff]
      %v368 = vld [vmem:[%s351 + $0x30] sm:$0xff]
      %v369 = vld [vmem:[%s351 + $0x38] sm:$0xff]
      %v370 = vld [vmem:[%s351 + $0x40] sm:$0xff]
      %v371 = vld [vmem:[%s351 + $0x48] sm:$0xff]
      %v372 = vld [vmem:[%s351 + $0x50] sm:$0xff]
      %v373 = vld [vmem:[%s351 + $0x58] sm:$0xff]
      %v374 = vld [vmem:[%s351 + $0x60] sm:$0xff]
      %v375 = vld [vmem:[%s351 + $0x68] sm:$0xff]
      %v376 = vpack.c.bf16 %v369, %v362
      %v377 = vpack.c.bf16 %v370, %v363
      %v378 = vpack.c.bf16 %v371, %v364
      %v379 = vpack.c.bf16 %v372, %v365
      %v380 = vpack.c.bf16 %v373, %v366
      %v381 = vpack.c.bf16 %v374, %v367
      %v382 = vpack.c.bf16 %v375, %v368
      %v383 = vld [vmem:[%s1] sm:$0xff]
      %v384 = vld [vmem:[%s1 + $0x8] sm:$0xff]
      %v385 = vld [vmem:[%s1 + $0x10] sm:$0xff]
      %v386 = vld [vmem:[%s1 + $0x18] sm:$0xff]
      %v387 = vld [vmem:[%s1 + $0x20] sm:$0xff]
      %v388 = vld [vmem:[%s1 + $0x28] sm:$0xff]
      %v389 = vld [vmem:[%s1 + $0x30] sm:$0xff]
      %v390 = vld [vmem:[%s1 + $0x38] sm:$0xff]
      %v391 = vld [vmem:[%s1 + $0x40] sm:$0xff]
      %v392 = vld [vmem:[%s1 + $0x48] sm:$0xff]
      %v393 = vld [vmem:[%s1 + $0x50] sm:$0xff]
      %v394 = vld [vmem:[%s1 + $0x58] sm:$0xff]
      %v395 = vld [vmem:[%s1 + $0x60] sm:$0xff]
      %v396 = vld [vmem:[%s1 + $0x68] sm:$0xff]
      %v397 = vld [vmem:[%s1 + $0x70] sm:$0xff]
      %v398 = vld [vmem:[%s1 + $0x78] sm:$0xff]
      %v399 = vld [vmem:[%s1 + $0x80] sm:$0xff]
      %v400 = vld [vmem:[%s1 + $0x88] sm:$0xff]
      %v401 = vld [vmem:[%s1 + $0x90] sm:$0xff]
      %v402 = vld [vmem:[%s1 + $0x98] sm:$0xff]
      %v403 = vld [vmem:[%s1 + $0xa0] sm:$0xff]
      %v404 = vld [vmem:[%s1 + $0xa8] sm:$0xff]
      %v405 = vld [vmem:[%s1 + $0xb0] sm:$0xff]
      %v406 = vld [vmem:[%s1 + $0xb8] sm:$0xff]
      %v407 = vld [vmem:[%s1 + $0xc0] sm:$0xff]
      %v408 = vld [vmem:[%s1 + $0xc8] sm:$0xff]
      %v409 = vld [vmem:[%s1 + $0xd0] sm:$0xff]
      %v410 = vld [vmem:[%s1 + $0xd8] sm:$0xff]
      %v411 = vld [vmem:[%s1 + $0xe0] sm:$0xff]
      %v412 = vld [vmem:[%s1 + $0xe8] sm:$0xff]
      %v413 = vld [vmem:[%s1 + $0xf0] sm:$0xff]
      %v414 = vld [vmem:[%s1 + $0xf8] sm:$0xff]
      %v415 = vld [vmem:[%s1 + $0x100] sm:$0xff]
      %v416 = vld [vmem:[%s1 + $0x108] sm:$0xff]
      %v417 = vld [vmem:[%s1 + $0x110] sm:$0xff]
      %v418 = vld [vmem:[%s1 + $0x118] sm:$0xff]
      %v419 = vld [vmem:[%s1 + $0x120] sm:$0xff]
      %v420 = vld [vmem:[%s1 + $0x128] sm:$0xff]
      %v421 = vld [vmem:[%s1 + $0x130] sm:$0xff]
      %v422 = vld [vmem:[%s1 + $0x138] sm:$0xff]
      %v423 = vld [vmem:[%s1 + $0x140] sm:$0xff]
      %v424 = vld [vmem:[%s1 + $0x148] sm:$0xff]
      %v425 = vld [vmem:[%s1 + $0x150] sm:$0xff]
      %v426 = vld [vmem:[%s1 + $0x158] sm:$0xff]
      %v427 = vld [vmem:[%s1 + $0x160] sm:$0xff]
      %v428 = vld [vmem:[%s1 + $0x168] sm:$0xff]
      %v429 = vld [vmem:[%s1 + $0x170] sm:$0xff]
      %v430 = vld [vmem:[%s1 + $0x178] sm:$0xff]
      %v431 = vld [vmem:[%s1 + $0x180] sm:$0xff]
      %v432 = vld [vmem:[%s1 + $0x188] sm:$0xff]
      %v433 = vld [vmem:[%s1 + $0x190] sm:$0xff]
      %v434 = vld [vmem:[%s1 + $0x198] sm:$0xff]
      %v435 = vld [vmem:[%s1 + $0x1a0] sm:$0xff]
      %v436 = vld [vmem:[%s1 + $0x1a8] sm:$0xff]
      %v437 = vld [vmem:[%s1 + $0x1b0] sm:$0xff]
      %v438 = vld [vmem:[%s1 + $0x1b8] sm:$0xff]
      %v439 = vld [vmem:[%s1 + $0x1c0] sm:$0xff]
      %v440 = vld [vmem:[%s1 + $0x1c8] sm:$0xff]
      %v441 = vld [vmem:[%s1 + $0x1d0] sm:$0xff]
      %v442 = vld [vmem:[%s1 + $0x1d8] sm:$0xff]
      %v443 = vld [vmem:[%s1 + $0x1e0] sm:$0xff]
      %v444 = vld [vmem:[%s1 + $0x1e8] sm:$0xff]
      %v445 = vld [vmem:[%s1 + $0x1f0] sm:$0xff]
      %v446 = vld [vmem:[%s1 + $0x1f8] sm:$0xff]
      %v447 = vld [vmem:[%s1 + $0x200] sm:$0xff]
      %v448 = vld [vmem:[%s1 + $0x208] sm:$0xff]
      %v449 = vld [vmem:[%s1 + $0x210] sm:$0xff]
      %v450 = vld [vmem:[%s1 + $0x218] sm:$0xff]
      %v451 = vld [vmem:[%s1 + $0x220] sm:$0xff]
      %v452 = vld [vmem:[%s1 + $0x228] sm:$0xff]
      %v453 = vld [vmem:[%s1 + $0x230] sm:$0xff]
      %v454 = vld [vmem:[%s1 + $0x238] sm:$0xff]
      %v455 = vld [vmem:[%s1 + $0x240] sm:$0xff]
      %v456 = vld [vmem:[%s1 + $0x248] sm:$0xff]
      %v457 = vld [vmem:[%s1 + $0x250] sm:$0xff]
      %v458 = vld [vmem:[%s1 + $0x258] sm:$0xff]
      %v459 = vld [vmem:[%s1 + $0x260] sm:$0xff]
      %v460 = vld [vmem:[%s1 + $0x268] sm:$0xff]
      %v461 = vld [vmem:[%s1 + $0x270] sm:$0xff]
      %v462 = vld [vmem:[%s1 + $0x278] sm:$0xff]
      %v463 = vld [vmem:[%s1 + $0x280] sm:$0xff]
      %v464 = vld [vmem:[%s1 + $0x288] sm:$0xff]
      %v465 = vld [vmem:[%s1 + $0x290] sm:$0xff]
      %v466 = vld [vmem:[%s1 + $0x298] sm:$0xff]
      %v467 = vld [vmem:[%s1 + $0x2a0] sm:$0xff]
      %v468 = vld [vmem:[%s1 + $0x2a8] sm:$0xff]
      %v469 = vld [vmem:[%s1 + $0x2b0] sm:$0xff]
      %v470 = vld [vmem:[%s1 + $0x2b8] sm:$0xff]
      %v471 = vld [vmem:[%s1 + $0x2c0] sm:$0xff]
      %v472 = vld [vmem:[%s1 + $0x2c8] sm:$0xff]
      %v473 = vld [vmem:[%s1 + $0x2d0] sm:$0xff]
      %v474 = vld [vmem:[%s1 + $0x2d8] sm:$0xff]
      %v475 = vld [vmem:[%s1 + $0x2e0] sm:$0xff]
      %v476 = vld [vmem:[%s1 + $0x2e8] sm:$0xff]
      %v477 = vld [vmem:[%s1 + $0x2f0] sm:$0xff]
      %v478 = vld [vmem:[%s1 + $0x2f8] sm:$0xff]
      %v479 = vld [vmem:[%s1 + $0x300] sm:$0xff]
      %v480 = vld [vmem:[%s1 + $0x308] sm:$0xff]
      %v481 = vld [vmem:[%s1 + $0x310] sm:$0xff]
      %v482 = vld [vmem:[%s1 + $0x318] sm:$0xff]
      %v483 = vld [vmem:[%s1 + $0x320] sm:$0xff]
      %v484 = vld [vmem:[%s1 + $0x328] sm:$0xff]
      %v485 = vld [vmem:[%s1 + $0x330] sm:$0xff]
      %v486 = vld [vmem:[%s1 + $0x338] sm:$0xff]
      %v487 = vld [vmem:[%s1 + $0x340] sm:$0xff]
      %v488 = vld [vmem:[%s1 + $0x348] sm:$0xff]
      %v489 = vld [vmem:[%s1 + $0x350] sm:$0xff]
      %v490 = vld [vmem:[%s1 + $0x358] sm:$0xff]
      %v491 = vld [vmem:[%s1 + $0x360] sm:$0xff]
      %v492 = vld [vmem:[%s1 + $0x368] sm:$0xff]
      %v493 = vld [vmem:[%s1 + $0x370] sm:$0xff]
      %v494 = vld [vmem:[%s1 + $0x378] sm:$0xff]
      %v495 = vld [vmem:[%s1 + $0x380] sm:$0xff]
      %v496 = vld [vmem:[%s1 + $0x388] sm:$0xff]
      %v497 = vld [vmem:[%s1 + $0x390] sm:$0xff]
      %v498 = vld [vmem:[%s1 + $0x398] sm:$0xff]
      %v499 = vld [vmem:[%s1 + $0x3a0] sm:$0xff]
      %v500 = vld [vmem:[%s1 + $0x3a8] sm:$0xff]
      %v501 = vld [vmem:[%s1 + $0x3b0] sm:$0xff]
      %v502 = vld [vmem:[%s1 + $0x3b8] sm:$0xff]
      %v503 = vld [vmem:[%s1 + $0x3c0] sm:$0xff]
      %v504 = vld [vmem:[%s1 + $0x3c8] sm:$0xff]
      %v505 = vld [vmem:[%s1 + $0x3d0] sm:$0xff]
      %v506 = vld [vmem:[%s1 + $0x3d8] sm:$0xff]
      %v507 = vld [vmem:[%s1 + $0x3e0] sm:$0xff]
      %v508 = vld [vmem:[%s1 + $0x3e8] sm:$0xff]
      %v509 = vld [vmem:[%s1 + $0x3f0] sm:$0xff]
      %v510 = vld [vmem:[%s1 + $0x3f8] sm:$0xff]
      %v511 = vld [vmem:[%s1 + $0x400] sm:$0xff]
      %v512 = vld [vmem:[%s1 + $0x408] sm:$0xff]
      %v513 = vld [vmem:[%s1 + $0x410] sm:$0xff]
      %v514 = vld [vmem:[%s1 + $0x418] sm:$0xff]
      %v515 = vld [vmem:[%s1 + $0x420] sm:$0xff]
      %v516 = vld [vmem:[%s1 + $0x428] sm:$0xff]
      %v517 = vld [vmem:[%s1 + $0x430] sm:$0xff]
      %v518 = vld [vmem:[%s1 + $0x438] sm:$0xff]
      %v519 = vld [vmem:[%s1 + $0x440] sm:$0xff]
      %v520 = vld [vmem:[%s1 + $0x448] sm:$0xff]
      %v521 = vld [vmem:[%s1 + $0x450] sm:$0xff]
      %v522 = vld [vmem:[%s1 + $0x458] sm:$0xff]
      %v523 = vld [vmem:[%s1 + $0x460] sm:$0xff]
      %v524 = vld [vmem:[%s1 + $0x468] sm:$0xff]
      %v525 = vld [vmem:[%s1 + $0x470] sm:$0xff]
      %v526 = vld [vmem:[%s1 + $0x478] sm:$0xff]
      %v527 = vld [vmem:[%s1 + $0x480] sm:$0xff]
      %v528 = vld [vmem:[%s1 + $0x488] sm:$0xff]
      %v529 = vld [vmem:[%s1 + $0x490] sm:$0xff]
      %v530 = vld [vmem:[%s1 + $0x498] sm:$0xff]
      %v531 = vld [vmem:[%s1 + $0x4a0] sm:$0xff]
      %v532 = vld [vmem:[%s1 + $0x4a8] sm:$0xff]
      %v533 = vld [vmem:[%s1 + $0x4b0] sm:$0xff]
      %v534 = vld [vmem:[%s1 + $0x4b8] sm:$0xff]
      %v535 = vld [vmem:[%s1 + $0x4c0] sm:$0xff]
      %v536 = vld [vmem:[%s1 + $0x4c8] sm:$0xff]
      %v537 = vld [vmem:[%s1 + $0x4d0] sm:$0xff]
      %v538 = vld [vmem:[%s1 + $0x4d8] sm:$0xff]
      %v539 = vld [vmem:[%s1 + $0x4e0] sm:$0xff]
      %v540 = vld [vmem:[%s1 + $0x4e8] sm:$0xff]
      %v541 = vld [vmem:[%s1 + $0x4f0] sm:$0xff]
      %v542 = vld [vmem:[%s1 + $0x4f8] sm:$0xff]
      %v543 = vld [vmem:[%s1 + $0x500] sm:$0xff]
      %v544 = vld [vmem:[%s1 + $0x508] sm:$0xff]
      %v545 = vld [vmem:[%s1 + $0x510] sm:$0xff]
      %v546 = vld [vmem:[%s1 + $0x518] sm:$0xff]
      %v547 = vld [vmem:[%s1 + $0x520] sm:$0xff]
      %v548 = vld [vmem:[%s1 + $0x528] sm:$0xff]
      %v549 = vld [vmem:[%s1 + $0x530] sm:$0xff]
      %v550 = vld [vmem:[%s1 + $0x538] sm:$0xff]
      %v551 = vld [vmem:[%s1 + $0x540] sm:$0xff]
      %v552 = vld [vmem:[%s1 + $0x548] sm:$0xff]
      %v553 = vld [vmem:[%s1 + $0x550] sm:$0xff]
      %v554 = vld [vmem:[%s1 + $0x558] sm:$0xff]
      %v555 = vld [vmem:[%s1 + $0x560] sm:$0xff]
      %v556 = vld [vmem:[%s1 + $0x568] sm:$0xff]
      %v557 = vld [vmem:[%s1 + $0x570] sm:$0xff]
      %v558 = vld [vmem:[%s1 + $0x578] sm:$0xff]
      %v559 = vld [vmem:[%s1 + $0x580] sm:$0xff]
      %v560 = vld [vmem:[%s1 + $0x588] sm:$0xff]
      %v561 = vld [vmem:[%s1 + $0x590] sm:$0xff]
      %v562 = vld [vmem:[%s1 + $0x598] sm:$0xff]
      %v563 = vld [vmem:[%s1 + $0x5a0] sm:$0xff]
      %v564 = vld [vmem:[%s1 + $0x5a8] sm:$0xff]
      %v565 = vld [vmem:[%s1 + $0x5b0] sm:$0xff]
      %v566 = vld [vmem:[%s1 + $0x5b8] sm:$0xff]
      %v567 = vld [vmem:[%s1 + $0x5c0] sm:$0xff]
      %v568 = vld [vmem:[%s1 + $0x5c8] sm:$0xff]
      %v569 = vld [vmem:[%s1 + $0x5d0] sm:$0xff]
      %v570 = vld [vmem:[%s1 + $0x5d8] sm:$0xff]
      %v571 = vld [vmem:[%s1 + $0x5e0] sm:$0xff]
      %v572 = vld [vmem:[%s1 + $0x5e8] sm:$0xff]
      %v573 = vld [vmem:[%s1 + $0x5f0] sm:$0xff]
      %v574 = vld [vmem:[%s1 + $0x5f8] sm:$0xff]
      %v575 = vld [vmem:[%s1 + $0x600] sm:$0xff]
      %v576 = vld [vmem:[%s1 + $0x608] sm:$0xff]
      %v577 = vld [vmem:[%s1 + $0x610] sm:$0xff]
      %v578 = vld [vmem:[%s1 + $0x618] sm:$0xff]
      %v579 = vld [vmem:[%s1 + $0x620] sm:$0xff]
      %v580 = vld [vmem:[%s1 + $0x628] sm:$0xff]
      %v581 = vld [vmem:[%s1 + $0x630] sm:$0xff]
      %v582 = vld [vmem:[%s1 + $0x638] sm:$0xff]
      %v583 = vld [vmem:[%s1 + $0x640] sm:$0xff]
      %v584 = vld [vmem:[%s1 + $0x648] sm:$0xff]
      %v585 = vld [vmem:[%s1 + $0x650] sm:$0xff]
      %v586 = vld [vmem:[%s1 + $0x658] sm:$0xff]
      %v587 = vld [vmem:[%s1 + $0x660] sm:$0xff]
      %v588 = vld [vmem:[%s1 + $0x668] sm:$0xff]
      %v589 = vld [vmem:[%s1 + $0x670] sm:$0xff]
      %v590 = vld [vmem:[%s1 + $0x678] sm:$0xff]
      %v591 = vld [vmem:[%s1 + $0x680] sm:$0xff]
      %v592 = vld [vmem:[%s1 + $0x688] sm:$0xff]
      %v593 = vld [vmem:[%s1 + $0x690] sm:$0xff]
      %v594 = vld [vmem:[%s1 + $0x698] sm:$0xff]
      %v595 = vld [vmem:[%s1 + $0x6a0] sm:$0xff]
      %v596 = vld [vmem:[%s1 + $0x6a8] sm:$0xff]
      %v597 = vld [vmem:[%s1 + $0x6b0] sm:$0xff]
      %v598 = vld [vmem:[%s1 + $0x6b8] sm:$0xff]
      %v599 = vld [vmem:[%s1 + $0x6c0] sm:$0xff]
      %v600 = vld [vmem:[%s1 + $0x6c8] sm:$0xff]
      %v601 = vld [vmem:[%s1 + $0x6d0] sm:$0xff]
      %v602 = vld [vmem:[%s1 + $0x6d8] sm:$0xff]
      %v603 = vld [vmem:[%s1 + $0x6e0] sm:$0xff]
      %v604 = vld [vmem:[%s1 + $0x6e8] sm:$0xff]
      %v605 = vld [vmem:[%s1 + $0x6f0] sm:$0xff]
      %v606 = vld [vmem:[%s1 + $0x6f8] sm:$0xff]
      %v607 = vld [vmem:[%s1 + $0x700] sm:$0xff]
      %v608 = vld [vmem:[%s1 + $0x708] sm:$0xff]
      %v609 = vld [vmem:[%s1 + $0x710] sm:$0xff]
      %v610 = vld [vmem:[%s1 + $0x718] sm:$0xff]
      %v611 = vld [vmem:[%s1 + $0x720] sm:$0xff]
      %v612 = vld [vmem:[%s1 + $0x728] sm:$0xff]
      %v613 = vld [vmem:[%s1 + $0x730] sm:$0xff]
      %v614 = vld [vmem:[%s1 + $0x738] sm:$0xff]
      %v615 = vld [vmem:[%s1 + $0x740] sm:$0xff]
      %v616 = vld [vmem:[%s1 + $0x748] sm:$0xff]
      %v617 = vld [vmem:[%s1 + $0x750] sm:$0xff]
      %v618 = vld [vmem:[%s1 + $0x758] sm:$0xff]
      %v619 = vld [vmem:[%s1 + $0x760] sm:$0xff]
      %v620 = vld [vmem:[%s1 + $0x768] sm:$0xff]
      %v621 = vld [vmem:[%s1 + $0x770] sm:$0xff]
      %v622 = vld [vmem:[%s1 + $0x778] sm:$0xff]
      %v623 = vld [vmem:[%s1 + $0x780] sm:$0xff]
      %v624 = vld [vmem:[%s1 + $0x788] sm:$0xff]
      %v625 = vld [vmem:[%s1 + $0x790] sm:$0xff]
      %v626 = vld [vmem:[%s1 + $0x798] sm:$0xff]
      %v627 = vld [vmem:[%s1 + $0x7a0] sm:$0xff]
      %v628 = vld [vmem:[%s1 + $0x7a8] sm:$0xff]
      %v629 = vld [vmem:[%s1 + $0x7b0] sm:$0xff]
      %v630 = vld [vmem:[%s1 + $0x7b8] sm:$0xff]
      %v631 = vld [vmem:[%s1 + $0x7c0] sm:$0xff]
      %v632 = vld [vmem:[%s1 + $0x7c8] sm:$0xff]
      %v633 = vld [vmem:[%s1 + $0x7d0] sm:$0xff]
      %v634 = vld [vmem:[%s1 + $0x7d8] sm:$0xff]
      %v635 = vld [vmem:[%s1 + $0x7e0] sm:$0xff]
      %v636 = vld [vmem:[%s1 + $0x7e8] sm:$0xff]
      %v637 = vld [vmem:[%s1 + $0x7f0] sm:$0xff]
      %v638 = vld [vmem:[%s1 + $0x7f8] sm:$0xff]
      %v639 = vld [vmem:[%s1 + $0x800] sm:$0xff]
      %v640 = vld [vmem:[%s1 + $0x808] sm:$0xff]
      %v641 = vld [vmem:[%s1 + $0x810] sm:$0xff]
      %v642 = vld [vmem:[%s1 + $0x818] sm:$0xff]
      %v643 = vld [vmem:[%s1 + $0x820] sm:$0xff]
      %v644 = vld [vmem:[%s1 + $0x828] sm:$0xff]
      %v645 = vld [vmem:[%s1 + $0x830] sm:$0xff]
      %v646 = vld [vmem:[%s1 + $0x838] sm:$0xff]
      %v647 = vld [vmem:[%s1 + $0x840] sm:$0xff]
      %v648 = vld [vmem:[%s1 + $0x848] sm:$0xff]
      %v649 = vld [vmem:[%s1 + $0x850] sm:$0xff]
      %v650 = vld [vmem:[%s1 + $0x858] sm:$0xff]
      %v651 = vld [vmem:[%s1 + $0x860] sm:$0xff]
      %v652 = vld [vmem:[%s1 + $0x868] sm:$0xff]
      %v653 = vld [vmem:[%s1 + $0x870] sm:$0xff]
      %v654 = vld [vmem:[%s1 + $0x878] sm:$0xff]
      %v655 = vld [vmem:[%s1 + $0x880] sm:$0xff]
      %v656 = vld [vmem:[%s1 + $0x888] sm:$0xff]
      %v657 = vld [vmem:[%s1 + $0x890] sm:$0xff]
      %v658 = vld [vmem:[%s1 + $0x898] sm:$0xff]
      %v659 = vld [vmem:[%s1 + $0x8a0] sm:$0xff]
      %v660 = vld [vmem:[%s1 + $0x8a8] sm:$0xff]
      %v661 = vld [vmem:[%s1 + $0x8b0] sm:$0xff]
      %v662 = vld [vmem:[%s1 + $0x8b8] sm:$0xff]
      %v663 = vld [vmem:[%s1 + $0x8c0] sm:$0xff]
      %v664 = vld [vmem:[%s1 + $0x8c8] sm:$0xff]
      %v665 = vld [vmem:[%s1 + $0x8d0] sm:$0xff]
      %v666 = vld [vmem:[%s1 + $0x8d8] sm:$0xff]
      %v667 = vld [vmem:[%s1 + $0x8e0] sm:$0xff]
      %v668 = vld [vmem:[%s1 + $0x8e8] sm:$0xff]
      %v669 = vld [vmem:[%s1 + $0x8f0] sm:$0xff]
      %v670 = vld [vmem:[%s1 + $0x8f8] sm:$0xff]
      %v671 = vld [vmem:[%s1 + $0x900] sm:$0xff]
      %v672 = vld [vmem:[%s1 + $0x908] sm:$0xff]
      %v673 = vld [vmem:[%s1 + $0x910] sm:$0xff]
      %v674 = vld [vmem:[%s1 + $0x918] sm:$0xff]
      %v675 = vld [vmem:[%s1 + $0x920] sm:$0xff]
      %v676 = vld [vmem:[%s1 + $0x928] sm:$0xff]
      %v677 = vld [vmem:[%s1 + $0x930] sm:$0xff]
      %v678 = vld [vmem:[%s1 + $0x938] sm:$0xff]
      %v679 = vld [vmem:[%s1 + $0x940] sm:$0xff]
      %v680 = vld [vmem:[%s1 + $0x948] sm:$0xff]
      %v681 = vld [vmem:[%s1 + $0x950] sm:$0xff]
      %v682 = vld [vmem:[%s1 + $0x958] sm:$0xff]
      %v683 = vld [vmem:[%s1 + $0x960] sm:$0xff]
      %v684 = vld [vmem:[%s1 + $0x968] sm:$0xff]
      %v685 = vld [vmem:[%s1 + $0x970] sm:$0xff]
      %v686 = vld [vmem:[%s1 + $0x978] sm:$0xff]
      %v687 = vld [vmem:[%s1 + $0x980] sm:$0xff]
      %v688 = vld [vmem:[%s1 + $0x988] sm:$0xff]
      %v689 = vld [vmem:[%s1 + $0x990] sm:$0xff]
      %v690 = vld [vmem:[%s1 + $0x998] sm:$0xff]
      %v691 = vld [vmem:[%s1 + $0x9a0] sm:$0xff]
      %v692 = vld [vmem:[%s1 + $0x9a8] sm:$0xff]
      %v693 = vld [vmem:[%s1 + $0x9b0] sm:$0xff]
      %v694 = vld [vmem:[%s1 + $0x9b8] sm:$0xff]
      %v695 = vld [vmem:[%s1 + $0x9c0] sm:$0xff]
      %v696 = vld [vmem:[%s1 + $0x9c8] sm:$0xff]
      %v697 = vld [vmem:[%s1 + $0x9d0] sm:$0xff]
      %v698 = vld [vmem:[%s1 + $0x9d8] sm:$0xff]
      %v699 = vld [vmem:[%s1 + $0x9e0] sm:$0xff]
      %v700 = vld [vmem:[%s1 + $0x9e8] sm:$0xff]
      %v701 = vld [vmem:[%s1 + $0x9f0] sm:$0xff]
      %v702 = vld [vmem:[%s1 + $0x9f8] sm:$0xff]
      %v703 = vld [vmem:[%s1 + $0xa00] sm:$0xff]
      %v704 = vld [vmem:[%s1 + $0xa08] sm:$0xff]
      %v705 = vld [vmem:[%s1 + $0xa10] sm:$0xff]
      %v706 = vld [vmem:[%s1 + $0xa18] sm:$0xff]
      %v707 = vld [vmem:[%s1 + $0xa20] sm:$0xff]
      %v708 = vld [vmem:[%s1 + $0xa28] sm:$0xff]
      %v709 = vld [vmem:[%s1 + $0xa30] sm:$0xff]
      %v710 = vld [vmem:[%s1 + $0xa38] sm:$0xff]
      %v711 = vld [vmem:[%s1 + $0xa40] sm:$0xff]
      %v712 = vld [vmem:[%s1 + $0xa48] sm:$0xff]
      %v713 = vld [vmem:[%s1 + $0xa50] sm:$0xff]
      %v714 = vld [vmem:[%s1 + $0xa58] sm:$0xff]
      %v715 = vld [vmem:[%s1 + $0xa60] sm:$0xff]
      %v716 = vld [vmem:[%s1 + $0xa68] sm:$0xff]
      %v717 = vld [vmem:[%s1 + $0xa70] sm:$0xff]
      %v718 = vld [vmem:[%s1 + $0xa78] sm:$0xff]
      %v719 = vld [vmem:[%s1 + $0xa80] sm:$0xff]
      %v720 = vld [vmem:[%s1 + $0xa88] sm:$0xff]
      %v721 = vld [vmem:[%s1 + $0xa90] sm:$0xff]
      %v722 = vld [vmem:[%s1 + $0xa98] sm:$0xff]
      %v723 = vld [vmem:[%s1 + $0xaa0] sm:$0xff]
      %v724 = vld [vmem:[%s1 + $0xaa8] sm:$0xff]
      %v725 = vld [vmem:[%s1 + $0xab0] sm:$0xff]
      %v726 = vld [vmem:[%s1 + $0xab8] sm:$0xff]
      %v727 = vld [vmem:[%s1 + $0xac0] sm:$0xff]
      %v728 = vld [vmem:[%s1 + $0xac8] sm:$0xff]
      %v729 = vld [vmem:[%s1 + $0xad0] sm:$0xff]
      %v730 = vld [vmem:[%s1 + $0xad8] sm:$0xff]
      %v731 = vld [vmem:[%s1 + $0xae0] sm:$0xff]
      %v732 = vld [vmem:[%s1 + $0xae8] sm:$0xff]
      %v733 = vld [vmem:[%s1 + $0xaf0] sm:$0xff]
      %v734 = vld [vmem:[%s1 + $0xaf8] sm:$0xff]
      %v735 = vld [vmem:[%s1 + $0xb00] sm:$0xff]
      %v736 = vld [vmem:[%s1 + $0xb08] sm:$0xff]
      %v737 = vld [vmem:[%s1 + $0xb10] sm:$0xff]
      %v738 = vld [vmem:[%s1 + $0xb18] sm:$0xff]
      %v739 = vld [vmem:[%s1 + $0xb20] sm:$0xff]
      %v740 = vld [vmem:[%s1 + $0xb28] sm:$0xff]
      %v741 = vld [vmem:[%s1 + $0xb30] sm:$0xff]
      %v742 = vld [vmem:[%s1 + $0xb38] sm:$0xff]
      %v743 = vld [vmem:[%s1 + $0xb40] sm:$0xff]
      %v744 = vld [vmem:[%s1 + $0xb48] sm:$0xff]
      %v745 = vld [vmem:[%s1 + $0xb50] sm:$0xff]
      %v746 = vld [vmem:[%s1 + $0xb58] sm:$0xff]
      %v747 = vld [vmem:[%s1 + $0xb60] sm:$0xff]
      %v748 = vld [vmem:[%s1 + $0xb68] sm:$0xff]
      %v749 = vld [vmem:[%s1 + $0xb70] sm:$0xff]
      %v750 = vld [vmem:[%s1 + $0xb78] sm:$0xff]
      %v751 = vld [vmem:[%s1 + $0xb80] sm:$0xff]
      %v752 = vld [vmem:[%s1 + $0xb88] sm:$0xff]
      %v753 = vld [vmem:[%s1 + $0xb90] sm:$0xff]
      %v754 = vld [vmem:[%s1 + $0xb98] sm:$0xff]
      %v755 = vld [vmem:[%s1 + $0xba0] sm:$0xff]
      %v756 = vld [vmem:[%s1 + $0xba8] sm:$0xff]
      %v757 = vld [vmem:[%s1 + $0xbb0] sm:$0xff]
      %v758 = vld [vmem:[%s1 + $0xbb8] sm:$0xff]
      %v759 = vld [vmem:[%s1 + $0xbc0] sm:$0xff]
      %v760 = vld [vmem:[%s1 + $0xbc8] sm:$0xff]
      %v761 = vld [vmem:[%s1 + $0xbd0] sm:$0xff]
      %v762 = vld [vmem:[%s1 + $0xbd8] sm:$0xff]
      %v763 = vld [vmem:[%s1 + $0xbe0] sm:$0xff]
      %v764 = vld [vmem:[%s1 + $0xbe8] sm:$0xff]
      %v765 = vld [vmem:[%s1 + $0xbf0] sm:$0xff]
      %v766 = vld [vmem:[%s1 + $0xbf8] sm:$0xff]
      %v767 = vld [vmem:[%s1 + $0xc00] sm:$0xff]
      %v768 = vld [vmem:[%s1 + $0xc08] sm:$0xff]
      %v769 = vld [vmem:[%s1 + $0xc10] sm:$0xff]
      %v770 = vld [vmem:[%s1 + $0xc18] sm:$0xff]
      %v771 = vld [vmem:[%s1 + $0xc20] sm:$0xff]
      %v772 = vld [vmem:[%s1 + $0xc28] sm:$0xff]
      %v773 = vld [vmem:[%s1 + $0xc30] sm:$0xff]
      %v774 = vld [vmem:[%s1 + $0xc38] sm:$0xff]
      %v1167 = vunpack.c.l.b16 %v383
      %v1168 = vunpack.c.h.b16 %v383
      %v1169 = vunpack.c.l.b16 %v384
      %v1170 = vunpack.c.h.b16 %v384
      %v1171 = vunpack.c.l.b16 %v385
      %v1172 = vunpack.c.h.b16 %v385
      %v1173 = vunpack.c.l.b16 %v386
      %v1174 = vunpack.c.h.b16 %v386
      %v1175 = vunpack.c.l.b16 %v387
      %v1176 = vunpack.c.h.b16 %v387
      %v1177 = vunpack.c.l.b16 %v388
      %v1178 = vunpack.c.h.b16 %v388
      %v1179 = vunpack.c.l.b16 %v389
      %v1180 = vunpack.c.h.b16 %v389
      %v1181 = vunpack.c.l.b16 %v390
      %v1182 = vunpack.c.h.b16 %v390
      %v1183 = vunpack.c.l.b16 %v391
      %v1184 = vunpack.c.h.b16 %v391
      %v1185 = vunpack.c.l.b16 %v392
      %v1186 = vunpack.c.h.b16 %v392
      %v1187 = vunpack.c.l.b16 %v393
      %v1188 = vunpack.c.h.b16 %v393
      %v1189 = vunpack.c.l.b16 %v394
      %v1190 = vunpack.c.h.b16 %v394
      %v1191 = vunpack.c.l.b16 %v395
      %v1192 = vunpack.c.h.b16 %v395
      %v1193 = vunpack.c.l.b16 %v396
      %v1194 = vunpack.c.h.b16 %v396
      %v1195 = vunpack.c.l.b16 %v397
      %v1196 = vunpack.c.h.b16 %v397
      %v1197 = vunpack.c.l.b16 %v398
      %v1198 = vunpack.c.h.b16 %v398
      %v1199 = vunpack.c.l.b16 %v399
      %v1200 = vunpack.c.h.b16 %v399
      %v1201 = vunpack.c.l.b16 %v400
      %v1202 = vunpack.c.h.b16 %v400
      %v1203 = vunpack.c.l.b16 %v401
      %v1204 = vunpack.c.h.b16 %v401
      %v1205 = vunpack.c.l.b16 %v402
      %v1206 = vunpack.c.h.b16 %v402
      %v1207 = vunpack.c.l.b16 %v403
      %v1208 = vunpack.c.h.b16 %v403
      %v1209 = vunpack.c.l.b16 %v404
      %v1210 = vunpack.c.h.b16 %v404
      %v1211 = vunpack.c.l.b16 %v405
      %v1212 = vunpack.c.h.b16 %v405
      %v1213 = vunpack.c.l.b16 %v406
      %v1214 = vunpack.c.h.b16 %v406
      %v1215 = vunpack.c.l.b16 %v407
      %v1216 = vunpack.c.h.b16 %v407
      %v1217 = vunpack.c.l.b16 %v408
      %v1218 = vunpack.c.h.b16 %v408
      %v1219 = vunpack.c.l.b16 %v409
      %v1220 = vunpack.c.h.b16 %v409
      %v1221 = vunpack.c.l.b16 %v410
      %v1222 = vunpack.c.h.b16 %v410
      %v1223 = vunpack.c.l.b16 %v411
      %v1224 = vunpack.c.h.b16 %v411
      %v1225 = vunpack.c.l.b16 %v412
      %v1226 = vunpack.c.h.b16 %v412
      %v1227 = vunpack.c.l.b16 %v413
      %v1228 = vunpack.c.h.b16 %v413
      %v1229 = vunpack.c.l.b16 %v414
      %v1230 = vunpack.c.h.b16 %v414
      %v1231 = vunpack.c.l.b16 %v415
      %v1232 = vunpack.c.h.b16 %v415
      %v1233 = vunpack.c.l.b16 %v416
      %v1234 = vunpack.c.h.b16 %v416
      %v1235 = vunpack.c.l.b16 %v417
      %v1236 = vunpack.c.h.b16 %v417
      %v1237 = vunpack.c.l.b16 %v418
      %v1238 = vunpack.c.h.b16 %v418
      %v1239 = vunpack.c.l.b16 %v419
      %v1240 = vunpack.c.h.b16 %v419
      %v1241 = vunpack.c.l.b16 %v420
      %v1242 = vunpack.c.h.b16 %v420
      %v1243 = vunpack.c.l.b16 %v421
      %v1244 = vunpack.c.h.b16 %v421
      %v1245 = vunpack.c.l.b16 %v422
      %v1246 = vunpack.c.h.b16 %v422
      %v1247 = vunpack.c.l.b16 %v423
      %v1248 = vunpack.c.h.b16 %v423
      %v1249 = vunpack.c.l.b16 %v424
      %v1250 = vunpack.c.h.b16 %v424
      %v1251 = vunpack.c.l.b16 %v425
      %v1252 = vunpack.c.h.b16 %v425
      %v1253 = vunpack.c.l.b16 %v426
      %v1254 = vunpack.c.h.b16 %v426
      %v1255 = vunpack.c.l.b16 %v427
      %v1256 = vunpack.c.h.b16 %v427
      %v1257 = vunpack.c.l.b16 %v428
      %v1258 = vunpack.c.h.b16 %v428
      %v1259 = vunpack.c.l.b16 %v429
      %v1260 = vunpack.c.h.b16 %v429
      %v1261 = vunpack.c.l.b16 %v430
      %v1262 = vunpack.c.h.b16 %v430
      %v1263 = vunpack.c.l.b16 %v431
      %v1264 = vunpack.c.h.b16 %v431
      %v1265 = vunpack.c.l.b16 %v432
      %v1266 = vunpack.c.h.b16 %v432
      %v1267 = vunpack.c.l.b16 %v433
      %v1268 = vunpack.c.h.b16 %v433
      %v1269 = vunpack.c.l.b16 %v434
      %v1270 = vunpack.c.h.b16 %v434
      %v1271 = vunpack.c.l.b16 %v435
      %v1272 = vunpack.c.h.b16 %v435
      %v1273 = vunpack.c.l.b16 %v436
      %v1274 = vunpack.c.h.b16 %v436
      %v1275 = vunpack.c.l.b16 %v437
      %v1276 = vunpack.c.h.b16 %v437
      %v1277 = vunpack.c.l.b16 %v438
      %v1278 = vunpack.c.h.b16 %v438
      %v1279 = vunpack.c.l.b16 %v439
      %v1280 = vunpack.c.h.b16 %v439
      %v1281 = vunpack.c.l.b16 %v440
      %v1282 = vunpack.c.h.b16 %v440
      %v1283 = vunpack.c.l.b16 %v441
      %v1284 = vunpack.c.h.b16 %v441
      %v1285 = vunpack.c.l.b16 %v442
      %v1286 = vunpack.c.h.b16 %v442
      %v1287 = vunpack.c.l.b16 %v443
      %v1288 = vunpack.c.h.b16 %v443
      %v1289 = vunpack.c.l.b16 %v444
      %v1290 = vunpack.c.h.b16 %v444
      %v1291 = vunpack.c.l.b16 %v445
      %v1292 = vunpack.c.h.b16 %v445
      %v1293 = vunpack.c.l.b16 %v446
      %v1294 = vunpack.c.h.b16 %v446
      %v1295 = vunpack.c.l.b16 %v447
      %v1296 = vunpack.c.h.b16 %v447
      %v1297 = vunpack.c.l.b16 %v448
      %v1298 = vunpack.c.h.b16 %v448
      %v1299 = vunpack.c.l.b16 %v449
      %v1300 = vunpack.c.h.b16 %v449
      %v1301 = vunpack.c.l.b16 %v450
      %v1302 = vunpack.c.h.b16 %v450
      %v1303 = vunpack.c.l.b16 %v451
      %v1304 = vunpack.c.h.b16 %v451
      %v1305 = vunpack.c.l.b16 %v452
      %v1306 = vunpack.c.h.b16 %v452
      %v1307 = vunpack.c.l.b16 %v453
      %v1308 = vunpack.c.h.b16 %v453
      %v1309 = vunpack.c.l.b16 %v454
      %v1310 = vunpack.c.h.b16 %v454
      %v1311 = vunpack.c.l.b16 %v455
      %v1312 = vunpack.c.h.b16 %v455
      %v1313 = vunpack.c.l.b16 %v456
      %v1314 = vunpack.c.h.b16 %v456
      %v1315 = vunpack.c.l.b16 %v457
      %v1316 = vunpack.c.h.b16 %v457
      %v1317 = vunpack.c.l.b16 %v458
      %v1318 = vunpack.c.h.b16 %v458
      %v1319 = vunpack.c.l.b16 %v459
      %v1320 = vunpack.c.h.b16 %v459
      %v1321 = vunpack.c.l.b16 %v460
      %v1322 = vunpack.c.h.b16 %v460
      %v1323 = vunpack.c.l.b16 %v461
      %v1324 = vunpack.c.h.b16 %v461
      %v1325 = vunpack.c.l.b16 %v462
      %v1326 = vunpack.c.h.b16 %v462
      %v1327 = vunpack.c.l.b16 %v463
      %v1328 = vunpack.c.h.b16 %v463
      %v1329 = vunpack.c.l.b16 %v464
      %v1330 = vunpack.c.h.b16 %v464
      %v1331 = vunpack.c.l.b16 %v465
      %v1332 = vunpack.c.h.b16 %v465
      %v1333 = vunpack.c.l.b16 %v466
      %v1334 = vunpack.c.h.b16 %v466
      %v1335 = vunpack.c.l.b16 %v467
      %v1336 = vunpack.c.h.b16 %v467
      %v1337 = vunpack.c.l.b16 %v468
      %v1338 = vunpack.c.h.b16 %v468
      %v1339 = vunpack.c.l.b16 %v469
      %v1340 = vunpack.c.h.b16 %v469
      %v1341 = vunpack.c.l.b16 %v470
      %v1342 = vunpack.c.h.b16 %v470
      %v1343 = vunpack.c.l.b16 %v471
      %v1344 = vunpack.c.h.b16 %v471
      %v1345 = vunpack.c.l.b16 %v472
      %v1346 = vunpack.c.h.b16 %v472
      %v1347 = vunpack.c.l.b16 %v473
      %v1348 = vunpack.c.h.b16 %v473
      %v1349 = vunpack.c.l.b16 %v474
      %v1350 = vunpack.c.h.b16 %v474
      %v1351 = vunpack.c.l.b16 %v475
      %v1352 = vunpack.c.h.b16 %v475
      %v1353 = vunpack.c.l.b16 %v476
      %v1354 = vunpack.c.h.b16 %v476
      %v1355 = vunpack.c.l.b16 %v477
      %v1356 = vunpack.c.h.b16 %v477
      %v1357 = vunpack.c.l.b16 %v478
      %v1358 = vunpack.c.h.b16 %v478
      %v1359 = vunpack.c.l.b16 %v479
      %v1360 = vunpack.c.h.b16 %v479
      %v1361 = vunpack.c.l.b16 %v480
      %v1362 = vunpack.c.h.b16 %v480
      %v1363 = vunpack.c.l.b16 %v481
      %v1364 = vunpack.c.h.b16 %v481
      %v1365 = vunpack.c.l.b16 %v482
      %v1366 = vunpack.c.h.b16 %v482
      %v1367 = vunpack.c.l.b16 %v483
      %v1368 = vunpack.c.h.b16 %v483
      %v1369 = vunpack.c.l.b16 %v484
      %v1370 = vunpack.c.h.b16 %v484
      %v1371 = vunpack.c.l.b16 %v485
      %v1372 = vunpack.c.h.b16 %v485
      %v1373 = vunpack.c.l.b16 %v486
      %v1374 = vunpack.c.h.b16 %v486
      %v1375 = vunpack.c.l.b16 %v487
      %v1376 = vunpack.c.h.b16 %v487
      %v1377 = vunpack.c.l.b16 %v488
      %v1378 = vunpack.c.h.b16 %v488
      %v1379 = vunpack.c.l.b16 %v489
      %v1380 = vunpack.c.h.b16 %v489
      %v1381 = vunpack.c.l.b16 %v490
      %v1382 = vunpack.c.h.b16 %v490
      %v1383 = vunpack.c.l.b16 %v491
      %v1384 = vunpack.c.h.b16 %v491
      %v1385 = vunpack.c.l.b16 %v492
      %v1386 = vunpack.c.h.b16 %v492
      %v1387 = vunpack.c.l.b16 %v493
      %v1388 = vunpack.c.h.b16 %v493
      %v1389 = vunpack.c.l.b16 %v494
      %v1390 = vunpack.c.h.b16 %v494
      %v1391 = vunpack.c.l.b16 %v495
      %v1392 = vunpack.c.h.b16 %v495
      %v1393 = vunpack.c.l.b16 %v496
      %v1394 = vunpack.c.h.b16 %v496
      %v1395 = vunpack.c.l.b16 %v497
      %v1396 = vunpack.c.h.b16 %v497
      %v1397 = vunpack.c.l.b16 %v498
      %v1398 = vunpack.c.h.b16 %v498
      %v1399 = vunpack.c.l.b16 %v499
      %v1400 = vunpack.c.h.b16 %v499
      %v1401 = vunpack.c.l.b16 %v500
      %v1402 = vunpack.c.h.b16 %v500
      %v1403 = vunpack.c.l.b16 %v501
      %v1404 = vunpack.c.h.b16 %v501
      %v1405 = vunpack.c.l.b16 %v502
      %v1406 = vunpack.c.h.b16 %v502
      %v1407 = vunpack.c.l.b16 %v503
      %v1408 = vunpack.c.h.b16 %v503
      %v1409 = vunpack.c.l.b16 %v504
      %v1410 = vunpack.c.h.b16 %v504
      %v1411 = vunpack.c.l.b16 %v505
      %v1412 = vunpack.c.h.b16 %v505
      %v1413 = vunpack.c.l.b16 %v506
      %v1414 = vunpack.c.h.b16 %v506
      %v1415 = vunpack.c.l.b16 %v507
      %v1416 = vunpack.c.h.b16 %v507
      %v1417 = vunpack.c.l.b16 %v508
      %v1418 = vunpack.c.h.b16 %v508
      %v1419 = vunpack.c.l.b16 %v509
      %v1420 = vunpack.c.h.b16 %v509
      %v1421 = vunpack.c.l.b16 %v510
      %v1422 = vunpack.c.h.b16 %v510
      %v1423 = vunpack.c.l.b16 %v511
      %v1424 = vunpack.c.h.b16 %v511
      %v1425 = vunpack.c.l.b16 %v512
      %v1426 = vunpack.c.h.b16 %v512
      %v1427 = vunpack.c.l.b16 %v513
      %v1428 = vunpack.c.h.b16 %v513
      %v1429 = vunpack.c.l.b16 %v514
      %v1430 = vunpack.c.h.b16 %v514
      %v1431 = vunpack.c.l.b16 %v515
      %v1432 = vunpack.c.h.b16 %v515
      %v1433 = vunpack.c.l.b16 %v516
      %v1434 = vunpack.c.h.b16 %v516
      %v1435 = vunpack.c.l.b16 %v517
      %v1436 = vunpack.c.h.b16 %v517
      %v1437 = vunpack.c.l.b16 %v518
      %v1438 = vunpack.c.h.b16 %v518
      %v1439 = vunpack.c.l.b16 %v519
      %v1440 = vunpack.c.h.b16 %v519
      %v1441 = vunpack.c.l.b16 %v520
      %v1442 = vunpack.c.h.b16 %v520
      %v1443 = vunpack.c.l.b16 %v521
      %v1444 = vunpack.c.h.b16 %v521
      %v1445 = vunpack.c.l.b16 %v522
      %v1446 = vunpack.c.h.b16 %v522
      %v1447 = vunpack.c.l.b16 %v523
      %v1448 = vunpack.c.h.b16 %v523
      %v1449 = vunpack.c.l.b16 %v524
      %v1450 = vunpack.c.h.b16 %v524
      %v1451 = vunpack.c.l.b16 %v525
      %v1452 = vunpack.c.h.b16 %v525
      %v1453 = vunpack.c.l.b16 %v526
      %v1454 = vunpack.c.h.b16 %v526
      %v1455 = vunpack.c.l.b16 %v527
      %v1456 = vunpack.c.h.b16 %v527
      %v1457 = vunpack.c.l.b16 %v528
      %v1458 = vunpack.c.h.b16 %v528
      %v1459 = vunpack.c.l.b16 %v529
      %v1460 = vunpack.c.h.b16 %v529
      %v1461 = vunpack.c.l.b16 %v530
      %v1462 = vunpack.c.h.b16 %v530
      %v1463 = vunpack.c.l.b16 %v531
      %v1464 = vunpack.c.h.b16 %v531
      %v1465 = vunpack.c.l.b16 %v532
      %v1466 = vunpack.c.h.b16 %v532
      %v1467 = vunpack.c.l.b16 %v533
      %v1468 = vunpack.c.h.b16 %v533
      %v1469 = vunpack.c.l.b16 %v534
      %v1470 = vunpack.c.h.b16 %v534
      %v1471 = vunpack.c.l.b16 %v535
      %v1472 = vunpack.c.h.b16 %v535
      %v1473 = vunpack.c.l.b16 %v536
      %v1474 = vunpack.c.h.b16 %v536
      %v1475 = vunpack.c.l.b16 %v537
      %v1476 = vunpack.c.h.b16 %v537
      %v1477 = vunpack.c.l.b16 %v538
      %v1478 = vunpack.c.h.b16 %v538
      %v1479 = vunpack.c.l.b16 %v539
      %v1480 = vunpack.c.h.b16 %v539
      %v1481 = vunpack.c.l.b16 %v540
      %v1482 = vunpack.c.h.b16 %v540
      %v1483 = vunpack.c.l.b16 %v541
      %v1484 = vunpack.c.h.b16 %v541
      %v1485 = vunpack.c.l.b16 %v542
      %v1486 = vunpack.c.h.b16 %v542
      %v1487 = vunpack.c.l.b16 %v543
      %v1488 = vunpack.c.h.b16 %v543
      %v1489 = vunpack.c.l.b16 %v544
      %v1490 = vunpack.c.h.b16 %v544
      %v1491 = vunpack.c.l.b16 %v545
      %v1492 = vunpack.c.h.b16 %v545
      %v1493 = vunpack.c.l.b16 %v546
      %v1494 = vunpack.c.h.b16 %v546
      %v1495 = vunpack.c.l.b16 %v547
      %v1496 = vunpack.c.h.b16 %v547
      %v1497 = vunpack.c.l.b16 %v548
      %v1498 = vunpack.c.h.b16 %v548
      %v1499 = vunpack.c.l.b16 %v549
      %v1500 = vunpack.c.h.b16 %v549
      %v1501 = vunpack.c.l.b16 %v550
      %v1502 = vunpack.c.h.b16 %v550
      %v1503 = vunpack.c.l.b16 %v551
      %v1504 = vunpack.c.h.b16 %v551
      %v1505 = vunpack.c.l.b16 %v552
      %v1506 = vunpack.c.h.b16 %v552
      %v1507 = vunpack.c.l.b16 %v553
      %v1508 = vunpack.c.h.b16 %v553
      %v1509 = vunpack.c.l.b16 %v554
      %v1510 = vunpack.c.h.b16 %v554
      %v1511 = vunpack.c.l.b16 %v555
      %v1512 = vunpack.c.h.b16 %v555
      %v1513 = vunpack.c.l.b16 %v556
      %v1514 = vunpack.c.h.b16 %v556
      %v1515 = vunpack.c.l.b16 %v557
      %v1516 = vunpack.c.h.b16 %v557
      %v1517 = vunpack.c.l.b16 %v558
      %v1518 = vunpack.c.h.b16 %v558
      %v1519 = vunpack.c.l.b16 %v559
      %v1520 = vunpack.c.h.b16 %v559
      %v1521 = vunpack.c.l.b16 %v560
      %v1522 = vunpack.c.h.b16 %v560
      %v1523 = vunpack.c.l.b16 %v561
      %v1524 = vunpack.c.h.b16 %v561
      %v1525 = vunpack.c.l.b16 %v562
      %v1526 = vunpack.c.h.b16 %v562
      %v1527 = vunpack.c.l.b16 %v563
      %v1528 = vunpack.c.h.b16 %v563
      %v1529 = vunpack.c.l.b16 %v564
      %v1530 = vunpack.c.h.b16 %v564
      %v1531 = vunpack.c.l.b16 %v565
      %v1532 = vunpack.c.h.b16 %v565
      %v1533 = vunpack.c.l.b16 %v566
      %v1534 = vunpack.c.h.b16 %v566
      %v1535 = vunpack.c.l.b16 %v567
      %v1536 = vunpack.c.h.b16 %v567
      %v1537 = vunpack.c.l.b16 %v568
      %v1538 = vunpack.c.h.b16 %v568
      %v1539 = vunpack.c.l.b16 %v569
      %v1540 = vunpack.c.h.b16 %v569
      %v1541 = vunpack.c.l.b16 %v570
      %v1542 = vunpack.c.h.b16 %v570
      %v1543 = vunpack.c.l.b16 %v571
      %v1544 = vunpack.c.h.b16 %v571
      %v1545 = vunpack.c.l.b16 %v572
      %v1546 = vunpack.c.h.b16 %v572
      %v1547 = vunpack.c.l.b16 %v573
      %v1548 = vunpack.c.h.b16 %v573
      %v1549 = vunpack.c.l.b16 %v574
      %v1550 = vunpack.c.h.b16 %v574
      %v1551 = vunpack.c.l.b16 %v575
      %v1552 = vunpack.c.h.b16 %v575
      %v1553 = vunpack.c.l.b16 %v576
      %v1554 = vunpack.c.h.b16 %v576
      %v1555 = vunpack.c.l.b16 %v577
      %v1556 = vunpack.c.h.b16 %v577
      %v1557 = vunpack.c.l.b16 %v578
      %v1558 = vunpack.c.h.b16 %v578
      %v1559 = vunpack.c.l.b16 %v579
      %v1560 = vunpack.c.h.b16 %v579
      %v1561 = vunpack.c.l.b16 %v580
      %v1562 = vunpack.c.h.b16 %v580
      %v1563 = vunpack.c.l.b16 %v581
      %v1564 = vunpack.c.h.b16 %v581
      %v1565 = vunpack.c.l.b16 %v582
      %v1566 = vunpack.c.h.b16 %v582
      %v1567 = vunpack.c.l.b16 %v583
      %v1568 = vunpack.c.h.b16 %v583
      %v1569 = vunpack.c.l.b16 %v584
      %v1570 = vunpack.c.h.b16 %v584
      %v1571 = vunpack.c.l.b16 %v585
      %v1572 = vunpack.c.h.b16 %v585
      %v1573 = vunpack.c.l.b16 %v586
      %v1574 = vunpack.c.h.b16 %v586
      %v1575 = vunpack.c.l.b16 %v587
      %v1576 = vunpack.c.h.b16 %v587
      %v1577 = vunpack.c.l.b16 %v588
      %v1578 = vunpack.c.h.b16 %v588
      %v1579 = vunpack.c.l.b16 %v589
      %v1580 = vunpack.c.h.b16 %v589
      %v1581 = vunpack.c.l.b16 %v590
      %v1582 = vunpack.c.h.b16 %v590
      %v1583 = vunpack.c.l.b16 %v591
      %v1584 = vunpack.c.h.b16 %v591
      %v1585 = vunpack.c.l.b16 %v592
      %v1586 = vunpack.c.h.b16 %v592
      %v1587 = vunpack.c.l.b16 %v593
      %v1588 = vunpack.c.h.b16 %v593
      %v1589 = vunpack.c.l.b16 %v594
      %v1590 = vunpack.c.h.b16 %v594
      %v1591 = vunpack.c.l.b16 %v595
      %v1592 = vunpack.c.h.b16 %v595
      %v1593 = vunpack.c.l.b16 %v596
      %v1594 = vunpack.c.h.b16 %v596
      %v1595 = vunpack.c.l.b16 %v597
      %v1596 = vunpack.c.h.b16 %v597
      %v1597 = vunpack.c.l.b16 %v598
      %v1598 = vunpack.c.h.b16 %v598
      %v1599 = vunpack.c.l.b16 %v599
      %v1600 = vunpack.c.h.b16 %v599
      %v1601 = vunpack.c.l.b16 %v600
      %v1602 = vunpack.c.h.b16 %v600
      %v1603 = vunpack.c.l.b16 %v601
      %v1604 = vunpack.c.h.b16 %v601
      %v1605 = vunpack.c.l.b16 %v602
      %v1606 = vunpack.c.h.b16 %v602
      %v1607 = vunpack.c.l.b16 %v603
      %v1608 = vunpack.c.h.b16 %v603
      %v1609 = vunpack.c.l.b16 %v604
      %v1610 = vunpack.c.h.b16 %v604
      %v1611 = vunpack.c.l.b16 %v605
      %v1612 = vunpack.c.h.b16 %v605
      %v1613 = vunpack.c.l.b16 %v606
      %v1614 = vunpack.c.h.b16 %v606
      %v1615 = vunpack.c.l.b16 %v607
      %v1616 = vunpack.c.h.b16 %v607
      %v1617 = vunpack.c.l.b16 %v608
      %v1618 = vunpack.c.h.b16 %v608
      %v1619 = vunpack.c.l.b16 %v609
      %v1620 = vunpack.c.h.b16 %v609
      %v1621 = vunpack.c.l.b16 %v610
      %v1622 = vunpack.c.h.b16 %v610
      %v1623 = vunpack.c.l.b16 %v611
      %v1624 = vunpack.c.h.b16 %v611
      %v1625 = vunpack.c.l.b16 %v612
      %v1626 = vunpack.c.h.b16 %v612
      %v1627 = vunpack.c.l.b16 %v613
      %v1628 = vunpack.c.h.b16 %v613
      %v1629 = vunpack.c.l.b16 %v614
      %v1630 = vunpack.c.h.b16 %v614
      %v1631 = vunpack.c.l.b16 %v615
      %v1632 = vunpack.c.h.b16 %v615
      %v1633 = vunpack.c.l.b16 %v616
      %v1634 = vunpack.c.h.b16 %v616
      %v1635 = vunpack.c.l.b16 %v617
      %v1636 = vunpack.c.h.b16 %v617
      %v1637 = vunpack.c.l.b16 %v618
      %v1638 = vunpack.c.h.b16 %v618
      %v1639 = vunpack.c.l.b16 %v619
      %v1640 = vunpack.c.h.b16 %v619
      %v1641 = vunpack.c.l.b16 %v620
      %v1642 = vunpack.c.h.b16 %v620
      %v1643 = vunpack.c.l.b16 %v621
      %v1644 = vunpack.c.h.b16 %v621
      %v1645 = vunpack.c.l.b16 %v622
      %v1646 = vunpack.c.h.b16 %v622
      %v1647 = vunpack.c.l.b16 %v623
      %v1648 = vunpack.c.h.b16 %v623
      %v1649 = vunpack.c.l.b16 %v624
      %v1650 = vunpack.c.h.b16 %v624
      %v1651 = vunpack.c.l.b16 %v625
      %v1652 = vunpack.c.h.b16 %v625
      %v1653 = vunpack.c.l.b16 %v626
      %v1654 = vunpack.c.h.b16 %v626
      %v1655 = vunpack.c.l.b16 %v627
      %v1656 = vunpack.c.h.b16 %v627
      %v1657 = vunpack.c.l.b16 %v628
      %v1658 = vunpack.c.h.b16 %v628
      %v1659 = vunpack.c.l.b16 %v629
      %v1660 = vunpack.c.h.b16 %v629
      %v1661 = vunpack.c.l.b16 %v630
      %v1662 = vunpack.c.h.b16 %v630
      %v1663 = vunpack.c.l.b16 %v631
      %v1664 = vunpack.c.h.b16 %v631
      %v1665 = vunpack.c.l.b16 %v632
      %v1666 = vunpack.c.h.b16 %v632
      %v1667 = vunpack.c.l.b16 %v633
      %v1668 = vunpack.c.h.b16 %v633
      %v1669 = vunpack.c.l.b16 %v634
      %v1670 = vunpack.c.h.b16 %v634
      %v1671 = vunpack.c.l.b16 %v635
      %v1672 = vunpack.c.h.b16 %v635
      %v1673 = vunpack.c.l.b16 %v636
      %v1674 = vunpack.c.h.b16 %v636
      %v1675 = vunpack.c.l.b16 %v637
      %v1676 = vunpack.c.h.b16 %v637
      %v1677 = vunpack.c.l.b16 %v638
      %v1678 = vunpack.c.h.b16 %v638
      %v1679 = vunpack.c.l.b16 %v639
      %v1680 = vunpack.c.h.b16 %v639
      %v1681 = vunpack.c.l.b16 %v640
      %v1682 = vunpack.c.h.b16 %v640
      %v1683 = vunpack.c.l.b16 %v641
      %v1684 = vunpack.c.h.b16 %v641
      %v1685 = vunpack.c.l.b16 %v642
      %v1686 = vunpack.c.h.b16 %v642
      %v1687 = vunpack.c.l.b16 %v643
      %v1688 = vunpack.c.h.b16 %v643
      %v1689 = vunpack.c.l.b16 %v644
      %v1690 = vunpack.c.h.b16 %v644
      %v1691 = vunpack.c.l.b16 %v645
      %v1692 = vunpack.c.h.b16 %v645
      %v1693 = vunpack.c.l.b16 %v646
      %v1694 = vunpack.c.h.b16 %v646
      %v1695 = vunpack.c.l.b16 %v647
      %v1696 = vunpack.c.h.b16 %v647
      %v1697 = vunpack.c.l.b16 %v648
      %v1698 = vunpack.c.h.b16 %v648
      %v1699 = vunpack.c.l.b16 %v649
      %v1700 = vunpack.c.h.b16 %v649
      %v1701 = vunpack.c.l.b16 %v650
      %v1702 = vunpack.c.h.b16 %v650
      %v1703 = vunpack.c.l.b16 %v651
      %v1704 = vunpack.c.h.b16 %v651
      %v1705 = vunpack.c.l.b16 %v652
      %v1706 = vunpack.c.h.b16 %v652
      %v1707 = vunpack.c.l.b16 %v653
      %v1708 = vunpack.c.h.b16 %v653
      %v1709 = vunpack.c.l.b16 %v654
      %v1710 = vunpack.c.h.b16 %v654
      %v1711 = vunpack.c.l.b16 %v655
      %v1712 = vunpack.c.h.b16 %v655
      %v1713 = vunpack.c.l.b16 %v656
      %v1714 = vunpack.c.h.b16 %v656
      %v1715 = vunpack.c.l.b16 %v657
      %v1716 = vunpack.c.h.b16 %v657
      %v1717 = vunpack.c.l.b16 %v658
      %v1718 = vunpack.c.h.b16 %v658
      %v1719 = vunpack.c.l.b16 %v659
      %v1720 = vunpack.c.h.b16 %v659
      %v1721 = vunpack.c.l.b16 %v660
      %v1722 = vunpack.c.h.b16 %v660
      %v1723 = vunpack.c.l.b16 %v661
      %v1724 = vunpack.c.h.b16 %v661
      %v1725 = vunpack.c.l.b16 %v662
      %v1726 = vunpack.c.h.b16 %v662
      %v1727 = vunpack.c.l.b16 %v663
      %v1728 = vunpack.c.h.b16 %v663
      %v1729 = vunpack.c.l.b16 %v664
      %v1730 = vunpack.c.h.b16 %v664
      %v1731 = vunpack.c.l.b16 %v665
      %v1732 = vunpack.c.h.b16 %v665
      %v1733 = vunpack.c.l.b16 %v666
      %v1734 = vunpack.c.h.b16 %v666
      %v1735 = vunpack.c.l.b16 %v667
      %v1736 = vunpack.c.h.b16 %v667
      %v1737 = vunpack.c.l.b16 %v668
      %v1738 = vunpack.c.h.b16 %v668
      %v1739 = vunpack.c.l.b16 %v669
      %v1740 = vunpack.c.h.b16 %v669
      %v1741 = vunpack.c.l.b16 %v670
      %v1742 = vunpack.c.h.b16 %v670
      %v1743 = vunpack.c.l.b16 %v671
      %v1744 = vunpack.c.h.b16 %v671
      %v1745 = vunpack.c.l.b16 %v672
      %v1746 = vunpack.c.h.b16 %v672
      %v1747 = vunpack.c.l.b16 %v673
      %v1748 = vunpack.c.h.b16 %v673
      %v1749 = vunpack.c.l.b16 %v674
      %v1750 = vunpack.c.h.b16 %v674
      %v1751 = vunpack.c.l.b16 %v675
      %v1752 = vunpack.c.h.b16 %v675
      %v1753 = vunpack.c.l.b16 %v676
      %v1754 = vunpack.c.h.b16 %v676
      %v1755 = vunpack.c.l.b16 %v677
      %v1756 = vunpack.c.h.b16 %v677
      %v1757 = vunpack.c.l.b16 %v678
      %v1758 = vunpack.c.h.b16 %v678
      %v1759 = vunpack.c.l.b16 %v679
      %v1760 = vunpack.c.h.b16 %v679
      %v1761 = vunpack.c.l.b16 %v680
      %v1762 = vunpack.c.h.b16 %v680
      %v1763 = vunpack.c.l.b16 %v681
      %v1764 = vunpack.c.h.b16 %v681
      %v1765 = vunpack.c.l.b16 %v682
      %v1766 = vunpack.c.h.b16 %v682
      %v1767 = vunpack.c.l.b16 %v683
      %v1768 = vunpack.c.h.b16 %v683
      %v1769 = vunpack.c.l.b16 %v684
      %v1770 = vunpack.c.h.b16 %v684
      %v1771 = vunpack.c.l.b16 %v685
      %v1772 = vunpack.c.h.b16 %v685
      %v1773 = vunpack.c.l.b16 %v686
      %v1774 = vunpack.c.h.b16 %v686
      %v1775 = vunpack.c.l.b16 %v687
      %v1776 = vunpack.c.h.b16 %v687
      %v1777 = vunpack.c.l.b16 %v688
      %v1778 = vunpack.c.h.b16 %v688
      %v1779 = vunpack.c.l.b16 %v689
      %v1780 = vunpack.c.h.b16 %v689
      %v1781 = vunpack.c.l.b16 %v690
      %v1782 = vunpack.c.h.b16 %v690
      %v1783 = vunpack.c.l.b16 %v691
      %v1784 = vunpack.c.h.b16 %v691
      %v1785 = vunpack.c.l.b16 %v692
      %v1786 = vunpack.c.h.b16 %v692
      %v1787 = vunpack.c.l.b16 %v693
      %v1788 = vunpack.c.h.b16 %v693
      %v1789 = vunpack.c.l.b16 %v694
      %v1790 = vunpack.c.h.b16 %v694
      %v1791 = vunpack.c.l.b16 %v695
      %v1792 = vunpack.c.h.b16 %v695
      %v1793 = vunpack.c.l.b16 %v696
      %v1794 = vunpack.c.h.b16 %v696
      %v1795 = vunpack.c.l.b16 %v697
      %v1796 = vunpack.c.h.b16 %v697
      %v1797 = vunpack.c.l.b16 %v698
      %v1798 = vunpack.c.h.b16 %v698
      %v1799 = vunpack.c.l.b16 %v699
      %v1800 = vunpack.c.h.b16 %v699
      %v1801 = vunpack.c.l.b16 %v700
      %v1802 = vunpack.c.h.b16 %v700
      %v1803 = vunpack.c.l.b16 %v701
      %v1804 = vunpack.c.h.b16 %v701
      %v1805 = vunpack.c.l.b16 %v702
      %v1806 = vunpack.c.h.b16 %v702
      %v1807 = vunpack.c.l.b16 %v703
      %v1808 = vunpack.c.h.b16 %v703
      %v1809 = vunpack.c.l.b16 %v704
      %v1810 = vunpack.c.h.b16 %v704
      %v1811 = vunpack.c.l.b16 %v705
      %v1812 = vunpack.c.h.b16 %v705
      %v1813 = vunpack.c.l.b16 %v706
      %v1814 = vunpack.c.h.b16 %v706
      %v1815 = vunpack.c.l.b16 %v707
      %v1816 = vunpack.c.h.b16 %v707
      %v1817 = vunpack.c.l.b16 %v708
      %v1818 = vunpack.c.h.b16 %v708
      %v1819 = vunpack.c.l.b16 %v709
      %v1820 = vunpack.c.h.b16 %v709
      %v1821 = vunpack.c.l.b16 %v710
      %v1822 = vunpack.c.h.b16 %v710
      %v1823 = vunpack.c.l.b16 %v711
      %v1824 = vunpack.c.h.b16 %v711
      %v1825 = vunpack.c.l.b16 %v712
      %v1826 = vunpack.c.h.b16 %v712
      %v1827 = vunpack.c.l.b16 %v713
      %v1828 = vunpack.c.h.b16 %v713
      %v1829 = vunpack.c.l.b16 %v714
      %v1830 = vunpack.c.h.b16 %v714
      %v1831 = vunpack.c.l.b16 %v715
      %v1832 = vunpack.c.h.b16 %v715
      %v1833 = vunpack.c.l.b16 %v716
      %v1834 = vunpack.c.h.b16 %v716
      %v1835 = vunpack.c.l.b16 %v717
      %v1836 = vunpack.c.h.b16 %v717
      %v1837 = vunpack.c.l.b16 %v718
      %v1838 = vunpack.c.h.b16 %v718
      %v1839 = vunpack.c.l.b16 %v719
      %v1840 = vunpack.c.h.b16 %v719
      %v1841 = vunpack.c.l.b16 %v720
      %v1842 = vunpack.c.h.b16 %v720
      %v1843 = vunpack.c.l.b16 %v721
      %v1844 = vunpack.c.h.b16 %v721
      %v1845 = vunpack.c.l.b16 %v722
      %v1846 = vunpack.c.h.b16 %v722
      %v1847 = vunpack.c.l.b16 %v723
      %v1848 = vunpack.c.h.b16 %v723
      %v1849 = vunpack.c.l.b16 %v724
      %v1850 = vunpack.c.h.b16 %v724
      %v1851 = vunpack.c.l.b16 %v725
      %v1852 = vunpack.c.h.b16 %v725
      %v1853 = vunpack.c.l.b16 %v726
      %v1854 = vunpack.c.h.b16 %v726
      %v1855 = vunpack.c.l.b16 %v727
      %v1856 = vunpack.c.h.b16 %v727
      %v1857 = vunpack.c.l.b16 %v728
      %v1858 = vunpack.c.h.b16 %v728
      %v1859 = vunpack.c.l.b16 %v729
      %v1860 = vunpack.c.h.b16 %v729
      %v1861 = vunpack.c.l.b16 %v730
      %v1862 = vunpack.c.h.b16 %v730
      %v1863 = vunpack.c.l.b16 %v731
      %v1864 = vunpack.c.h.b16 %v731
      %v1865 = vunpack.c.l.b16 %v732
      %v1866 = vunpack.c.h.b16 %v732
      %v1867 = vunpack.c.l.b16 %v733
      %v1868 = vunpack.c.h.b16 %v733
      %v1869 = vunpack.c.l.b16 %v734
      %v1870 = vunpack.c.h.b16 %v734
      %v1871 = vunpack.c.l.b16 %v735
      %v1872 = vunpack.c.h.b16 %v735
      %v1873 = vunpack.c.l.b16 %v736
      %v1874 = vunpack.c.h.b16 %v736
      %v1875 = vunpack.c.l.b16 %v737
      %v1876 = vunpack.c.h.b16 %v737
      %v1877 = vunpack.c.l.b16 %v738
      %v1878 = vunpack.c.h.b16 %v738
      %v1879 = vunpack.c.l.b16 %v739
      %v1880 = vunpack.c.h.b16 %v739
      %v1881 = vunpack.c.l.b16 %v740
      %v1882 = vunpack.c.h.b16 %v740
      %v1883 = vunpack.c.l.b16 %v741
      %v1884 = vunpack.c.h.b16 %v741
      %v1885 = vunpack.c.l.b16 %v742
      %v1886 = vunpack.c.h.b16 %v742
      %v1887 = vunpack.c.l.b16 %v743
      %v1888 = vunpack.c.h.b16 %v743
      %v1889 = vunpack.c.l.b16 %v744
      %v1890 = vunpack.c.h.b16 %v744
      %v1891 = vunpack.c.l.b16 %v745
      %v1892 = vunpack.c.h.b16 %v745
      %v1893 = vunpack.c.l.b16 %v746
      %v1894 = vunpack.c.h.b16 %v746
      %v1895 = vunpack.c.l.b16 %v747
      %v1896 = vunpack.c.h.b16 %v747
      %v1897 = vunpack.c.l.b16 %v748
      %v1898 = vunpack.c.h.b16 %v748
      %v1899 = vunpack.c.l.b16 %v749
      %v1900 = vunpack.c.h.b16 %v749
      %v1901 = vunpack.c.l.b16 %v750
      %v1902 = vunpack.c.h.b16 %v750
      %v1903 = vunpack.c.l.b16 %v751
      %v1904 = vunpack.c.h.b16 %v751
      %v1905 = vunpack.c.l.b16 %v752
      %v1906 = vunpack.c.h.b16 %v752
      %v1907 = vunpack.c.l.b16 %v753
      %v1908 = vunpack.c.h.b16 %v753
      %v1909 = vunpack.c.l.b16 %v754
      %v1910 = vunpack.c.h.b16 %v754
      %v1911 = vunpack.c.l.b16 %v755
      %v1912 = vunpack.c.h.b16 %v755
      %v1913 = vunpack.c.l.b16 %v756
      %v1914 = vunpack.c.h.b16 %v756
      %v1915 = vunpack.c.l.b16 %v757
      %v1916 = vunpack.c.h.b16 %v757
      %v1917 = vunpack.c.l.b16 %v758
      %v1918 = vunpack.c.h.b16 %v758
      %v1919 = vunpack.c.l.b16 %v759
      %v1920 = vunpack.c.h.b16 %v759
      %v1921 = vunpack.c.l.b16 %v760
      %v1922 = vunpack.c.h.b16 %v760
      %v1923 = vunpack.c.l.b16 %v761
      %v1924 = vunpack.c.h.b16 %v761
      %v1925 = vunpack.c.l.b16 %v762
      %v1926 = vunpack.c.h.b16 %v762
      %v1927 = vunpack.c.l.b16 %v763
      %v1928 = vunpack.c.h.b16 %v763
      %v1929 = vunpack.c.l.b16 %v764
      %v1930 = vunpack.c.h.b16 %v764
      %v1931 = vunpack.c.l.b16 %v765
      %v1932 = vunpack.c.h.b16 %v765
      %v1933 = vunpack.c.l.b16 %v766
      %v1934 = vunpack.c.h.b16 %v766
      %v1935 = vunpack.c.l.b16 %v767
      %v1936 = vunpack.c.h.b16 %v767
      %v1937 = vunpack.c.l.b16 %v768
      %v1938 = vunpack.c.h.b16 %v768
      %v1939 = vunpack.c.l.b16 %v769
      %v1940 = vunpack.c.h.b16 %v769
      %v1941 = vunpack.c.l.b16 %v770
      %v1942 = vunpack.c.h.b16 %v770
      %v1943 = vunpack.c.l.b16 %v771
      %v1944 = vunpack.c.h.b16 %v771
      %v1945 = vunpack.c.l.b16 %v772
      %v1946 = vunpack.c.h.b16 %v772
      %v1947 = vunpack.c.l.b16 %v773
      %v1948 = vunpack.c.h.b16 %v773
      %v1949 = vunpack.c.l.b16 %v774
      %v1950 = vunpack.c.h.b16 %v774
      %v1951 = vpack.c.b16 %v1175, %v1167
      %v1952 = vpack.c.b16 %v1176, %v1168
      %v1953 = vpack.c.b16 %v1177, %v1169
      %v1954 = vpack.c.b16 %v1178, %v1170
      %v1955 = vpack.c.b16 %v1179, %v1171
      %v1956 = vpack.c.b16 %v1180, %v1172
      %v1957 = vpack.c.b16 %v1181, %v1173
      %v1958 = vpack.c.b16 %v1182, %v1174
      %v1959 = vpack.c.b16 %v1191, %v1183
      %v1960 = vpack.c.b16 %v1192, %v1184
      %v1961 = vpack.c.b16 %v1193, %v1185
      %v1962 = vpack.c.b16 %v1194, %v1186
      %v1963 = vpack.c.b16 %v1195, %v1187
      %v1964 = vpack.c.b16 %v1196, %v1188
      %v1965 = vpack.c.b16 %v1197, %v1189
      %v1966 = vpack.c.b16 %v1198, %v1190
      %v1967 = vpack.c.b16 %v1207, %v1199
      %v1968 = vpack.c.b16 %v1208, %v1200
      %v1969 = vpack.c.b16 %v1209, %v1201
      %v1970 = vpack.c.b16 %v1210, %v1202
      %v1971 = vpack.c.b16 %v1211, %v1203
      %v1972 = vpack.c.b16 %v1212, %v1204
      %v1973 = vpack.c.b16 %v1213, %v1205
      %v1974 = vpack.c.b16 %v1214, %v1206
      %v1975 = vpack.c.b16 %v1223, %v1215
      %v1976 = vpack.c.b16 %v1224, %v1216
      %v1977 = vpack.c.b16 %v1225, %v1217
      %v1978 = vpack.c.b16 %v1226, %v1218
      %v1979 = vpack.c.b16 %v1227, %v1219
      %v1980 = vpack.c.b16 %v1228, %v1220
      %v1981 = vpack.c.b16 %v1229, %v1221
      %v1982 = vpack.c.b16 %v1230, %v1222
      %v1983 = vpack.c.b16 %v1239, %v1231
      %v1984 = vpack.c.b16 %v1240, %v1232
      %v1985 = vpack.c.b16 %v1241, %v1233
      %v1986 = vpack.c.b16 %v1242, %v1234
      %v1987 = vpack.c.b16 %v1243, %v1235
      %v1988 = vpack.c.b16 %v1244, %v1236
      %v1989 = vpack.c.b16 %v1245, %v1237
      %v1990 = vpack.c.b16 %v1246, %v1238
      %v1991 = vpack.c.b16 %v1255, %v1247
      %v1992 = vpack.c.b16 %v1256, %v1248
      %v1993 = vpack.c.b16 %v1257, %v1249
      %v1994 = vpack.c.b16 %v1258, %v1250
      %v1995 = vpack.c.b16 %v1259, %v1251
      %v1996 = vpack.c.b16 %v1260, %v1252
      %v1997 = vpack.c.b16 %v1261, %v1253
      %v1998 = vpack.c.b16 %v1262, %v1254
      %v1999 = vpack.c.b16 %v1271, %v1263
      %v2000 = vpack.c.b16 %v1272, %v1264
      %v2001 = vpack.c.b16 %v1273, %v1265
      %v2002 = vpack.c.b16 %v1274, %v1266
      %v2003 = vpack.c.b16 %v1275, %v1267
      %v2004 = vpack.c.b16 %v1276, %v1268
      %v2005 = vpack.c.b16 %v1277, %v1269
      %v2006 = vpack.c.b16 %v1278, %v1270
      %v2007 = vpack.c.b16 %v1287, %v1279
      %v2008 = vpack.c.b16 %v1288, %v1280
      %v2009 = vpack.c.b16 %v1289, %v1281
      %v2010 = vpack.c.b16 %v1290, %v1282
      %v2011 = vpack.c.b16 %v1291, %v1283
      %v2012 = vpack.c.b16 %v1292, %v1284
      %v2013 = vpack.c.b16 %v1293, %v1285
      %v2014 = vpack.c.b16 %v1294, %v1286
      %v2015 = vpack.c.b16 %v1303, %v1295
      %v2016 = vpack.c.b16 %v1304, %v1296
      %v2017 = vpack.c.b16 %v1305, %v1297
      %v2018 = vpack.c.b16 %v1306, %v1298
      %v2019 = vpack.c.b16 %v1307, %v1299
      %v2020 = vpack.c.b16 %v1308, %v1300
      %v2021 = vpack.c.b16 %v1309, %v1301
      %v2022 = vpack.c.b16 %v1310, %v1302
      %v2023 = vpack.c.b16 %v1319, %v1311
      %v2024 = vpack.c.b16 %v1320, %v1312
      %v2025 = vpack.c.b16 %v1321, %v1313
      %v2026 = vpack.c.b16 %v1322, %v1314
      %v2027 = vpack.c.b16 %v1323, %v1315
      %v2028 = vpack.c.b16 %v1324, %v1316
      %v2029 = vpack.c.b16 %v1325, %v1317
      %v2030 = vpack.c.b16 %v1326, %v1318
      %v2031 = vpack.c.b16 %v1335, %v1327
      %v2032 = vpack.c.b16 %v1336, %v1328
      %v2033 = vpack.c.b16 %v1337, %v1329
      %v2034 = vpack.c.b16 %v1338, %v1330
      %v2035 = vpack.c.b16 %v1339, %v1331
      %v2036 = vpack.c.b16 %v1340, %v1332
      %v2037 = vpack.c.b16 %v1341, %v1333
      %v2038 = vpack.c.b16 %v1342, %v1334
      %v2039 = vpack.c.b16 %v1351, %v1343
      %v2040 = vpack.c.b16 %v1352, %v1344
      %v2041 = vpack.c.b16 %v1353, %v1345
      %v2042 = vpack.c.b16 %v1354, %v1346
      %v2043 = vpack.c.b16 %v1355, %v1347
      %v2044 = vpack.c.b16 %v1356, %v1348
      %v2045 = vpack.c.b16 %v1357, %v1349
      %v2046 = vpack.c.b16 %v1358, %v1350
      %v2047 = vpack.c.b16 %v1367, %v1359
      %v2048 = vpack.c.b16 %v1368, %v1360
      %v2049 = vpack.c.b16 %v1369, %v1361
      %v2050 = vpack.c.b16 %v1370, %v1362
      %v2051 = vpack.c.b16 %v1371, %v1363
      %v2052 = vpack.c.b16 %v1372, %v1364
      %v2053 = vpack.c.b16 %v1373, %v1365
      %v2054 = vpack.c.b16 %v1374, %v1366
      %v2055 = vpack.c.b16 %v1383, %v1375
      %v2056 = vpack.c.b16 %v1384, %v1376
      %v2057 = vpack.c.b16 %v1385, %v1377
      %v2058 = vpack.c.b16 %v1386, %v1378
      %v2059 = vpack.c.b16 %v1387, %v1379
      %v2060 = vpack.c.b16 %v1388, %v1380
      %v2061 = vpack.c.b16 %v1389, %v1381
      %v2062 = vpack.c.b16 %v1390, %v1382
      %v2063 = vpack.c.b16 %v1399, %v1391
      %v2064 = vpack.c.b16 %v1400, %v1392
      %v2065 = vpack.c.b16 %v1401, %v1393
      %v2066 = vpack.c.b16 %v1402, %v1394
      %v2067 = vpack.c.b16 %v1403, %v1395
      %v2068 = vpack.c.b16 %v1404, %v1396
      %v2069 = vpack.c.b16 %v1405, %v1397
      %v2070 = vpack.c.b16 %v1406, %v1398
      %v2071 = vpack.c.b16 %v1415, %v1407
      %v2072 = vpack.c.b16 %v1416, %v1408
      %v2073 = vpack.c.b16 %v1417, %v1409
      %v2074 = vpack.c.b16 %v1418, %v1410
      %v2075 = vpack.c.b16 %v1419, %v1411
      %v2076 = vpack.c.b16 %v1420, %v1412
      %v2077 = vpack.c.b16 %v1421, %v1413
      %v2078 = vpack.c.b16 %v1422, %v1414
      %v2079 = vpack.c.b16 %v1431, %v1423
      %v2080 = vpack.c.b16 %v1432, %v1424
      %v2081 = vpack.c.b16 %v1433, %v1425
      %v2082 = vpack.c.b16 %v1434, %v1426
      %v2083 = vpack.c.b16 %v1435, %v1427
      %v2084 = vpack.c.b16 %v1436, %v1428
      %v2085 = vpack.c.b16 %v1437, %v1429
      %v2086 = vpack.c.b16 %v1438, %v1430
      %v2087 = vpack.c.b16 %v1447, %v1439
      %v2088 = vpack.c.b16 %v1448, %v1440
      %v2089 = vpack.c.b16 %v1449, %v1441
      %v2090 = vpack.c.b16 %v1450, %v1442
      %v2091 = vpack.c.b16 %v1451, %v1443
      %v2092 = vpack.c.b16 %v1452, %v1444
      %v2093 = vpack.c.b16 %v1453, %v1445
      %v2094 = vpack.c.b16 %v1454, %v1446
      %v2095 = vpack.c.b16 %v1463, %v1455
      %v2096 = vpack.c.b16 %v1464, %v1456
      %v2097 = vpack.c.b16 %v1465, %v1457
      %v2098 = vpack.c.b16 %v1466, %v1458
      %v2099 = vpack.c.b16 %v1467, %v1459
      %v2100 = vpack.c.b16 %v1468, %v1460
      %v2101 = vpack.c.b16 %v1469, %v1461
      %v2102 = vpack.c.b16 %v1470, %v1462
      %v2103 = vpack.c.b16 %v1479, %v1471
      %v2104 = vpack.c.b16 %v1480, %v1472
      %v2105 = vpack.c.b16 %v1481, %v1473
      %v2106 = vpack.c.b16 %v1482, %v1474
      %v2107 = vpack.c.b16 %v1483, %v1475
      %v2108 = vpack.c.b16 %v1484, %v1476
      %v2109 = vpack.c.b16 %v1485, %v1477
      %v2110 = vpack.c.b16 %v1486, %v1478
      %v2111 = vpack.c.b16 %v1495, %v1487
      %v2112 = vpack.c.b16 %v1496, %v1488
      %v2113 = vpack.c.b16 %v1497, %v1489
      %v2114 = vpack.c.b16 %v1498, %v1490
      %v2115 = vpack.c.b16 %v1499, %v1491
      %v2116 = vpack.c.b16 %v1500, %v1492
      %v2117 = vpack.c.b16 %v1501, %v1493
      %v2118 = vpack.c.b16 %v1502, %v1494
      %v2119 = vpack.c.b16 %v1511, %v1503
      %v2120 = vpack.c.b16 %v1512, %v1504
      %v2121 = vpack.c.b16 %v1513, %v1505
      %v2122 = vpack.c.b16 %v1514, %v1506
      %v2123 = vpack.c.b16 %v1515, %v1507
      %v2124 = vpack.c.b16 %v1516, %v1508
      %v2125 = vpack.c.b16 %v1517, %v1509
      %v2126 = vpack.c.b16 %v1518, %v1510
      %v2127 = vpack.c.b16 %v1527, %v1519
      %v2128 = vpack.c.b16 %v1528, %v1520
      %v2129 = vpack.c.b16 %v1529, %v1521
      %v2130 = vpack.c.b16 %v1530, %v1522
      %v2131 = vpack.c.b16 %v1531, %v1523
      %v2132 = vpack.c.b16 %v1532, %v1524
      %v2133 = vpack.c.b16 %v1533, %v1525
      %v2134 = vpack.c.b16 %v1534, %v1526
      %v2135 = vpack.c.b16 %v1543, %v1535
      %v2136 = vpack.c.b16 %v1544, %v1536
      %v2137 = vpack.c.b16 %v1545, %v1537
      %v2138 = vpack.c.b16 %v1546, %v1538
      %v2139 = vpack.c.b16 %v1547, %v1539
      %v2140 = vpack.c.b16 %v1548, %v1540
      %v2141 = vpack.c.b16 %v1549, %v1541
      %v2142 = vpack.c.b16 %v1550, %v1542
      %v2143 = vpack.c.b16 %v1559, %v1551
      %v2144 = vpack.c.b16 %v1560, %v1552
      %v2145 = vpack.c.b16 %v1561, %v1553
      %v2146 = vpack.c.b16 %v1562, %v1554
      %v2147 = vpack.c.b16 %v1563, %v1555
      %v2148 = vpack.c.b16 %v1564, %v1556
      %v2149 = vpack.c.b16 %v1565, %v1557
      %v2150 = vpack.c.b16 %v1566, %v1558
      %v2151 = vpack.c.b16 %v1575, %v1567
      %v2152 = vpack.c.b16 %v1576, %v1568
      %v2153 = vpack.c.b16 %v1577, %v1569
      %v2154 = vpack.c.b16 %v1578, %v1570
      %v2155 = vpack.c.b16 %v1579, %v1571
      %v2156 = vpack.c.b16 %v1580, %v1572
      %v2157 = vpack.c.b16 %v1581, %v1573
      %v2158 = vpack.c.b16 %v1582, %v1574
      %v2159 = vpack.c.b16 %v1591, %v1583
      %v2160 = vpack.c.b16 %v1592, %v1584
      %v2161 = vpack.c.b16 %v1593, %v1585
      %v2162 = vpack.c.b16 %v1594, %v1586
      %v2163 = vpack.c.b16 %v1595, %v1587
      %v2164 = vpack.c.b16 %v1596, %v1588
      %v2165 = vpack.c.b16 %v1597, %v1589
      %v2166 = vpack.c.b16 %v1598, %v1590
      %v2167 = vpack.c.b16 %v1607, %v1599
      %v2168 = vpack.c.b16 %v1608, %v1600
      %v2169 = vpack.c.b16 %v1609, %v1601
      %v2170 = vpack.c.b16 %v1610, %v1602
      %v2171 = vpack.c.b16 %v1611, %v1603
      %v2172 = vpack.c.b16 %v1612, %v1604
      %v2173 = vpack.c.b16 %v1613, %v1605
      %v2174 = vpack.c.b16 %v1614, %v1606
      %v2175 = vpack.c.b16 %v1623, %v1615
      %v2176 = vpack.c.b16 %v1624, %v1616
      %v2177 = vpack.c.b16 %v1625, %v1617
      %v2178 = vpack.c.b16 %v1626, %v1618
      %v2179 = vpack.c.b16 %v1627, %v1619
      %v2180 = vpack.c.b16 %v1628, %v1620
      %v2181 = vpack.c.b16 %v1629, %v1621
      %v2182 = vpack.c.b16 %v1630, %v1622
      %v2183 = vpack.c.b16 %v1639, %v1631
      %v2184 = vpack.c.b16 %v1640, %v1632
      %v2185 = vpack.c.b16 %v1641, %v1633
      %v2186 = vpack.c.b16 %v1642, %v1634
      %v2187 = vpack.c.b16 %v1643, %v1635
      %v2188 = vpack.c.b16 %v1644, %v1636
      %v2189 = vpack.c.b16 %v1645, %v1637
      %v2190 = vpack.c.b16 %v1646, %v1638
      %v2191 = vpack.c.b16 %v1655, %v1647
      %v2192 = vpack.c.b16 %v1656, %v1648
      %v2193 = vpack.c.b16 %v1657, %v1649
      %v2194 = vpack.c.b16 %v1658, %v1650
      %v2195 = vpack.c.b16 %v1659, %v1651
      %v2196 = vpack.c.b16 %v1660, %v1652
      %v2197 = vpack.c.b16 %v1661, %v1653
      %v2198 = vpack.c.b16 %v1662, %v1654
      %v2199 = vpack.c.b16 %v1671, %v1663
      %v2200 = vpack.c.b16 %v1672, %v1664
      %v2201 = vpack.c.b16 %v1673, %v1665
      %v2202 = vpack.c.b16 %v1674, %v1666
      %v2203 = vpack.c.b16 %v1675, %v1667
      %v2204 = vpack.c.b16 %v1676, %v1668
      %v2205 = vpack.c.b16 %v1677, %v1669
      %v2206 = vpack.c.b16 %v1678, %v1670
      %v2207 = vpack.c.b16 %v1687, %v1679
      %v2208 = vpack.c.b16 %v1688, %v1680
      %v2209 = vpack.c.b16 %v1689, %v1681
      %v2210 = vpack.c.b16 %v1690, %v1682
      %v2211 = vpack.c.b16 %v1691, %v1683
      %v2212 = vpack.c.b16 %v1692, %v1684
      %v2213 = vpack.c.b16 %v1693, %v1685
      %v2214 = vpack.c.b16 %v1694, %v1686
      %v2215 = vpack.c.b16 %v1703, %v1695
      %v2216 = vpack.c.b16 %v1704, %v1696
      %v2217 = vpack.c.b16 %v1705, %v1697
      %v2218 = vpack.c.b16 %v1706, %v1698
      %v2219 = vpack.c.b16 %v1707, %v1699
      %v2220 = vpack.c.b16 %v1708, %v1700
      %v2221 = vpack.c.b16 %v1709, %v1701
      %v2222 = vpack.c.b16 %v1710, %v1702
      %v2223 = vpack.c.b16 %v1719, %v1711
      %v2224 = vpack.c.b16 %v1720, %v1712
      %v2225 = vpack.c.b16 %v1721, %v1713
      %v2226 = vpack.c.b16 %v1722, %v1714
      %v2227 = vpack.c.b16 %v1723, %v1715
      %v2228 = vpack.c.b16 %v1724, %v1716
      %v2229 = vpack.c.b16 %v1725, %v1717
      %v2230 = vpack.c.b16 %v1726, %v1718
      %v2231 = vpack.c.b16 %v1735, %v1727
      %v2232 = vpack.c.b16 %v1736, %v1728
      %v2233 = vpack.c.b16 %v1737, %v1729
      %v2234 = vpack.c.b16 %v1738, %v1730
      %v2235 = vpack.c.b16 %v1739, %v1731
      %v2236 = vpack.c.b16 %v1740, %v1732
      %v2237 = vpack.c.b16 %v1741, %v1733
      %v2238 = vpack.c.b16 %v1742, %v1734
      %v2239 = vpack.c.b16 %v1751, %v1743
      %v2240 = vpack.c.b16 %v1752, %v1744
      %v2241 = vpack.c.b16 %v1753, %v1745
      %v2242 = vpack.c.b16 %v1754, %v1746
      %v2243 = vpack.c.b16 %v1755, %v1747
      %v2244 = vpack.c.b16 %v1756, %v1748
      %v2245 = vpack.c.b16 %v1757, %v1749
      %v2246 = vpack.c.b16 %v1758, %v1750
      %v2247 = vpack.c.b16 %v1767, %v1759
      %v2248 = vpack.c.b16 %v1768, %v1760
      %v2249 = vpack.c.b16 %v1769, %v1761
      %v2250 = vpack.c.b16 %v1770, %v1762
      %v2251 = vpack.c.b16 %v1771, %v1763
      %v2252 = vpack.c.b16 %v1772, %v1764
      %v2253 = vpack.c.b16 %v1773, %v1765
      %v2254 = vpack.c.b16 %v1774, %v1766
      %v2255 = vpack.c.b16 %v1783, %v1775
      %v2256 = vpack.c.b16 %v1784, %v1776
      %v2257 = vpack.c.b16 %v1785, %v1777
      %v2258 = vpack.c.b16 %v1786, %v1778
      %v2259 = vpack.c.b16 %v1787, %v1779
      %v2260 = vpack.c.b16 %v1788, %v1780
      %v2261 = vpack.c.b16 %v1789, %v1781
      %v2262 = vpack.c.b16 %v1790, %v1782
      %v2263 = vpack.c.b16 %v1799, %v1791
      %v2264 = vpack.c.b16 %v1800, %v1792
      %v2265 = vpack.c.b16 %v1801, %v1793
      %v2266 = vpack.c.b16 %v1802, %v1794
      %v2267 = vpack.c.b16 %v1803, %v1795
      %v2268 = vpack.c.b16 %v1804, %v1796
      %v2269 = vpack.c.b16 %v1805, %v1797
      %v2270 = vpack.c.b16 %v1806, %v1798
      %v2271 = vpack.c.b16 %v1815, %v1807
      %v2272 = vpack.c.b16 %v1816, %v1808
      %v2273 = vpack.c.b16 %v1817, %v1809
      %v2274 = vpack.c.b16 %v1818, %v1810
      %v2275 = vpack.c.b16 %v1819, %v1811
      %v2276 = vpack.c.b16 %v1820, %v1812
      %v2277 = vpack.c.b16 %v1821, %v1813
      %v2278 = vpack.c.b16 %v1822, %v1814
      %v2279 = vpack.c.b16 %v1831, %v1823
      %v2280 = vpack.c.b16 %v1832, %v1824
      %v2281 = vpack.c.b16 %v1833, %v1825
      %v2282 = vpack.c.b16 %v1834, %v1826
      %v2283 = vpack.c.b16 %v1835, %v1827
      %v2284 = vpack.c.b16 %v1836, %v1828
      %v2285 = vpack.c.b16 %v1837, %v1829
      %v2286 = vpack.c.b16 %v1838, %v1830
      %v2287 = vpack.c.b16 %v1847, %v1839
      %v2288 = vpack.c.b16 %v1848, %v1840
      %v2289 = vpack.c.b16 %v1849, %v1841
      %v2290 = vpack.c.b16 %v1850, %v1842
      %v2291 = vpack.c.b16 %v1851, %v1843
      %v2292 = vpack.c.b16 %v1852, %v1844
      %v2293 = vpack.c.b16 %v1853, %v1845
      %v2294 = vpack.c.b16 %v1854, %v1846
      %v2295 = vpack.c.b16 %v1863, %v1855
      %v2296 = vpack.c.b16 %v1864, %v1856
      %v2297 = vpack.c.b16 %v1865, %v1857
      %v2298 = vpack.c.b16 %v1866, %v1858
      %v2299 = vpack.c.b16 %v1867, %v1859
      %v2300 = vpack.c.b16 %v1868, %v1860
      %v2301 = vpack.c.b16 %v1869, %v1861
      %v2302 = vpack.c.b16 %v1870, %v1862
      %v2303 = vpack.c.b16 %v1879, %v1871
      %v2304 = vpack.c.b16 %v1880, %v1872
      %v2305 = vpack.c.b16 %v1881, %v1873
      %v2306 = vpack.c.b16 %v1882, %v1874
      %v2307 = vpack.c.b16 %v1883, %v1875
      %v2308 = vpack.c.b16 %v1884, %v1876
      %v2309 = vpack.c.b16 %v1885, %v1877
      %v2310 = vpack.c.b16 %v1886, %v1878
      %v2311 = vpack.c.b16 %v1895, %v1887
      %v2312 = vpack.c.b16 %v1896, %v1888
      %v2313 = vpack.c.b16 %v1897, %v1889
      %v2314 = vpack.c.b16 %v1898, %v1890
      %v2315 = vpack.c.b16 %v1899, %v1891
      %v2316 = vpack.c.b16 %v1900, %v1892
      %v2317 = vpack.c.b16 %v1901, %v1893
      %v2318 = vpack.c.b16 %v1902, %v1894
      %v2319 = vpack.c.b16 %v1911, %v1903
      %v2320 = vpack.c.b16 %v1912, %v1904
      %v2321 = vpack.c.b16 %v1913, %v1905
      %v2322 = vpack.c.b16 %v1914, %v1906
      %v2323 = vpack.c.b16 %v1915, %v1907
      %v2324 = vpack.c.b16 %v1916, %v1908
      %v2325 = vpack.c.b16 %v1917, %v1909
      %v2326 = vpack.c.b16 %v1918, %v1910
      %v2327 = vpack.c.b16 %v1927, %v1919
      %v2328 = vpack.c.b16 %v1928, %v1920
      %v2329 = vpack.c.b16 %v1929, %v1921
      %v2330 = vpack.c.b16 %v1930, %v1922
      %v2331 = vpack.c.b16 %v1931, %v1923
      %v2332 = vpack.c.b16 %v1932, %v1924
      %v2333 = vpack.c.b16 %v1933, %v1925
      %v2334 = vpack.c.b16 %v1934, %v1926
      %v2335 = vpack.c.b16 %v1943, %v1935
      %v2336 = vpack.c.b16 %v1944, %v1936
      %v2337 = vpack.c.b16 %v1945, %v1937
      %v2338 = vpack.c.b16 %v1946, %v1938
      %v2339 = vpack.c.b16 %v1947, %v1939
      %v2340 = vpack.c.b16 %v1948, %v1940
      %v2341 = vpack.c.b16 %v1949, %v1941
      %v2342 = vpack.c.b16 %v1950, %v1942
      %vm2735 = vcmask 130048
      %v2737 = vsel %vm2735, %v382, 0
      %2739 = vmatpush.bf16.msra.mxu0 %v2007
      %2740 = vmatpush.bf16.msra.mxu0 %v1999
      %2741 = vmatpush.bf16.msra.mxu0 %v1991
      %2742 = vmatpush.bf16.msra.mxu0 %v1983
      %2743 = vmatpush.bf16.msra.mxu0 %v1975
      %2744 = vmatpush.bf16.msra.mxu0 %v1967
      %2745 = vmatpush.bf16.msra.mxu0 %v1959
      %2746 = vmatpush.bf16.msra.mxu0 %v1951
      %2747 = vmatmul.bf16.gmra.mxu0 %v376
      %v2748 = vpop.f32.mrf.mxu0
      %v2749 = vadd.f32 0.0, %v2748
      %v2750 = vpop.f32.mrf.mxu0
      %v2751 = vadd.f32 0.0, %v2750
      %2752 = vdwg.mxu0
      %2753 = vmatpush.bf16.msra.mxu0 %v2071
      %2754 = vmatpush.bf16.msra.mxu0 %v2063
      %2755 = vmatpush.bf16.msra.mxu0 %v2055
      %2756 = vmatpush.bf16.msra.mxu0 %v2047
      %2757 = vmatpush.bf16.msra.mxu0 %v2039
      %2758 = vmatpush.bf16.msra.mxu0 %v2031
      %2759 = vmatpush.bf16.msra.mxu0 %v2023
      %2760 = vmatpush.bf16.msra.mxu0 %v2015
      %2761 = vmatmul.bf16.gmra.mxu0 %v377
      %v2762 = vpop.f32.mrf.mxu0
      %v2763 = vadd.f32 %v2749, %v2762
      %v2764 = vpop.f32.mrf.mxu0
      %v2765 = vadd.f32 %v2751, %v2764
      %2766 = vdwg.mxu0
      %2767 = vmatpush.bf16.msra.mxu0 %v2135
      %2768 = vmatpush.bf16.msra.mxu0 %v2127
      %2769 = vmatpush.bf16.msra.mxu0 %v2119
      %2770 = vmatpush.bf16.msra.mxu0 %v2111
      %2771 = vmatpush.bf16.msra.mxu0 %v2103
      %2772 = vmatpush.bf16.msra.mxu0 %v2095
      %2773 = vmatpush.bf16.msra.mxu0 %v2087
      %2774 = vmatpush.bf16.msra.mxu0 %v2079
      %2775 = vmatmul.bf16.gmra.mxu0 %v378
      %v2776 = vpop.f32.mrf.mxu0
      %v2777 = vadd.f32 %v2763, %v2776
      %v2778 = vpop.f32.mrf.mxu0
      %v2779 = vadd.f32 %v2765, %v2778
      %2780 = vdwg.mxu0
      %2781 = vmatpush.bf16.msra.mxu0 %v2199
      %2782 = vmatpush.bf16.msra.mxu0 %v2191
      %2783 = vmatpush.bf16.msra.mxu0 %v2183
      %2784 = vmatpush.bf16.msra.mxu0 %v2175
      %2785 = vmatpush.bf16.msra.mxu0 %v2167
      %2786 = vmatpush.bf16.msra.mxu0 %v2159
      %2787 = vmatpush.bf16.msra.mxu0 %v2151
      %2788 = vmatpush.bf16.msra.mxu0 %v2143
      %2789 = vmatmul.bf16.gmra.mxu0 %v379
      %v2790 = vpop.f32.mrf.mxu0
      %v2791 = vadd.f32 %v2777, %v2790
      %v2792 = vpop.f32.mrf.mxu0
      %v2793 = vadd.f32 %v2779, %v2792
      %2794 = vdwg.mxu0
      %2795 = vmatpush.bf16.msra.mxu0 %v2263
      %2796 = vmatpush.bf16.msra.mxu0 %v2255
      %2797 = vmatpush.bf16.msra.mxu0 %v2247
      %2798 = vmatpush.bf16.msra.mxu0 %v2239
      %2799 = vmatpush.bf16.msra.mxu0 %v2231
      %2800 = vmatpush.bf16.msra.mxu0 %v2223
      %2801 = vmatpush.bf16.msra.mxu0 %v2215
      %2802 = vmatpush.bf16.msra.mxu0 %v2207
      %2803 = vmatmul.bf16.gmra.mxu0 %v380
      %v2804 = vpop.f32.mrf.mxu0
      %v2805 = vadd.f32 %v2791, %v2804
      %v2806 = vpop.f32.mrf.mxu0
      %v2807 = vadd.f32 %v2793, %v2806
      %2808 = vdwg.mxu0
      %2809 = vmatpush.bf16.msra.mxu0 %v2327
      %2810 = vmatpush.bf16.msra.mxu0 %v2319
      %2811 = vmatpush.bf16.msra.mxu0 %v2311
      %2812 = vmatpush.bf16.msra.mxu0 %v2303
      %2813 = vmatpush.bf16.msra.mxu0 %v2295
      %2814 = vmatpush.bf16.msra.mxu0 %v2287
      %2815 = vmatpush.bf16.msra.mxu0 %v2279
      %2816 = vmatpush.bf16.msra.mxu0 %v2271
      %2817 = vmatmul.bf16.gmra.mxu0 %v381
      %v2818 = vpop.f32.mrf.mxu0
      %v2819 = vadd.f32 %v2805, %v2818
      %v2820 = vpop.f32.mrf.mxu0
      %v2821 = vadd.f32 %v2807, %v2820
      %2822 = vdwg.mxu0
      %2823 = vmatpush.bf16.msra.mxu0 0
      %2824 = vmatpush.bf16.msra.mxu0 0
      %2825 = vmatpush.bf16.msra.mxu0 0
      %2826 = vmatpush.bf16.msra.mxu0 0
      %2827 = vmatpush.bf16.msra.mxu0 0
      %2828 = vmatpush.bf16.msra.mxu0 0
      %2829 = vmatpush.bf16.msra.mxu0 0
      %2830 = vmatpush.bf16.msra.mxu0 %v2335
      %2831 = vmatmul.bf16.gmra.mxu0 %v2737
      %v2832 = vpop.f32.mrf.mxu0
      %v2833 = vadd.f32 %v2819, %v2832
      %v2834 = vpop.f32.mrf.mxu0
      %v2835 = vadd.f32 %v2821, %v2834
      %2836 = vdwg.mxu0
      %2837 = vmatpush.bf16.msra.mxu0 %v2008
      %2838 = vmatpush.bf16.msra.mxu0 %v2000
      %2839 = vmatpush.bf16.msra.mxu0 %v1992
      %2840 = vmatpush.bf16.msra.mxu0 %v1984
      %2841 = vmatpush.bf16.msra.mxu0 %v1976
      %2842 = vmatpush.bf16.msra.mxu0 %v1968
      %2843 = vmatpush.bf16.msra.mxu0 %v1960
      %2844 = vmatpush.bf16.msra.mxu0 %v1952
      %2845 = vmatmul.bf16.gmra.mxu0 %v376
      %v2846 = vpop.f32.mrf.mxu0
      %v2847 = vadd.f32 0.0, %v2846
      %v2848 = vpop.f32.mrf.mxu0
      %v2849 = vadd.f32 0.0, %v2848
      %2850 = vdwg.mxu0
      %2851 = vmatpush.bf16.msra.mxu0 %v2072
      %2852 = vmatpush.bf16.msra.mxu0 %v2064
      %2853 = vmatpush.bf16.msra.mxu0 %v2056
      %2854 = vmatpush.bf16.msra.mxu0 %v2048
      %2855 = vmatpush.bf16.msra.mxu0 %v2040
      %2856 = vmatpush.bf16.msra.mxu0 %v2032
      %2857 = vmatpush.bf16.msra.mxu0 %v2024
      %2858 = vmatpush.bf16.msra.mxu0 %v2016
      %2859 = vmatmul.bf16.gmra.mxu0 %v377
      %v2860 = vpop.f32.mrf.mxu0
      %v2861 = vadd.f32 %v2847, %v2860
      %v2862 = vpop.f32.mrf.mxu0
      %v2863 = vadd.f32 %v2849, %v2862
      %2864 = vdwg.mxu0
      %2865 = vmatpush.bf16.msra.mxu0 %v2136
      %2866 = vmatpush.bf16.msra.mxu0 %v2128
      %2867 = vmatpush.bf16.msra.mxu0 %v2120
      %2868 = vmatpush.bf16.msra.mxu0 %v2112
      %2869 = vmatpush.bf16.msra.mxu0 %v2104
      %2870 = vmatpush.bf16.msra.mxu0 %v2096
      %2871 = vmatpush.bf16.msra.mxu0 %v2088
      %2872 = vmatpush.bf16.msra.mxu0 %v2080
      %2873 = vmatmul.bf16.gmra.mxu0 %v378
      %v2874 = vpop.f32.mrf.mxu0
      %v2875 = vadd.f32 %v2861, %v2874
      %v2876 = vpop.f32.mrf.mxu0
      %v2877 = vadd.f32 %v2863, %v2876
      %2878 = vdwg.mxu0
      %2879 = vmatpush.bf16.msra.mxu0 %v2200
      %2880 = vmatpush.bf16.msra.mxu0 %v2192
      %2881 = vmatpush.bf16.msra.mxu0 %v2184
      %2882 = vmatpush.bf16.msra.mxu0 %v2176
      %2883 = vmatpush.bf16.msra.mxu0 %v2168
      %2884 = vmatpush.bf16.msra.mxu0 %v2160
      %2885 = vmatpush.bf16.msra.mxu0 %v2152
      %2886 = vmatpush.bf16.msra.mxu0 %v2144
      %2887 = vmatmul.bf16.gmra.mxu0 %v379
      %v2888 = vpop.f32.mrf.mxu0
      %v2889 = vadd.f32 %v2875, %v2888
      %v2890 = vpop.f32.mrf.mxu0
      %v2891 = vadd.f32 %v2877, %v2890
      %2892 = vdwg.mxu0
      %2893 = vmatpush.bf16.msra.mxu0 %v2264
      %2894 = vmatpush.bf16.msra.mxu0 %v2256
      %2895 = vmatpush.bf16.msra.mxu0 %v2248
      %2896 = vmatpush.bf16.msra.mxu0 %v2240
      %2897 = vmatpush.bf16.msra.mxu0 %v2232
      %2898 = vmatpush.bf16.msra.mxu0 %v2224
      %2899 = vmatpush.bf16.msra.mxu0 %v2216
      %2900 = vmatpush.bf16.msra.mxu0 %v2208
      %2901 = vmatmul.bf16.gmra.mxu0 %v380
      %v2902 = vpop.f32.mrf.mxu0
      %v2903 = vadd.f32 %v2889, %v2902
      %v2904 = vpop.f32.mrf.mxu0
      %v2905 = vadd.f32 %v2891, %v2904
      %2906 = vdwg.mxu0
      %2907 = vmatpush.bf16.msra.mxu0 %v2328
      %2908 = vmatpush.bf16.msra.mxu0 %v2320
      %2909 = vmatpush.bf16.msra.mxu0 %v2312
      %2910 = vmatpush.bf16.msra.mxu0 %v2304
      %2911 = vmatpush.bf16.msra.mxu0 %v2296
      %2912 = vmatpush.bf16.msra.mxu0 %v2288
      %2913 = vmatpush.bf16.msra.mxu0 %v2280
      %2914 = vmatpush.bf16.msra.mxu0 %v2272
      %2915 = vmatmul.bf16.gmra.mxu0 %v381
      %v2916 = vpop.f32.mrf.mxu0
      %v2917 = vadd.f32 %v2903, %v2916
      %v2918 = vpop.f32.mrf.mxu0
      %v2919 = vadd.f32 %v2905, %v2918
      %2920 = vdwg.mxu0
      %2921 = vmatpush.bf16.msra.mxu0 0
      %2922 = vmatpush.bf16.msra.mxu0 0
      %2923 = vmatpush.bf16.msra.mxu0 0
      %2924 = vmatpush.bf16.msra.mxu0 0
      %2925 = vmatpush.bf16.msra.mxu0 0
      %2926 = vmatpush.bf16.msra.mxu0 0
      %2927 = vmatpush.bf16.msra.mxu0 0
      %2928 = vmatpush.bf16.msra.mxu0 %v2336
      %2929 = vmatmul.bf16.gmra.mxu0 %v2737
      %v2930 = vpop.f32.mrf.mxu0
      %v2931 = vadd.f32 %v2917, %v2930
      %v2932 = vpop.f32.mrf.mxu0
      %v2933 = vadd.f32 %v2919, %v2932
      %2934 = vdwg.mxu0
      %2935 = vmatpush.bf16.msra.mxu0 %v2009
      %2936 = vmatpush.bf16.msra.mxu0 %v2001
      %2937 = vmatpush.bf16.msra.mxu0 %v1993
      %2938 = vmatpush.bf16.msra.mxu0 %v1985
      %2939 = vmatpush.bf16.msra.mxu0 %v1977
      %2940 = vmatpush.bf16.msra.mxu0 %v1969
      %2941 = vmatpush.bf16.msra.mxu0 %v1961
      %2942 = vmatpush.bf16.msra.mxu0 %v1953
      %2943 = vmatmul.bf16.gmra.mxu0 %v376
      %v2944 = vpop.f32.mrf.mxu0
      %v2945 = vadd.f32 0.0, %v2944
      %v2946 = vpop.f32.mrf.mxu0
      %v2947 = vadd.f32 0.0, %v2946
      %2948 = vdwg.mxu0
      %2949 = vmatpush.bf16.msra.mxu0 %v2073
      %2950 = vmatpush.bf16.msra.mxu0 %v2065
      %2951 = vmatpush.bf16.msra.mxu0 %v2057
      %2952 = vmatpush.bf16.msra.mxu0 %v2049
      %2953 = vmatpush.bf16.msra.mxu0 %v2041
      %2954 = vmatpush.bf16.msra.mxu0 %v2033
      %2955 = vmatpush.bf16.msra.mxu0 %v2025
      %2956 = vmatpush.bf16.msra.mxu0 %v2017
      %2957 = vmatmul.bf16.gmra.mxu0 %v377
      %v2958 = vpop.f32.mrf.mxu0
      %v2959 = vadd.f32 %v2945, %v2958
      %v2960 = vpop.f32.mrf.mxu0
      %v2961 = vadd.f32 %v2947, %v2960
      %2962 = vdwg.mxu0
      %2963 = vmatpush.bf16.msra.mxu0 %v2137
      %2964 = vmatpush.bf16.msra.mxu0 %v2129
      %2965 = vmatpush.bf16.msra.mxu0 %v2121
      %2966 = vmatpush.bf16.msra.mxu0 %v2113
      %2967 = vmatpush.bf16.msra.mxu0 %v2105
      %2968 = vmatpush.bf16.msra.mxu0 %v2097
      %2969 = vmatpush.bf16.msra.mxu0 %v2089
      %2970 = vmatpush.bf16.msra.mxu0 %v2081
      %2971 = vmatmul.bf16.gmra.mxu0 %v378
      %v2972 = vpop.f32.mrf.mxu0
      %v2973 = vadd.f32 %v2959, %v2972
      %v2974 = vpop.f32.mrf.mxu0
      %v2975 = vadd.f32 %v2961, %v2974
      %2976 = vdwg.mxu0
      %2977 = vmatpush.bf16.msra.mxu0 %v2201
      %2978 = vmatpush.bf16.msra.mxu0 %v2193
      %2979 = vmatpush.bf16.msra.mxu0 %v2185
      %2980 = vmatpush.bf16.msra.mxu0 %v2177
      %2981 = vmatpush.bf16.msra.mxu0 %v2169
      %2982 = vmatpush.bf16.msra.mxu0 %v2161
      %2983 = vmatpush.bf16.msra.mxu0 %v2153
      %2984 = vmatpush.bf16.msra.mxu0 %v2145
      %2985 = vmatmul.bf16.gmra.mxu0 %v379
      %v2986 = vpop.f32.mrf.mxu0
      %v2987 = vadd.f32 %v2973, %v2986
      %v2988 = vpop.f32.mrf.mxu0
      %v2989 = vadd.f32 %v2975, %v2988
      %2990 = vdwg.mxu0
      %2991 = vmatpush.bf16.msra.mxu0 %v2265
      %2992 = vmatpush.bf16.msra.mxu0 %v2257
      %2993 = vmatpush.bf16.msra.mxu0 %v2249
      %2994 = vmatpush.bf16.msra.mxu0 %v2241
      %2995 = vmatpush.bf16.msra.mxu0 %v2233
      %2996 = vmatpush.bf16.msra.mxu0 %v2225
      %2997 = vmatpush.bf16.msra.mxu0 %v2217
      %2998 = vmatpush.bf16.msra.mxu0 %v2209
      %2999 = vmatmul.bf16.gmra.mxu0 %v380
      %v3000 = vpop.f32.mrf.mxu0
      %v3001 = vadd.f32 %v2987, %v3000
      %v3002 = vpop.f32.mrf.mxu0
      %v3003 = vadd.f32 %v2989, %v3002
      %3004 = vdwg.mxu0
      %3005 = vmatpush.bf16.msra.mxu0 %v2329
      %3006 = vmatpush.bf16.msra.mxu0 %v2321
      %3007 = vmatpush.bf16.msra.mxu0 %v2313
      %3008 = vmatpush.bf16.msra.mxu0 %v2305
      %3009 = vmatpush.bf16.msra.mxu0 %v2297
      %3010 = vmatpush.bf16.msra.mxu0 %v2289
      %3011 = vmatpush.bf16.msra.mxu0 %v2281
      %3012 = vmatpush.bf16.msra.mxu0 %v2273
      %3013 = vmatmul.bf16.gmra.mxu0 %v381
      %v3014 = vpop.f32.mrf.mxu0
      %v3015 = vadd.f32 %v3001, %v3014
      %v3016 = vpop.f32.mrf.mxu0
      %v3017 = vadd.f32 %v3003, %v3016
      %3018 = vdwg.mxu0
      %3019 = vmatpush.bf16.msra.mxu0 0
      %3020 = vmatpush.bf16.msra.mxu0 0
      %3021 = vmatpush.bf16.msra.mxu0 0
      %3022 = vmatpush.bf16.msra.mxu0 0
      %3023 = vmatpush.bf16.msra.mxu0 0
      %3024 = vmatpush.bf16.msra.mxu0 0
      %3025 = vmatpush.bf16.msra.mxu0 0
      %3026 = vmatpush.bf16.msra.mxu0 %v2337
      %3027 = vmatmul.bf16.gmra.mxu0 %v2737
      %v3028 = vpop.f32.mrf.mxu0
      %v3029 = vadd.f32 %v3015, %v3028
      %v3030 = vpop.f32.mrf.mxu0
      %v3031 = vadd.f32 %v3017, %v3030
      %3032 = vdwg.mxu0
      %3033 = vmatpush.bf16.msra.mxu0 %v2010
      %3034 = vmatpush.bf16.msra.mxu0 %v2002
      %3035 = vmatpush.bf16.msra.mxu0 %v1994
      %3036 = vmatpush.bf16.msra.mxu0 %v1986
      %3037 = vmatpush.bf16.msra.mxu0 %v1978
      %3038 = vmatpush.bf16.msra.mxu0 %v1970
      %3039 = vmatpush.bf16.msra.mxu0 %v1962
      %3040 = vmatpush.bf16.msra.mxu0 %v1954
      %3041 = vmatmul.bf16.gmra.mxu0 %v376
      %v3042 = vpop.f32.mrf.mxu0
      %v3043 = vadd.f32 0.0, %v3042
      %v3044 = vpop.f32.mrf.mxu0
      %v3045 = vadd.f32 0.0, %v3044
      %3046 = vdwg.mxu0
      %3047 = vmatpush.bf16.msra.mxu0 %v2074
      %3048 = vmatpush.bf16.msra.mxu0 %v2066
      %3049 = vmatpush.bf16.msra.mxu0 %v2058
      %3050 = vmatpush.bf16.msra.mxu0 %v2050
      %3051 = vmatpush.bf16.msra.mxu0 %v2042
      %3052 = vmatpush.bf16.msra.mxu0 %v2034
      %3053 = vmatpush.bf16.msra.mxu0 %v2026
      %3054 = vmatpush.bf16.msra.mxu0 %v2018
      %3055 = vmatmul.bf16.gmra.mxu0 %v377
      %v3056 = vpop.f32.mrf.mxu0
      %v3057 = vadd.f32 %v3043, %v3056
      %v3058 = vpop.f32.mrf.mxu0
      %v3059 = vadd.f32 %v3045, %v3058
      %3060 = vdwg.mxu0
      %3061 = vmatpush.bf16.msra.mxu0 %v2138
      %3062 = vmatpush.bf16.msra.mxu0 %v2130
      %3063 = vmatpush.bf16.msra.mxu0 %v2122
      %3064 = vmatpush.bf16.msra.mxu0 %v2114
      %3065 = vmatpush.bf16.msra.mxu0 %v2106
      %3066 = vmatpush.bf16.msra.mxu0 %v2098
      %3067 = vmatpush.bf16.msra.mxu0 %v2090
      %3068 = vmatpush.bf16.msra.mxu0 %v2082
      %3069 = vmatmul.bf16.gmra.mxu0 %v378
      %v3070 = vpop.f32.mrf.mxu0
      %v3071 = vadd.f32 %v3057, %v3070
      %v3072 = vpop.f32.mrf.mxu0
      %v3073 = vadd.f32 %v3059, %v3072
      %3074 = vdwg.mxu0
      %3075 = vmatpush.bf16.msra.mxu0 %v2202
      %3076 = vmatpush.bf16.msra.mxu0 %v2194
      %3077 = vmatpush.bf16.msra.mxu0 %v2186
      %3078 = vmatpush.bf16.msra.mxu0 %v2178
      %3079 = vmatpush.bf16.msra.mxu0 %v2170
      %3080 = vmatpush.bf16.msra.mxu0 %v2162
      %3081 = vmatpush.bf16.msra.mxu0 %v2154
      %3082 = vmatpush.bf16.msra.mxu0 %v2146
      %3083 = vmatmul.bf16.gmra.mxu0 %v379
      %v3084 = vpop.f32.mrf.mxu0
      %v3085 = vadd.f32 %v3071, %v3084
      %v3086 = vpop.f32.mrf.mxu0
      %v3087 = vadd.f32 %v3073, %v3086
      %3088 = vdwg.mxu0
      %3089 = vmatpush.bf16.msra.mxu0 %v2266
      %3090 = vmatpush.bf16.msra.mxu0 %v2258
      %3091 = vmatpush.bf16.msra.mxu0 %v2250
      %3092 = vmatpush.bf16.msra.mxu0 %v2242
      %3093 = vmatpush.bf16.msra.mxu0 %v2234
      %3094 = vmatpush.bf16.msra.mxu0 %v2226
      %3095 = vmatpush.bf16.msra.mxu0 %v2218
      %3096 = vmatpush.bf16.msra.mxu0 %v2210
      %3097 = vmatmul.bf16.gmra.mxu0 %v380
      %v3098 = vpop.f32.mrf.mxu0
      %v3099 = vadd.f32 %v3085, %v3098
      %v3100 = vpop.f32.mrf.mxu0
      %v3101 = vadd.f32 %v3087, %v3100
      %3102 = vdwg.mxu0
      %3103 = vmatpush.bf16.msra.mxu0 %v2330
      %3104 = vmatpush.bf16.msra.mxu0 %v2322
      %3105 = vmatpush.bf16.msra.mxu0 %v2314
      %3106 = vmatpush.bf16.msra.mxu0 %v2306
      %3107 = vmatpush.bf16.msra.mxu0 %v2298
      %3108 = vmatpush.bf16.msra.mxu0 %v2290
      %3109 = vmatpush.bf16.msra.mxu0 %v2282
      %3110 = vmatpush.bf16.msra.mxu0 %v2274
      %3111 = vmatmul.bf16.gmra.mxu0 %v381
      %v3112 = vpop.f32.mrf.mxu0
      %v3113 = vadd.f32 %v3099, %v3112
      %v3114 = vpop.f32.mrf.mxu0
      %v3115 = vadd.f32 %v3101, %v3114
      %3116 = vdwg.mxu0
      %3117 = vmatpush.bf16.msra.mxu0 0
      %3118 = vmatpush.bf16.msra.mxu0 0
      %3119 = vmatpush.bf16.msra.mxu0 0
      %3120 = vmatpush.bf16.msra.mxu0 0
      %3121 = vmatpush.bf16.msra.mxu0 0
      %3122 = vmatpush.bf16.msra.mxu0 0
      %3123 = vmatpush.bf16.msra.mxu0 0
      %3124 = vmatpush.bf16.msra.mxu0 %v2338
      %3125 = vmatmul.bf16.gmra.mxu0 %v2737
      %v3126 = vpop.f32.mrf.mxu0
      %v3127 = vadd.f32 %v3113, %v3126
      %v3128 = vpop.f32.mrf.mxu0
      %v3129 = vadd.f32 %v3115, %v3128
      %3130 = vdwg.mxu0
      %3131 = vmatpush.bf16.msra.mxu0 %v2011
      %3132 = vmatpush.bf16.msra.mxu0 %v2003
      %3133 = vmatpush.bf16.msra.mxu0 %v1995
      %3134 = vmatpush.bf16.msra.mxu0 %v1987
      %3135 = vmatpush.bf16.msra.mxu0 %v1979
      %3136 = vmatpush.bf16.msra.mxu0 %v1971
      %3137 = vmatpush.bf16.msra.mxu0 %v1963
      %3138 = vmatpush.bf16.msra.mxu0 %v1955
      %3139 = vmatmul.bf16.gmra.mxu0 %v376
      %v3140 = vpop.f32.mrf.mxu0
      %v3141 = vadd.f32 0.0, %v3140
      %v3142 = vpop.f32.mrf.mxu0
      %v3143 = vadd.f32 0.0, %v3142
      %3144 = vdwg.mxu0
      %3145 = vmatpush.bf16.msra.mxu0 %v2075
      %3146 = vmatpush.bf16.msra.mxu0 %v2067
      %3147 = vmatpush.bf16.msra.mxu0 %v2059
      %3148 = vmatpush.bf16.msra.mxu0 %v2051
      %3149 = vmatpush.bf16.msra.mxu0 %v2043
      %3150 = vmatpush.bf16.msra.mxu0 %v2035
      %3151 = vmatpush.bf16.msra.mxu0 %v2027
      %3152 = vmatpush.bf16.msra.mxu0 %v2019
      %3153 = vmatmul.bf16.gmra.mxu0 %v377
      %v3154 = vpop.f32.mrf.mxu0
      %v3155 = vadd.f32 %v3141, %v3154
      %v3156 = vpop.f32.mrf.mxu0
      %v3157 = vadd.f32 %v3143, %v3156
      %3158 = vdwg.mxu0
      %3159 = vmatpush.bf16.msra.mxu0 %v2139
      %3160 = vmatpush.bf16.msra.mxu0 %v2131
      %3161 = vmatpush.bf16.msra.mxu0 %v2123
      %3162 = vmatpush.bf16.msra.mxu0 %v2115
      %3163 = vmatpush.bf16.msra.mxu0 %v2107
      %3164 = vmatpush.bf16.msra.mxu0 %v2099
      %3165 = vmatpush.bf16.msra.mxu0 %v2091
      %3166 = vmatpush.bf16.msra.mxu0 %v2083
      %3167 = vmatmul.bf16.gmra.mxu0 %v378
      %v3168 = vpop.f32.mrf.mxu0
      %v3169 = vadd.f32 %v3155, %v3168
      %v3170 = vpop.f32.mrf.mxu0
      %v3171 = vadd.f32 %v3157, %v3170
      %3172 = vdwg.mxu0
      %3173 = vmatpush.bf16.msra.mxu0 %v2203
      %3174 = vmatpush.bf16.msra.mxu0 %v2195
      %3175 = vmatpush.bf16.msra.mxu0 %v2187
      %3176 = vmatpush.bf16.msra.mxu0 %v2179
      %3177 = vmatpush.bf16.msra.mxu0 %v2171
      %3178 = vmatpush.bf16.msra.mxu0 %v2163
      %3179 = vmatpush.bf16.msra.mxu0 %v2155
      %3180 = vmatpush.bf16.msra.mxu0 %v2147
      %3181 = vmatmul.bf16.gmra.mxu0 %v379
      %v3182 = vpop.f32.mrf.mxu0
      %v3183 = vadd.f32 %v3169, %v3182
      %v3184 = vpop.f32.mrf.mxu0
      %v3185 = vadd.f32 %v3171, %v3184
      %3186 = vdwg.mxu0
      %3187 = vmatpush.bf16.msra.mxu0 %v2267
      %3188 = vmatpush.bf16.msra.mxu0 %v2259
      %3189 = vmatpush.bf16.msra.mxu0 %v2251
      %3190 = vmatpush.bf16.msra.mxu0 %v2243
      %3191 = vmatpush.bf16.msra.mxu0 %v2235
      %3192 = vmatpush.bf16.msra.mxu0 %v2227
      %3193 = vmatpush.bf16.msra.mxu0 %v2219
      %3194 = vmatpush.bf16.msra.mxu0 %v2211
      %3195 = vmatmul.bf16.gmra.mxu0 %v380
      %v3196 = vpop.f32.mrf.mxu0
      %v3197 = vadd.f32 %v3183, %v3196
      %v3198 = vpop.f32.mrf.mxu0
      %v3199 = vadd.f32 %v3185, %v3198
      %3200 = vdwg.mxu0
      %3201 = vmatpush.bf16.msra.mxu0 %v2331
      %3202 = vmatpush.bf16.msra.mxu0 %v2323
      %3203 = vmatpush.bf16.msra.mxu0 %v2315
      %3204 = vmatpush.bf16.msra.mxu0 %v2307
      %3205 = vmatpush.bf16.msra.mxu0 %v2299
      %3206 = vmatpush.bf16.msra.mxu0 %v2291
      %3207 = vmatpush.bf16.msra.mxu0 %v2283
      %3208 = vmatpush.bf16.msra.mxu0 %v2275
      %3209 = vmatmul.bf16.gmra.mxu0 %v381
      %v3210 = vpop.f32.mrf.mxu0
      %v3211 = vadd.f32 %v3197, %v3210
      %v3212 = vpop.f32.mrf.mxu0
      %v3213 = vadd.f32 %v3199, %v3212
      %3214 = vdwg.mxu0
      %3215 = vmatpush.bf16.msra.mxu0 0
      %3216 = vmatpush.bf16.msra.mxu0 0
      %3217 = vmatpush.bf16.msra.mxu0 0
      %3218 = vmatpush.bf16.msra.mxu0 0
      %3219 = vmatpush.bf16.msra.mxu0 0
      %3220 = vmatpush.bf16.msra.mxu0 0
      %3221 = vmatpush.bf16.msra.mxu0 0
      %3222 = vmatpush.bf16.msra.mxu0 %v2339
      %3223 = vmatmul.bf16.gmra.mxu0 %v2737
      %v3224 = vpop.f32.mrf.mxu0
      %v3225 = vadd.f32 %v3211, %v3224
      %v3226 = vpop.f32.mrf.mxu0
      %v3227 = vadd.f32 %v3213, %v3226
      %3228 = vdwg.mxu0
      %3229 = vmatpush.bf16.msra.mxu0 %v2012
      %3230 = vmatpush.bf16.msra.mxu0 %v2004
      %3231 = vmatpush.bf16.msra.mxu0 %v1996
      %3232 = vmatpush.bf16.msra.mxu0 %v1988
      %3233 = vmatpush.bf16.msra.mxu0 %v1980
      %3234 = vmatpush.bf16.msra.mxu0 %v1972
      %3235 = vmatpush.bf16.msra.mxu0 %v1964
      %3236 = vmatpush.bf16.msra.mxu0 %v1956
      %3237 = vmatmul.bf16.gmra.mxu0 %v376
      %v3238 = vpop.f32.mrf.mxu0
      %v3239 = vadd.f32 0.0, %v3238
      %v3240 = vpop.f32.mrf.mxu0
      %v3241 = vadd.f32 0.0, %v3240
      %3242 = vdwg.mxu0
      %3243 = vmatpush.bf16.msra.mxu0 %v2076
      %3244 = vmatpush.bf16.msra.mxu0 %v2068
      %3245 = vmatpush.bf16.msra.mxu0 %v2060
      %3246 = vmatpush.bf16.msra.mxu0 %v2052
      %3247 = vmatpush.bf16.msra.mxu0 %v2044
      %3248 = vmatpush.bf16.msra.mxu0 %v2036
      %3249 = vmatpush.bf16.msra.mxu0 %v2028
      %3250 = vmatpush.bf16.msra.mxu0 %v2020
      %3251 = vmatmul.bf16.gmra.mxu0 %v377
      %v3252 = vpop.f32.mrf.mxu0
      %v3253 = vadd.f32 %v3239, %v3252
      %v3254 = vpop.f32.mrf.mxu0
      %v3255 = vadd.f32 %v3241, %v3254
      %3256 = vdwg.mxu0
      %3257 = vmatpush.bf16.msra.mxu0 %v2140
      %3258 = vmatpush.bf16.msra.mxu0 %v2132
      %3259 = vmatpush.bf16.msra.mxu0 %v2124
      %3260 = vmatpush.bf16.msra.mxu0 %v2116
      %3261 = vmatpush.bf16.msra.mxu0 %v2108
      %3262 = vmatpush.bf16.msra.mxu0 %v2100
      %3263 = vmatpush.bf16.msra.mxu0 %v2092
      %3264 = vmatpush.bf16.msra.mxu0 %v2084
      %3265 = vmatmul.bf16.gmra.mxu0 %v378
      %v3266 = vpop.f32.mrf.mxu0
      %v3267 = vadd.f32 %v3253, %v3266
      %v3268 = vpop.f32.mrf.mxu0
      %v3269 = vadd.f32 %v3255, %v3268
      %3270 = vdwg.mxu0
      %3271 = vmatpush.bf16.msra.mxu0 %v2204
      %3272 = vmatpush.bf16.msra.mxu0 %v2196
      %3273 = vmatpush.bf16.msra.mxu0 %v2188
      %3274 = vmatpush.bf16.msra.mxu0 %v2180
      %3275 = vmatpush.bf16.msra.mxu0 %v2172
      %3276 = vmatpush.bf16.msra.mxu0 %v2164
      %3277 = vmatpush.bf16.msra.mxu0 %v2156
      %3278 = vmatpush.bf16.msra.mxu0 %v2148
      %3279 = vmatmul.bf16.gmra.mxu0 %v379
      %v3280 = vpop.f32.mrf.mxu0
      %v3281 = vadd.f32 %v3267, %v3280
      %v3282 = vpop.f32.mrf.mxu0
      %v3283 = vadd.f32 %v3269, %v3282
      %3284 = vdwg.mxu0
      %3285 = vmatpush.bf16.msra.mxu0 %v2268
      %3286 = vmatpush.bf16.msra.mxu0 %v2260
      %3287 = vmatpush.bf16.msra.mxu0 %v2252
      %3288 = vmatpush.bf16.msra.mxu0 %v2244
      %3289 = vmatpush.bf16.msra.mxu0 %v2236
      %3290 = vmatpush.bf16.msra.mxu0 %v2228
      %3291 = vmatpush.bf16.msra.mxu0 %v2220
      %3292 = vmatpush.bf16.msra.mxu0 %v2212
      %3293 = vmatmul.bf16.gmra.mxu0 %v380
      %v3294 = vpop.f32.mrf.mxu0
      %v3295 = vadd.f32 %v3281, %v3294
      %v3296 = vpop.f32.mrf.mxu0
      %v3297 = vadd.f32 %v3283, %v3296
      %3298 = vdwg.mxu0
      %3299 = vmatpush.bf16.msra.mxu0 %v2332
      %3300 = vmatpush.bf16.msra.mxu0 %v2324
      %3301 = vmatpush.bf16.msra.mxu0 %v2316
      %3302 = vmatpush.bf16.msra.mxu0 %v2308
      %3303 = vmatpush.bf16.msra.mxu0 %v2300
      %3304 = vmatpush.bf16.msra.mxu0 %v2292
      %3305 = vmatpush.bf16.msra.mxu0 %v2284
      %3306 = vmatpush.bf16.msra.mxu0 %v2276
      %3307 = vmatmul.bf16.gmra.mxu0 %v381
      %v3308 = vpop.f32.mrf.mxu0
      %v3309 = vadd.f32 %v3295, %v3308
      %v3310 = vpop.f32.mrf.mxu0
      %v3311 = vadd.f32 %v3297, %v3310
      %3312 = vdwg.mxu0
      %3313 = vmatpush.bf16.msra.mxu0 0
      %3314 = vmatpush.bf16.msra.mxu0 0
      %3315 = vmatpush.bf16.msra.mxu0 0
      %3316 = vmatpush.bf16.msra.mxu0 0
      %3317 = vmatpush.bf16.msra.mxu0 0
      %3318 = vmatpush.bf16.msra.mxu0 0
      %3319 = vmatpush.bf16.msra.mxu0 0
      %3320 = vmatpush.bf16.msra.mxu0 %v2340
      %3321 = vmatmul.bf16.gmra.mxu0 %v2737
      %v3322 = vpop.f32.mrf.mxu0
      %v3323 = vadd.f32 %v3309, %v3322
      %v3324 = vpop.f32.mrf.mxu0
      %v3325 = vadd.f32 %v3311, %v3324
      %3326 = vdwg.mxu0
      %3327 = vmatpush.bf16.msra.mxu0 %v2013
      %3328 = vmatpush.bf16.msra.mxu0 %v2005
      %3329 = vmatpush.bf16.msra.mxu0 %v1997
      %3330 = vmatpush.bf16.msra.mxu0 %v1989
      %3331 = vmatpush.bf16.msra.mxu0 %v1981
      %3332 = vmatpush.bf16.msra.mxu0 %v1973
      %3333 = vmatpush.bf16.msra.mxu0 %v1965
      %3334 = vmatpush.bf16.msra.mxu0 %v1957
      %3335 = vmatmul.bf16.gmra.mxu0 %v376
      %v3336 = vpop.f32.mrf.mxu0
      %v3337 = vadd.f32 0.0, %v3336
      %v3338 = vpop.f32.mrf.mxu0
      %v3339 = vadd.f32 0.0, %v3338
      %3340 = vdwg.mxu0
      %3341 = vmatpush.bf16.msra.mxu0 %v2077
      %3342 = vmatpush.bf16.msra.mxu0 %v2069
      %3343 = vmatpush.bf16.msra.mxu0 %v2061
      %3344 = vmatpush.bf16.msra.mxu0 %v2053
      %3345 = vmatpush.bf16.msra.mxu0 %v2045
      %3346 = vmatpush.bf16.msra.mxu0 %v2037
      %3347 = vmatpush.bf16.msra.mxu0 %v2029
      %3348 = vmatpush.bf16.msra.mxu0 %v2021
      %3349 = vmatmul.bf16.gmra.mxu0 %v377
      %v3350 = vpop.f32.mrf.mxu0
      %v3351 = vadd.f32 %v3337, %v3350
      %v3352 = vpop.f32.mrf.mxu0
      %v3353 = vadd.f32 %v3339, %v3352
      %3354 = vdwg.mxu0
      %3355 = vmatpush.bf16.msra.mxu0 %v2141
      %3356 = vmatpush.bf16.msra.mxu0 %v2133
      %3357 = vmatpush.bf16.msra.mxu0 %v2125
      %3358 = vmatpush.bf16.msra.mxu0 %v2117
      %3359 = vmatpush.bf16.msra.mxu0 %v2109
      %3360 = vmatpush.bf16.msra.mxu0 %v2101
      %3361 = vmatpush.bf16.msra.mxu0 %v2093
      %3362 = vmatpush.bf16.msra.mxu0 %v2085
      %3363 = vmatmul.bf16.gmra.mxu0 %v378
      %v3364 = vpop.f32.mrf.mxu0
      %v3365 = vadd.f32 %v3351, %v3364
      %v3366 = vpop.f32.mrf.mxu0
      %v3367 = vadd.f32 %v3353, %v3366
      %3368 = vdwg.mxu0
      %3369 = vmatpush.bf16.msra.mxu0 %v2205
      %3370 = vmatpush.bf16.msra.mxu0 %v2197
      %3371 = vmatpush.bf16.msra.mxu0 %v2189
      %3372 = vmatpush.bf16.msra.mxu0 %v2181
      %3373 = vmatpush.bf16.msra.mxu0 %v2173
      %3374 = vmatpush.bf16.msra.mxu0 %v2165
      %3375 = vmatpush.bf16.msra.mxu0 %v2157
      %3376 = vmatpush.bf16.msra.mxu0 %v2149
      %3377 = vmatmul.bf16.gmra.mxu0 %v379
      %v3378 = vpop.f32.mrf.mxu0
      %v3379 = vadd.f32 %v3365, %v3378
      %v3380 = vpop.f32.mrf.mxu0
      %v3381 = vadd.f32 %v3367, %v3380
      %3382 = vdwg.mxu0
      %3383 = vmatpush.bf16.msra.mxu0 %v2269
      %3384 = vmatpush.bf16.msra.mxu0 %v2261
      %3385 = vmatpush.bf16.msra.mxu0 %v2253
      %3386 = vmatpush.bf16.msra.mxu0 %v2245
      %3387 = vmatpush.bf16.msra.mxu0 %v2237
      %3388 = vmatpush.bf16.msra.mxu0 %v2229
      %3389 = vmatpush.bf16.msra.mxu0 %v2221
      %3390 = vmatpush.bf16.msra.mxu0 %v2213
      %3391 = vmatmul.bf16.gmra.mxu0 %v380
      %v3392 = vpop.f32.mrf.mxu0
      %v3393 = vadd.f32 %v3379, %v3392
      %v3394 = vpop.f32.mrf.mxu0
      %v3395 = vadd.f32 %v3381, %v3394
      %3396 = vdwg.mxu0
      %3397 = vmatpush.bf16.msra.mxu0 %v2333
      %3398 = vmatpush.bf16.msra.mxu0 %v2325
      %3399 = vmatpush.bf16.msra.mxu0 %v2317
      %3400 = vmatpush.bf16.msra.mxu0 %v2309
      %3401 = vmatpush.bf16.msra.mxu0 %v2301
      %3402 = vmatpush.bf16.msra.mxu0 %v2293
      %3403 = vmatpush.bf16.msra.mxu0 %v2285
      %3404 = vmatpush.bf16.msra.mxu0 %v2277
      %3405 = vmatmul.bf16.gmra.mxu0 %v381
      %v3406 = vpop.f32.mrf.mxu0
      %v3407 = vadd.f32 %v3393, %v3406
      %v3408 = vpop.f32.mrf.mxu0
      %v3409 = vadd.f32 %v3395, %v3408
      %3410 = vdwg.mxu0
      %3411 = vmatpush.bf16.msra.mxu0 0
      %3412 = vmatpush.bf16.msra.mxu0 0
      %3413 = vmatpush.bf16.msra.mxu0 0
      %3414 = vmatpush.bf16.msra.mxu0 0
      %3415 = vmatpush.bf16.msra.mxu0 0
      %3416 = vmatpush.bf16.msra.mxu0 0
      %3417 = vmatpush.bf16.msra.mxu0 0
      %3418 = vmatpush.bf16.msra.mxu0 %v2341
      %3419 = vmatmul.bf16.gmra.mxu0 %v2737
      %v3420 = vpop.f32.mrf.mxu0
      %v3421 = vadd.f32 %v3407, %v3420
      %v3422 = vpop.f32.mrf.mxu0
      %v3423 = vadd.f32 %v3409, %v3422
      %3424 = vdwg.mxu0
      %3425 = vmatpush.bf16.msra.mxu0 %v2014
      %3426 = vmatpush.bf16.msra.mxu0 %v2006
      %3427 = vmatpush.bf16.msra.mxu0 %v1998
      %3428 = vmatpush.bf16.msra.mxu0 %v1990
      %3429 = vmatpush.bf16.msra.mxu0 %v1982
      %3430 = vmatpush.bf16.msra.mxu0 %v1974
      %3431 = vmatpush.bf16.msra.mxu0 %v1966
      %3432 = vmatpush.bf16.msra.mxu0 %v1958
      %3433 = vmatmul.bf16.gmra.mxu0 %v376
      %v3434 = vpop.f32.mrf.mxu0
      %v3435 = vadd.f32 0.0, %v3434
      %v3436 = vpop.f32.mrf.mxu0
      %v3437 = vadd.f32 0.0, %v3436
      %3438 = vdwg.mxu0
      %3439 = vmatpush.bf16.msra.mxu0 %v2078
      %3440 = vmatpush.bf16.msra.mxu0 %v2070
      %3441 = vmatpush.bf16.msra.mxu0 %v2062
      %3442 = vmatpush.bf16.msra.mxu0 %v2054
      %3443 = vmatpush.bf16.msra.mxu0 %v2046
      %3444 = vmatpush.bf16.msra.mxu0 %v2038
      %3445 = vmatpush.bf16.msra.mxu0 %v2030
      %3446 = vmatpush.bf16.msra.mxu0 %v2022
      %3447 = vmatmul.bf16.gmra.mxu0 %v377
      %v3448 = vpop.f32.mrf.mxu0
      %v3449 = vadd.f32 %v3435, %v3448
      %v3450 = vpop.f32.mrf.mxu0
      %v3451 = vadd.f32 %v3437, %v3450
      %3452 = vdwg.mxu0
      %3453 = vmatpush.bf16.msra.mxu0 %v2142
      %3454 = vmatpush.bf16.msra.mxu0 %v2134
      %3455 = vmatpush.bf16.msra.mxu0 %v2126
      %3456 = vmatpush.bf16.msra.mxu0 %v2118
      %3457 = vmatpush.bf16.msra.mxu0 %v2110
      %3458 = vmatpush.bf16.msra.mxu0 %v2102
      %3459 = vmatpush.bf16.msra.mxu0 %v2094
      %3460 = vmatpush.bf16.msra.mxu0 %v2086
      %3461 = vmatmul.bf16.gmra.mxu0 %v378
      %v3462 = vpop.f32.mrf.mxu0
      %v3463 = vadd.f32 %v3449, %v3462
      %v3464 = vpop.f32.mrf.mxu0
      %v3465 = vadd.f32 %v3451, %v3464
      %3466 = vdwg.mxu0
      %3467 = vmatpush.bf16.msra.mxu0 %v2206
      %3468 = vmatpush.bf16.msra.mxu0 %v2198
      %3469 = vmatpush.bf16.msra.mxu0 %v2190
      %3470 = vmatpush.bf16.msra.mxu0 %v2182
      %3471 = vmatpush.bf16.msra.mxu0 %v2174
      %3472 = vmatpush.bf16.msra.mxu0 %v2166
      %3473 = vmatpush.bf16.msra.mxu0 %v2158
      %3474 = vmatpush.bf16.msra.mxu0 %v2150
      %3475 = vmatmul.bf16.gmra.mxu0 %v379
      %v3476 = vpop.f32.mrf.mxu0
      %v3477 = vadd.f32 %v3463, %v3476
      %v3478 = vpop.f32.mrf.mxu0
      %v3479 = vadd.f32 %v3465, %v3478
      %3480 = vdwg.mxu0
      %3481 = vmatpush.bf16.msra.mxu0 %v2270
      %3482 = vmatpush.bf16.msra.mxu0 %v2262
      %3483 = vmatpush.bf16.msra.mxu0 %v2254
      %3484 = vmatpush.bf16.msra.mxu0 %v2246
      %3485 = vmatpush.bf16.msra.mxu0 %v2238
      %3486 = vmatpush.bf16.msra.mxu0 %v2230
      %3487 = vmatpush.bf16.msra.mxu0 %v2222
      %3488 = vmatpush.bf16.msra.mxu0 %v2214
      %3489 = vmatmul.bf16.gmra.mxu0 %v380
      %v3490 = vpop.f32.mrf.mxu0
      %v3491 = vadd.f32 %v3477, %v3490
      %v3492 = vpop.f32.mrf.mxu0
      %v3493 = vadd.f32 %v3479, %v3492
      %3494 = vdwg.mxu0
      %3495 = vmatpush.bf16.msra.mxu0 %v2334
      %3496 = vmatpush.bf16.msra.mxu0 %v2326
      %3497 = vmatpush.bf16.msra.mxu0 %v2318
      %3498 = vmatpush.bf16.msra.mxu0 %v2310
      %3499 = vmatpush.bf16.msra.mxu0 %v2302
      %3500 = vmatpush.bf16.msra.mxu0 %v2294
      %3501 = vmatpush.bf16.msra.mxu0 %v2286
      %3502 = vmatpush.bf16.msra.mxu0 %v2278
      %3503 = vmatmul.bf16.gmra.mxu0 %v381
      %v3504 = vpop.f32.mrf.mxu0
      %v3505 = vadd.f32 %v3491, %v3504
      %v3506 = vpop.f32.mrf.mxu0
      %v3507 = vadd.f32 %v3493, %v3506
      %3508 = vdwg.mxu0
      %3509 = vmatpush.bf16.msra.mxu0 0
      %3510 = vmatpush.bf16.msra.mxu0 0
      %3511 = vmatpush.bf16.msra.mxu0 0
      %3512 = vmatpush.bf16.msra.mxu0 0
      %3513 = vmatpush.bf16.msra.mxu0 0
      %3514 = vmatpush.bf16.msra.mxu0 0
      %3515 = vmatpush.bf16.msra.mxu0 0
      %3516 = vmatpush.bf16.msra.mxu0 %v2342
      %3517 = vmatmul.bf16.gmra.mxu0 %v2737
      %v3518 = vpop.f32.mrf.mxu0
      %v3519 = vadd.f32 %v3505, %v3518
      %v3520 = vpop.f32.mrf.mxu0
      %v3521 = vadd.f32 %v3507, %v3520
      %3522 = vdwg.mxu0
      %v3523 = vpack.c.bf16 %v2931, %v2833
      %v3524 = vpack.c.bf16 %v3127, %v3029
      %v3525 = vpack.c.bf16 %v3323, %v3225
      %v3526 = vpack.c.bf16 %v3519, %v3421
      %v3527 = vpack.c.bf16 %v2933, %v2835
      %v3528 = vpack.c.bf16 %v3129, %v3031
      %v3529 = vpack.c.bf16 %v3325, %v3227
      %v3530 = vpack.c.bf16 %v3521, %v3423
      %v3531 = vld [vmem:[%s2] sm:$0xff]
      %3533 = vst [vmem:[#allocation1] ss:$9 sm:$0xff] %v3531
      %v3534 = vld [vmem:[#allocation1] sm:$0xff]
      %v3535 = vld [vmem:[#allocation1 + $0x9] sm:$0xff]
      %v3536 = vld [vmem:[#allocation1 + $0x12] sm:$0xff]
      %v3537 = vld [vmem:[#allocation1 + $0x1b] sm:$0xff]
      %v3538 = vld [vmem:[#allocation1 + $0x24] sm:$0xff]
      %v3539 = vld [vmem:[#allocation1 + $0x2d] sm:$0xff]
      %v3540 = vld [vmem:[#allocation1 + $0x36] sm:$0xff]
      %v3541 = vld [vmem:[#allocation1 + $0x3f] sm:$0xff]
      %v3542 = vpack.i.b16 %v3534, %v3534
      %v3544 = vperm.slane %v3542, 0
      %v3545 = vpack.i.b16 %v3535, %v3535
      %v3547 = vperm.slane %v3545, 0
      %v3548 = vpack.i.b16 %v3536, %v3536
      %v3550 = vperm.slane %v3548, 0
      %v3551 = vpack.i.b16 %v3537, %v3537
      %v3553 = vperm.slane %v3551, 0
      %v3554 = vpack.i.b16 %v3538, %v3538
      %v3556 = vperm.slane %v3554, 0
      %v3557 = vpack.i.b16 %v3539, %v3539
      %v3559 = vperm.slane %v3557, 0
      %v3560 = vpack.i.b16 %v3540, %v3540
      %v3562 = vperm.slane %v3560, 0
      %v3563 = vpack.i.b16 %v3541, %v3541
      %v3565 = vperm.slane %v3563, 0
      %v3566 = vunpack.c.l.bf16 %v3523
      %v3567 = vunpack.c.h.bf16 %v3523
      %v3568 = vunpack.c.l.bf16 %v3524
      %v3569 = vunpack.c.h.bf16 %v3524
      %v3570 = vunpack.c.l.bf16 %v3525
      %v3571 = vunpack.c.h.bf16 %v3525
      %v3572 = vunpack.c.l.bf16 %v3526
      %v3573 = vunpack.c.h.bf16 %v3526
      %v3574 = vunpack.c.l.bf16 %v3527
      %v3575 = vunpack.c.h.bf16 %v3527
      %v3576 = vunpack.c.l.bf16 %v3528
      %v3577 = vunpack.c.h.bf16 %v3528
      %v3578 = vunpack.c.l.bf16 %v3529
      %v3579 = vunpack.c.h.bf16 %v3529
      %v3580 = vunpack.c.l.bf16 %v3530
      %v3581 = vunpack.c.h.bf16 %v3530
      %v3582 = vunpack.c.l.bf16 %v3544
      %v3583 = vunpack.c.l.bf16 %v3547
      %v3584 = vunpack.c.l.bf16 %v3550
      %v3585 = vunpack.c.l.bf16 %v3553
      %v3586 = vunpack.c.l.bf16 %v3556
      %v3587 = vunpack.c.l.bf16 %v3559
      %v3588 = vunpack.c.l.bf16 %v3562
      %v3589 = vunpack.c.l.bf16 %v3565
      %v3590 = vadd.f32 %v3566, %v3582
      %v3591 = vadd.f32 %v3567, %v3583
      %v3592 = vadd.f32 %v3568, %v3584
      %v3593 = vadd.f32 %v3569, %v3585
      %v3594 = vadd.f32 %v3570, %v3586
      %v3595 = vadd.f32 %v3571, %v3587
      %v3596 = vadd.f32 %v3572, %v3588
      %v3597 = vadd.f32 %v3573, %v3589
      %v3598 = vadd.f32 %v3574, %v3582
      %v3599 = vadd.f32 %v3575, %v3583
      %v3600 = vadd.f32 %v3576, %v3584
      %v3601 = vadd.f32 %v3577, %v3585
      %v3602 = vadd.f32 %v3578, %v3586
      %v3603 = vadd.f32 %v3579, %v3587
      %v3604 = vadd.f32 %v3580, %v3588
      %v3605 = vadd.f32 %v3581, %v3589
      %v3606 = vpack.c.bf16 %v3591, %v3590
      %v3607 = vpack.c.bf16 %v3593, %v3592
      %v3608 = vpack.c.bf16 %v3595, %v3594
      %v3609 = vpack.c.bf16 %v3597, %v3596
      %v3610 = vpack.c.bf16 %v3599, %v3598
      %v3611 = vpack.c.bf16 %v3601, %v3600
      %v3612 = vpack.c.bf16 %v3603, %v3602
      %v3613 = vpack.c.bf16 %v3605, %v3604
      %v3614 = vunpack.c.l.bf16 %v3606
      %v3615 = vunpack.c.h.bf16 %v3606
      %v3616 = vunpack.c.l.bf16 %v3607
      %v3617 = vunpack.c.h.bf16 %v3607
      %v3618 = vunpack.c.l.bf16 %v3608
      %v3619 = vunpack.c.h.bf16 %v3608
      %v3620 = vunpack.c.l.bf16 %v3609
      %v3621 = vunpack.c.h.bf16 %v3609
      %v3622 = vunpack.c.l.bf16 %v3610
      %v3623 = vunpack.c.h.bf16 %v3610
      %v3624 = vunpack.c.l.bf16 %v3611
      %v3625 = vunpack.c.h.bf16 %v3611
      %v3626 = vunpack.c.l.bf16 %v3612
      %v3627 = vunpack.c.h.bf16 %v3612
      %v3628 = vunpack.c.l.bf16 %v3613
      %v3629 = vunpack.c.h.bf16 %v3613
      %v3630 = vmul.f32 %v3614, 0.20019531
      %v3631 = vmul.f32 %v3615, 0.20019531
      %v3632 = vmul.f32 %v3616, 0.20019531
      %v3633 = vmul.f32 %v3617, 0.20019531
      %v3634 = vmul.f32 %v3618, 0.20019531
      %v3635 = vmul.f32 %v3619, 0.20019531
      %v3636 = vmul.f32 %v3620, 0.20019531
      %v3637 = vmul.f32 %v3621, 0.20019531
      %v3638 = vmul.f32 %v3622, 0.20019531
      %v3639 = vmul.f32 %v3623, 0.20019531
      %v3640 = vmul.f32 %v3624, 0.20019531
      %v3641 = vmul.f32 %v3625, 0.20019531
      %v3642 = vmul.f32 %v3626, 0.20019531
      %v3643 = vmul.f32 %v3627, 0.20019531
      %v3644 = vmul.f32 %v3628, 0.20019531
      %v3645 = vmul.f32 %v3629, 0.20019531
      %v3646 = vpack.c.bf16 %v3631, %v3630
      %v3647 = vpack.c.bf16 %v3633, %v3632
      %v3648 = vpack.c.bf16 %v3635, %v3634
      %v3649 = vpack.c.bf16 %v3637, %v3636
      %v3650 = vpack.c.bf16 %v3639, %v3638
      %v3651 = vpack.c.bf16 %v3641, %v3640
      %v3652 = vpack.c.bf16 %v3643, %v3642
      %v3653 = vpack.c.bf16 %v3645, %v3644
      %v3654 = vunpack.c.l.bf16 %v3646
      %v3655 = vunpack.c.h.bf16 %v3646
      %v3656 = vunpack.c.l.bf16 %v3647
      %v3657 = vunpack.c.h.bf16 %v3647
      %v3658 = vunpack.c.l.bf16 %v3648
      %v3659 = vunpack.c.h.bf16 %v3648
      %v3660 = vunpack.c.l.bf16 %v3649
      %v3661 = vunpack.c.h.bf16 %v3649
      %v3662 = vunpack.c.l.bf16 %v3650
      %v3663 = vunpack.c.h.bf16 %v3650
      %v3664 = vunpack.c.l.bf16 %v3651
      %v3665 = vunpack.c.h.bf16 %v3651
      %v3666 = vunpack.c.l.bf16 %v3652
      %v3667 = vunpack.c.h.bf16 %v3652
      %v3668 = vunpack.c.l.bf16 %v3653
      %v3669 = vunpack.c.h.bf16 %v3653
      %v3670 = vmax.f32 %v3614, %v3654
      %v3671 = vmax.f32 %v3615, %v3655
      %v3672 = vmax.f32 %v3616, %v3656
      %v3673 = vmax.f32 %v3617, %v3657
      %v3674 = vmax.f32 %v3618, %v3658
      %v3675 = vmax.f32 %v3619, %v3659
      %v3676 = vmax.f32 %v3620, %v3660
      %v3677 = vmax.f32 %v3621, %v3661
      %v3678 = vmax.f32 %v3622, %v3662
      %v3679 = vmax.f32 %v3623, %v3663
      %v3680 = vmax.f32 %v3624, %v3664
      %v3681 = vmax.f32 %v3625, %v3665
      %v3682 = vmax.f32 %v3626, %v3666
      %v3683 = vmax.f32 %v3627, %v3667
      %v3684 = vmax.f32 %v3628, %v3668
      %v3685 = vmax.f32 %v3629, %v3669
      %v3686 = vpack.c.bf16 %v3678, %v3670
      %v3687 = vpack.c.bf16 %v3679, %v3671
      %v3688 = vpack.c.bf16 %v3680, %v3672
      %v3689 = vpack.c.bf16 %v3681, %v3673
      %v3690 = vpack.c.bf16 %v3682, %v3674
      %v3691 = vpack.c.bf16 %v3683, %v3675
      %v3692 = vpack.c.bf16 %v3684, %v3676
      %v3693 = vpack.c.bf16 %v3685, %v3677
      %v3694 = vld [vmem:[%s3] sm:$0xff]
      %v3695 = vld [vmem:[%s3 + $0x8] sm:$0xff]
      %v3696 = vld [vmem:[%s3 + $0x10] sm:$0xff]
      %v3697 = vld [vmem:[%s3 + $0x18] sm:$0xff]
      %v3698 = vld [vmem:[%s3 + $0x20] sm:$0xff]
      %v3699 = vld [vmem:[%s3 + $0x28] sm:$0xff]
      %v3700 = vld [vmem:[%s3 + $0x30] sm:$0xff]
      %v3701 = vld [vmem:[%s3 + $0x38] sm:$0xff]
      %v3702 = vld [vmem:[%s3 + $0x40] sm:$0xff]
      %v3703 = vld [vmem:[%s3 + $0x48] sm:$0xff]
      %v3704 = vld [vmem:[%s3 + $0x50] sm:$0xff]
      %v3705 = vld [vmem:[%s3 + $0x58] sm:$0xff]
      %v3706 = vld [vmem:[%s3 + $0x60] sm:$0xff]
      %v3707 = vld [vmem:[%s3 + $0x68] sm:$0xff]
      %v3708 = vld [vmem:[%s3 + $0x70] sm:$0xff]
      %v3709 = vld [vmem:[%s3 + $0x78] sm:$0xff]
      %v3710 = vld [vmem:[%s3 + $0x80] sm:$0xff]
      %v3711 = vld [vmem:[%s3 + $0x88] sm:$0xff]
      %v3712 = vld [vmem:[%s3 + $0x90] sm:$0xff]
      %v3713 = vld [vmem:[%s3 + $0x98] sm:$0xff]
      %v3714 = vld [vmem:[%s3 + $0xa0] sm:$0xff]
      %v3715 = vld [vmem:[%s3 + $0xa8] sm:$0xff]
      %v3716 = vld [vmem:[%s3 + $0xb0] sm:$0xff]
      %v3717 = vld [vmem:[%s3 + $0xb8] sm:$0xff]
      %v3718 = vld [vmem:[%s3 + $0xc0] sm:$0xff]
      %v3719 = vld [vmem:[%s3 + $0xc8] sm:$0xff]
      %v3720 = vld [vmem:[%s3 + $0xd0] sm:$0xff]
      %v3721 = vld [vmem:[%s3 + $0xd8] sm:$0xff]
      %v3722 = vld [vmem:[%s3 + $0xe0] sm:$0xff]
      %v3723 = vld [vmem:[%s3 + $0xe8] sm:$0xff]
      %v3724 = vld [vmem:[%s3 + $0xf0] sm:$0xff]
      %v3725 = vld [vmem:[%s3 + $0xf8] sm:$0xff]
      %v3726 = vld [vmem:[%s3 + $0x100] sm:$0xff]
      %v3727 = vld [vmem:[%s3 + $0x108] sm:$0xff]
      %v3728 = vld [vmem:[%s3 + $0x110] sm:$0xff]
      %v3729 = vld [vmem:[%s3 + $0x118] sm:$0xff]
      %v3730 = vld [vmem:[%s3 + $0x120] sm:$0xff]
      %v3731 = vld [vmem:[%s3 + $0x128] sm:$0xff]
      %v3732 = vld [vmem:[%s3 + $0x130] sm:$0xff]
      %v3733 = vld [vmem:[%s3 + $0x138] sm:$0xff]
      %v3734 = vld [vmem:[%s3 + $0x140] sm:$0xff]
      %v3735 = vld [vmem:[%s3 + $0x148] sm:$0xff]
      %v3736 = vld [vmem:[%s3 + $0x150] sm:$0xff]
      %v3737 = vld [vmem:[%s3 + $0x158] sm:$0xff]
      %v3738 = vld [vmem:[%s3 + $0x160] sm:$0xff]
      %v3739 = vld [vmem:[%s3 + $0x168] sm:$0xff]
      %v3740 = vld [vmem:[%s3 + $0x170] sm:$0xff]
      %v3741 = vld [vmem:[%s3 + $0x178] sm:$0xff]
      %v3742 = vld [vmem:[%s3 + $0x180] sm:$0xff]
      %v3743 = vld [vmem:[%s3 + $0x188] sm:$0xff]
      %v3744 = vld [vmem:[%s3 + $0x190] sm:$0xff]
      %v3745 = vld [vmem:[%s3 + $0x198] sm:$0xff]
      %v3746 = vld [vmem:[%s3 + $0x1a0] sm:$0xff]
      %v3747 = vld [vmem:[%s3 + $0x1a8] sm:$0xff]
      %v3748 = vld [vmem:[%s3 + $0x1b0] sm:$0xff]
      %v3749 = vld [vmem:[%s3 + $0x1b8] sm:$0xff]
      %v3750 = vld [vmem:[%s3 + $0x1c0] sm:$0xff]
      %v3751 = vld [vmem:[%s3 + $0x1c8] sm:$0xff]
      %v3752 = vld [vmem:[%s3 + $0x1d0] sm:$0xff]
      %v3753 = vld [vmem:[%s3 + $0x1d8] sm:$0xff]
      %v3754 = vld [vmem:[%s3 + $0x1e0] sm:$0xff]
      %v3755 = vld [vmem:[%s3 + $0x1e8] sm:$0xff]
      %v3756 = vld [vmem:[%s3 + $0x1f0] sm:$0xff]
      %v3757 = vld [vmem:[%s3 + $0x1f8] sm:$0xff]
      %v3758 = vld [vmem:[%s3 + $0x200] sm:$0xff]
      %v3759 = vld [vmem:[%s3 + $0x208] sm:$0xff]
      %v3760 = vld [vmem:[%s3 + $0x210] sm:$0xff]
      %v3761 = vld [vmem:[%s3 + $0x218] sm:$0xff]
      %v3762 = vld [vmem:[%s3 + $0x220] sm:$0xff]
      %v3763 = vld [vmem:[%s3 + $0x228] sm:$0xff]
      %v3764 = vld [vmem:[%s3 + $0x230] sm:$0xff]
      %v3765 = vld [vmem:[%s3 + $0x238] sm:$0xff]
      %v3766 = vld [vmem:[%s3 + $0x240] sm:$0xff]
      %v3767 = vld [vmem:[%s3 + $0x248] sm:$0xff]
      %v3768 = vld [vmem:[%s3 + $0x250] sm:$0xff]
      %v3769 = vld [vmem:[%s3 + $0x258] sm:$0xff]
      %v3770 = vld [vmem:[%s3 + $0x260] sm:$0xff]
      %v3771 = vld [vmem:[%s3 + $0x268] sm:$0xff]
      %v3772 = vld [vmem:[%s3 + $0x270] sm:$0xff]
      %v3773 = vld [vmem:[%s3 + $0x278] sm:$0xff]
      %v3774 = vld [vmem:[%s3 + $0x280] sm:$0xff]
      %v3775 = vld [vmem:[%s3 + $0x288] sm:$0xff]
      %v3776 = vld [vmem:[%s3 + $0x290] sm:$0xff]
      %v3777 = vld [vmem:[%s3 + $0x298] sm:$0xff]
      %v3778 = vld [vmem:[%s3 + $0x2a0] sm:$0xff]
      %v3779 = vld [vmem:[%s3 + $0x2a8] sm:$0xff]
      %v3780 = vld [vmem:[%s3 + $0x2b0] sm:$0xff]
      %v3781 = vld [vmem:[%s3 + $0x2b8] sm:$0xff]
      %v3782 = vld [vmem:[%s3 + $0x2c0] sm:$0xff]
      %v3783 = vld [vmem:[%s3 + $0x2c8] sm:$0xff]
      %v3784 = vld [vmem:[%s3 + $0x2d0] sm:$0xff]
      %v3785 = vld [vmem:[%s3 + $0x2d8] sm:$0xff]
      %v3786 = vld [vmem:[%s3 + $0x2e0] sm:$0xff]
      %v3787 = vld [vmem:[%s3 + $0x2e8] sm:$0xff]
      %v3788 = vld [vmem:[%s3 + $0x2f0] sm:$0xff]
      %v3789 = vld [vmem:[%s3 + $0x2f8] sm:$0xff]
      %v3790 = vld [vmem:[%s3 + $0x300] sm:$0xff]
      %v3791 = vld [vmem:[%s3 + $0x308] sm:$0xff]
      %v3792 = vld [vmem:[%s3 + $0x310] sm:$0xff]
      %v3793 = vld [vmem:[%s3 + $0x318] sm:$0xff]
      %v3794 = vld [vmem:[%s3 + $0x320] sm:$0xff]
      %v3795 = vld [vmem:[%s3 + $0x328] sm:$0xff]
      %v3796 = vld [vmem:[%s3 + $0x330] sm:$0xff]
      %v3797 = vld [vmem:[%s3 + $0x338] sm:$0xff]
      %v3798 = vld [vmem:[%s3 + $0x340] sm:$0xff]
      %v3799 = vld [vmem:[%s3 + $0x348] sm:$0xff]
      %v3800 = vld [vmem:[%s3 + $0x350] sm:$0xff]
      %v3801 = vld [vmem:[%s3 + $0x358] sm:$0xff]
      %v3802 = vld [vmem:[%s3 + $0x360] sm:$0xff]
      %v3803 = vld [vmem:[%s3 + $0x368] sm:$0xff]
      %v3804 = vld [vmem:[%s3 + $0x370] sm:$0xff]
      %v3805 = vld [vmem:[%s3 + $0x378] sm:$0xff]
      %v3806 = vld [vmem:[%s3 + $0x380] sm:$0xff]
      %v3807 = vld [vmem:[%s3 + $0x388] sm:$0xff]
      %v3808 = vld [vmem:[%s3 + $0x390] sm:$0xff]
      %v3809 = vld [vmem:[%s3 + $0x398] sm:$0xff]
      %v3810 = vld [vmem:[%s3 + $0x3a0] sm:$0xff]
      %v3811 = vld [vmem:[%s3 + $0x3a8] sm:$0xff]
      %v3812 = vld [vmem:[%s3 + $0x3b0] sm:$0xff]
      %v3813 = vld [vmem:[%s3 + $0x3b8] sm:$0xff]
      %v3814 = vld [vmem:[%s3 + $0x3c0] sm:$0xff]
      %v3815 = vld [vmem:[%s3 + $0x3c8] sm:$0xff]
      %v3816 = vld [vmem:[%s3 + $0x3d0] sm:$0xff]
      %v3817 = vld [vmem:[%s3 + $0x3d8] sm:$0xff]
      %v3818 = vld [vmem:[%s3 + $0x3e0] sm:$0xff]
      %v3819 = vld [vmem:[%s3 + $0x3e8] sm:$0xff]
      %v3820 = vld [vmem:[%s3 + $0x3f0] sm:$0xff]
      %v3821 = vld [vmem:[%s3 + $0x3f8] sm:$0xff]
      %v3822 = vld [vmem:[%s3 + $0x400] sm:$0xff]
      %v3823 = vld [vmem:[%s3 + $0x408] sm:$0xff]
      %v3824 = vld [vmem:[%s3 + $0x410] sm:$0xff]
      %v3825 = vld [vmem:[%s3 + $0x418] sm:$0xff]
      %v3826 = vld [vmem:[%s3 + $0x420] sm:$0xff]
      %v3827 = vld [vmem:[%s3 + $0x428] sm:$0xff]
      %v3828 = vld [vmem:[%s3 + $0x430] sm:$0xff]
      %v3829 = vld [vmem:[%s3 + $0x438] sm:$0xff]
      %v3830 = vld [vmem:[%s3 + $0x440] sm:$0xff]
      %v3831 = vld [vmem:[%s3 + $0x448] sm:$0xff]
      %v3832 = vld [vmem:[%s3 + $0x450] sm:$0xff]
      %v3833 = vld [vmem:[%s3 + $0x458] sm:$0xff]
      %v3834 = vld [vmem:[%s3 + $0x460] sm:$0xff]
      %v3835 = vld [vmem:[%s3 + $0x468] sm:$0xff]
      %v3836 = vld [vmem:[%s3 + $0x470] sm:$0xff]
      %v3837 = vld [vmem:[%s3 + $0x478] sm:$0xff]
      %v3838 = vld [vmem:[%s3 + $0x480] sm:$0xff]
      %v3839 = vld [vmem:[%s3 + $0x488] sm:$0xff]
      %v3840 = vld [vmem:[%s3 + $0x490] sm:$0xff]
      %v3841 = vld [vmem:[%s3 + $0x498] sm:$0xff]
      %v3842 = vld [vmem:[%s3 + $0x4a0] sm:$0xff]
      %v3843 = vld [vmem:[%s3 + $0x4a8] sm:$0xff]
      %v3844 = vld [vmem:[%s3 + $0x4b0] sm:$0xff]
      %v3845 = vld [vmem:[%s3 + $0x4b8] sm:$0xff]
      %v3846 = vld [vmem:[%s3 + $0x4c0] sm:$0xff]
      %v3847 = vld [vmem:[%s3 + $0x4c8] sm:$0xff]
      %v3848 = vld [vmem:[%s3 + $0x4d0] sm:$0xff]
      %v3849 = vld [vmem:[%s3 + $0x4d8] sm:$0xff]
      %v3850 = vld [vmem:[%s3 + $0x4e0] sm:$0xff]
      %v3851 = vld [vmem:[%s3 + $0x4e8] sm:$0xff]
      %v3852 = vld [vmem:[%s3 + $0x4f0] sm:$0xff]
      %v3853 = vld [vmem:[%s3 + $0x4f8] sm:$0xff]
      %v3854 = vld [vmem:[%s3 + $0x500] sm:$0xff]
      %v3855 = vld [vmem:[%s3 + $0x508] sm:$0xff]
      %v3856 = vld [vmem:[%s3 + $0x510] sm:$0xff]
      %v3857 = vld [vmem:[%s3 + $0x518] sm:$0xff]
      %v3858 = vld [vmem:[%s3 + $0x520] sm:$0xff]
      %v3859 = vld [vmem:[%s3 + $0x528] sm:$0xff]
      %v3860 = vld [vmem:[%s3 + $0x530] sm:$0xff]
      %v3861 = vld [vmem:[%s3 + $0x538] sm:$0xff]
      %v3862 = vld [vmem:[%s3 + $0x540] sm:$0xff]
      %v3863 = vld [vmem:[%s3 + $0x548] sm:$0xff]
      %v3864 = vld [vmem:[%s3 + $0x550] sm:$0xff]
      %v3865 = vld [vmem:[%s3 + $0x558] sm:$0xff]
      %v3866 = vld [vmem:[%s3 + $0x560] sm:$0xff]
      %v3867 = vld [vmem:[%s3 + $0x568] sm:$0xff]
      %v3868 = vld [vmem:[%s3 + $0x570] sm:$0xff]
      %v3869 = vld [vmem:[%s3 + $0x578] sm:$0xff]
      %v3870 = vld [vmem:[%s3 + $0x580] sm:$0xff]
      %v3871 = vld [vmem:[%s3 + $0x588] sm:$0xff]
      %v3872 = vld [vmem:[%s3 + $0x590] sm:$0xff]
      %v3873 = vld [vmem:[%s3 + $0x598] sm:$0xff]
      %v3874 = vld [vmem:[%s3 + $0x5a0] sm:$0xff]
      %v3875 = vld [vmem:[%s3 + $0x5a8] sm:$0xff]
      %v3876 = vld [vmem:[%s3 + $0x5b0] sm:$0xff]
      %v3877 = vld [vmem:[%s3 + $0x5b8] sm:$0xff]
      %v3878 = vld [vmem:[%s3 + $0x5c0] sm:$0xff]
      %v3879 = vld [vmem:[%s3 + $0x5c8] sm:$0xff]
      %v3880 = vld [vmem:[%s3 + $0x5d0] sm:$0xff]
      %v3881 = vld [vmem:[%s3 + $0x5d8] sm:$0xff]
      %v3882 = vld [vmem:[%s3 + $0x5e0] sm:$0xff]
      %v3883 = vld [vmem:[%s3 + $0x5e8] sm:$0xff]
      %v3884 = vld [vmem:[%s3 + $0x5f0] sm:$0xff]
      %v3885 = vld [vmem:[%s3 + $0x5f8] sm:$0xff]
      %v3886 = vld [vmem:[%s3 + $0x600] sm:$0xff]
      %v3887 = vld [vmem:[%s3 + $0x608] sm:$0xff]
      %v3888 = vld [vmem:[%s3 + $0x610] sm:$0xff]
      %v3889 = vld [vmem:[%s3 + $0x618] sm:$0xff]
      %v3890 = vld [vmem:[%s3 + $0x620] sm:$0xff]
      %v3891 = vld [vmem:[%s3 + $0x628] sm:$0xff]
      %v3892 = vld [vmem:[%s3 + $0x630] sm:$0xff]
      %v3893 = vld [vmem:[%s3 + $0x638] sm:$0xff]
      %v3894 = vld [vmem:[%s3 + $0x640] sm:$0xff]
      %v3895 = vld [vmem:[%s3 + $0x648] sm:$0xff]
      %v3896 = vld [vmem:[%s3 + $0x650] sm:$0xff]
      %v3897 = vld [vmem:[%s3 + $0x658] sm:$0xff]
      %v3898 = vld [vmem:[%s3 + $0x660] sm:$0xff]
      %v3899 = vld [vmem:[%s3 + $0x668] sm:$0xff]
      %v3900 = vld [vmem:[%s3 + $0x670] sm:$0xff]
      %v3901 = vld [vmem:[%s3 + $0x678] sm:$0xff]
      %v3902 = vld [vmem:[%s3 + $0x680] sm:$0xff]
      %v3903 = vld [vmem:[%s3 + $0x688] sm:$0xff]
      %v3904 = vld [vmem:[%s3 + $0x690] sm:$0xff]
      %v3905 = vld [vmem:[%s3 + $0x698] sm:$0xff]
      %v3906 = vld [vmem:[%s3 + $0x6a0] sm:$0xff]
      %v3907 = vld [vmem:[%s3 + $0x6a8] sm:$0xff]
      %v3908 = vld [vmem:[%s3 + $0x6b0] sm:$0xff]
      %v3909 = vld [vmem:[%s3 + $0x6b8] sm:$0xff]
      %v3910 = vld [vmem:[%s3 + $0x6c0] sm:$0xff]
      %v3911 = vld [vmem:[%s3 + $0x6c8] sm:$0xff]
      %v3912 = vld [vmem:[%s3 + $0x6d0] sm:$0xff]
      %v3913 = vld [vmem:[%s3 + $0x6d8] sm:$0xff]
      %v3914 = vld [vmem:[%s3 + $0x6e0] sm:$0xff]
      %v3915 = vld [vmem:[%s3 + $0x6e8] sm:$0xff]
      %v3916 = vld [vmem:[%s3 + $0x6f0] sm:$0xff]
      %v3917 = vld [vmem:[%s3 + $0x6f8] sm:$0xff]
      %v3918 = vld [vmem:[%s3 + $0x700] sm:$0xff]
      %v3919 = vld [vmem:[%s3 + $0x708] sm:$0xff]
      %v3920 = vld [vmem:[%s3 + $0x710] sm:$0xff]
      %v3921 = vld [vmem:[%s3 + $0x718] sm:$0xff]
      %v3922 = vld [vmem:[%s3 + $0x720] sm:$0xff]
      %v3923 = vld [vmem:[%s3 + $0x728] sm:$0xff]
      %v3924 = vld [vmem:[%s3 + $0x730] sm:$0xff]
      %v3925 = vld [vmem:[%s3 + $0x738] sm:$0xff]
      %v3926 = vld [vmem:[%s3 + $0x740] sm:$0xff]
      %v3927 = vld [vmem:[%s3 + $0x748] sm:$0xff]
      %v3928 = vld [vmem:[%s3 + $0x750] sm:$0xff]
      %v3929 = vld [vmem:[%s3 + $0x758] sm:$0xff]
      %v3930 = vld [vmem:[%s3 + $0x760] sm:$0xff]
      %v3931 = vld [vmem:[%s3 + $0x768] sm:$0xff]
      %v3932 = vld [vmem:[%s3 + $0x770] sm:$0xff]
      %v3933 = vld [vmem:[%s3 + $0x778] sm:$0xff]
      %v3934 = vld [vmem:[%s3 + $0x780] sm:$0xff]
      %v3935 = vld [vmem:[%s3 + $0x788] sm:$0xff]
      %v3936 = vld [vmem:[%s3 + $0x790] sm:$0xff]
      %v3937 = vld [vmem:[%s3 + $0x798] sm:$0xff]
      %v3938 = vld [vmem:[%s3 + $0x7a0] sm:$0xff]
      %v3939 = vld [vmem:[%s3 + $0x7a8] sm:$0xff]
      %v3940 = vld [vmem:[%s3 + $0x7b0] sm:$0xff]
      %v3941 = vld [vmem:[%s3 + $0x7b8] sm:$0xff]
      %v3942 = vld [vmem:[%s3 + $0x7c0] sm:$0xff]
      %v3943 = vld [vmem:[%s3 + $0x7c8] sm:$0xff]
      %v3944 = vld [vmem:[%s3 + $0x7d0] sm:$0xff]
      %v3945 = vld [vmem:[%s3 + $0x7d8] sm:$0xff]
      %v3946 = vld [vmem:[%s3 + $0x7e0] sm:$0xff]
      %v3947 = vld [vmem:[%s3 + $0x7e8] sm:$0xff]
      %v3948 = vld [vmem:[%s3 + $0x7f0] sm:$0xff]
      %v3949 = vld [vmem:[%s3 + $0x7f8] sm:$0xff]
      %v4206 = vunpack.c.l.b16 %v3694
      %v4207 = vunpack.c.h.b16 %v3694
      %v4208 = vunpack.c.l.b16 %v3695
      %v4209 = vunpack.c.h.b16 %v3695
      %v4210 = vunpack.c.l.b16 %v3696
      %v4211 = vunpack.c.h.b16 %v3696
      %v4212 = vunpack.c.l.b16 %v3697
      %v4213 = vunpack.c.h.b16 %v3697
      %v4214 = vunpack.c.l.b16 %v3698
      %v4215 = vunpack.c.h.b16 %v3698
      %v4216 = vunpack.c.l.b16 %v3699
      %v4217 = vunpack.c.h.b16 %v3699
      %v4218 = vunpack.c.l.b16 %v3700
      %v4219 = vunpack.c.h.b16 %v3700
      %v4220 = vunpack.c.l.b16 %v3701
      %v4221 = vunpack.c.h.b16 %v3701
      %v4222 = vunpack.c.l.b16 %v3702
      %v4223 = vunpack.c.h.b16 %v3702
      %v4224 = vunpack.c.l.b16 %v3703
      %v4225 = vunpack.c.h.b16 %v3703
      %v4226 = vunpack.c.l.b16 %v3704
      %v4227 = vunpack.c.h.b16 %v3704
      %v4228 = vunpack.c.l.b16 %v3705
      %v4229 = vunpack.c.h.b16 %v3705
      %v4230 = vunpack.c.l.b16 %v3706
      %v4231 = vunpack.c.h.b16 %v3706
      %v4232 = vunpack.c.l.b16 %v3707
      %v4233 = vunpack.c.h.b16 %v3707
      %v4234 = vunpack.c.l.b16 %v3708
      %v4235 = vunpack.c.h.b16 %v3708
      %v4236 = vunpack.c.l.b16 %v3709
      %v4237 = vunpack.c.h.b16 %v3709
      %v4238 = vunpack.c.l.b16 %v3710
      %v4239 = vunpack.c.h.b16 %v3710
      %v4240 = vunpack.c.l.b16 %v3711
      %v4241 = vunpack.c.h.b16 %v3711
      %v4242 = vunpack.c.l.b16 %v3712
      %v4243 = vunpack.c.h.b16 %v3712
      %v4244 = vunpack.c.l.b16 %v3713
      %v4245 = vunpack.c.h.b16 %v3713
      %v4246 = vunpack.c.l.b16 %v3714
      %v4247 = vunpack.c.h.b16 %v3714
      %v4248 = vunpack.c.l.b16 %v3715
      %v4249 = vunpack.c.h.b16 %v3715
      %v4250 = vunpack.c.l.b16 %v3716
      %v4251 = vunpack.c.h.b16 %v3716
      %v4252 = vunpack.c.l.b16 %v3717
      %v4253 = vunpack.c.h.b16 %v3717
      %v4254 = vunpack.c.l.b16 %v3718
      %v4255 = vunpack.c.h.b16 %v3718
      %v4256 = vunpack.c.l.b16 %v3719
      %v4257 = vunpack.c.h.b16 %v3719
      %v4258 = vunpack.c.l.b16 %v3720
      %v4259 = vunpack.c.h.b16 %v3720
      %v4260 = vunpack.c.l.b16 %v3721
      %v4261 = vunpack.c.h.b16 %v3721
      %v4262 = vunpack.c.l.b16 %v3722
      %v4263 = vunpack.c.h.b16 %v3722
      %v4264 = vunpack.c.l.b16 %v3723
      %v4265 = vunpack.c.h.b16 %v3723
      %v4266 = vunpack.c.l.b16 %v3724
      %v4267 = vunpack.c.h.b16 %v3724
      %v4268 = vunpack.c.l.b16 %v3725
      %v4269 = vunpack.c.h.b16 %v3725
      %v4270 = vunpack.c.l.b16 %v3726
      %v4271 = vunpack.c.h.b16 %v3726
      %v4272 = vunpack.c.l.b16 %v3727
      %v4273 = vunpack.c.h.b16 %v3727
      %v4274 = vunpack.c.l.b16 %v3728
      %v4275 = vunpack.c.h.b16 %v3728
      %v4276 = vunpack.c.l.b16 %v3729
      %v4277 = vunpack.c.h.b16 %v3729
      %v4278 = vunpack.c.l.b16 %v3730
      %v4279 = vunpack.c.h.b16 %v3730
      %v4280 = vunpack.c.l.b16 %v3731
      %v4281 = vunpack.c.h.b16 %v3731
      %v4282 = vunpack.c.l.b16 %v3732
      %v4283 = vunpack.c.h.b16 %v3732
      %v4284 = vunpack.c.l.b16 %v3733
      %v4285 = vunpack.c.h.b16 %v3733
      %v4286 = vunpack.c.l.b16 %v3734
      %v4287 = vunpack.c.h.b16 %v3734
      %v4288 = vunpack.c.l.b16 %v3735
      %v4289 = vunpack.c.h.b16 %v3735
      %v4290 = vunpack.c.l.b16 %v3736
      %v4291 = vunpack.c.h.b16 %v3736
      %v4292 = vunpack.c.l.b16 %v3737
      %v4293 = vunpack.c.h.b16 %v3737
      %v4294 = vunpack.c.l.b16 %v3738
      %v4295 = vunpack.c.h.b16 %v3738
      %v4296 = vunpack.c.l.b16 %v3739
      %v4297 = vunpack.c.h.b16 %v3739
      %v4298 = vunpack.c.l.b16 %v3740
      %v4299 = vunpack.c.h.b16 %v3740
      %v4300 = vunpack.c.l.b16 %v3741
      %v4301 = vunpack.c.h.b16 %v3741
      %v4302 = vunpack.c.l.b16 %v3742
      %v4303 = vunpack.c.h.b16 %v3742
      %v4304 = vunpack.c.l.b16 %v3743
      %v4305 = vunpack.c.h.b16 %v3743
      %v4306 = vunpack.c.l.b16 %v3744
      %v4307 = vunpack.c.h.b16 %v3744
      %v4308 = vunpack.c.l.b16 %v3745
      %v4309 = vunpack.c.h.b16 %v3745
      %v4310 = vunpack.c.l.b16 %v3746
      %v4311 = vunpack.c.h.b16 %v3746
      %v4312 = vunpack.c.l.b16 %v3747
      %v4313 = vunpack.c.h.b16 %v3747
      %v4314 = vunpack.c.l.b16 %v3748
      %v4315 = vunpack.c.h.b16 %v3748
      %v4316 = vunpack.c.l.b16 %v3749
      %v4317 = vunpack.c.h.b16 %v3749
      %v4318 = vunpack.c.l.b16 %v3750
      %v4319 = vunpack.c.h.b16 %v3750
      %v4320 = vunpack.c.l.b16 %v3751
      %v4321 = vunpack.c.h.b16 %v3751
      %v4322 = vunpack.c.l.b16 %v3752
      %v4323 = vunpack.c.h.b16 %v3752
      %v4324 = vunpack.c.l.b16 %v3753
      %v4325 = vunpack.c.h.b16 %v3753
      %v4326 = vunpack.c.l.b16 %v3754
      %v4327 = vunpack.c.h.b16 %v3754
      %v4328 = vunpack.c.l.b16 %v3755
      %v4329 = vunpack.c.h.b16 %v3755
      %v4330 = vunpack.c.l.b16 %v3756
      %v4331 = vunpack.c.h.b16 %v3756
      %v4332 = vunpack.c.l.b16 %v3757
      %v4333 = vunpack.c.h.b16 %v3757
      %v4334 = vunpack.c.l.b16 %v3758
      %v4335 = vunpack.c.h.b16 %v3758
      %v4336 = vunpack.c.l.b16 %v3759
      %v4337 = vunpack.c.h.b16 %v3759
      %v4338 = vunpack.c.l.b16 %v3760
      %v4339 = vunpack.c.h.b16 %v3760
      %v4340 = vunpack.c.l.b16 %v3761
      %v4341 = vunpack.c.h.b16 %v3761
      %v4342 = vunpack.c.l.b16 %v3762
      %v4343 = vunpack.c.h.b16 %v3762
      %v4344 = vunpack.c.l.b16 %v3763
      %v4345 = vunpack.c.h.b16 %v3763
      %v4346 = vunpack.c.l.b16 %v3764
      %v4347 = vunpack.c.h.b16 %v3764
      %v4348 = vunpack.c.l.b16 %v3765
      %v4349 = vunpack.c.h.b16 %v3765
      %v4350 = vunpack.c.l.b16 %v3766
      %v4351 = vunpack.c.h.b16 %v3766
      %v4352 = vunpack.c.l.b16 %v3767
      %v4353 = vunpack.c.h.b16 %v3767
      %v4354 = vunpack.c.l.b16 %v3768
      %v4355 = vunpack.c.h.b16 %v3768
      %v4356 = vunpack.c.l.b16 %v3769
      %v4357 = vunpack.c.h.b16 %v3769
      %v4358 = vunpack.c.l.b16 %v3770
      %v4359 = vunpack.c.h.b16 %v3770
      %v4360 = vunpack.c.l.b16 %v3771
      %v4361 = vunpack.c.h.b16 %v3771
      %v4362 = vunpack.c.l.b16 %v3772
      %v4363 = vunpack.c.h.b16 %v3772
      %v4364 = vunpack.c.l.b16 %v3773
      %v4365 = vunpack.c.h.b16 %v3773
      %v4366 = vunpack.c.l.b16 %v3774
      %v4367 = vunpack.c.h.b16 %v3774
      %v4368 = vunpack.c.l.b16 %v3775
      %v4369 = vunpack.c.h.b16 %v3775
      %v4370 = vunpack.c.l.b16 %v3776
      %v4371 = vunpack.c.h.b16 %v3776
      %v4372 = vunpack.c.l.b16 %v3777
      %v4373 = vunpack.c.h.b16 %v3777
      %v4374 = vunpack.c.l.b16 %v3778
      %v4375 = vunpack.c.h.b16 %v3778
      %v4376 = vunpack.c.l.b16 %v3779
      %v4377 = vunpack.c.h.b16 %v3779
      %v4378 = vunpack.c.l.b16 %v3780
      %v4379 = vunpack.c.h.b16 %v3780
      %v4380 = vunpack.c.l.b16 %v3781
      %v4381 = vunpack.c.h.b16 %v3781
      %v4382 = vunpack.c.l.b16 %v3782
      %v4383 = vunpack.c.h.b16 %v3782
      %v4384 = vunpack.c.l.b16 %v3783
      %v4385 = vunpack.c.h.b16 %v3783
      %v4386 = vunpack.c.l.b16 %v3784
      %v4387 = vunpack.c.h.b16 %v3784
      %v4388 = vunpack.c.l.b16 %v3785
      %v4389 = vunpack.c.h.b16 %v3785
      %v4390 = vunpack.c.l.b16 %v3786
      %v4391 = vunpack.c.h.b16 %v3786
      %v4392 = vunpack.c.l.b16 %v3787
      %v4393 = vunpack.c.h.b16 %v3787
      %v4394 = vunpack.c.l.b16 %v3788
      %v4395 = vunpack.c.h.b16 %v3788
      %v4396 = vunpack.c.l.b16 %v3789
      %v4397 = vunpack.c.h.b16 %v3789
      %v4398 = vunpack.c.l.b16 %v3790
      %v4399 = vunpack.c.h.b16 %v3790
      %v4400 = vunpack.c.l.b16 %v3791
      %v4401 = vunpack.c.h.b16 %v3791
      %v4402 = vunpack.c.l.b16 %v3792
      %v4403 = vunpack.c.h.b16 %v3792
      %v4404 = vunpack.c.l.b16 %v3793
      %v4405 = vunpack.c.h.b16 %v3793
      %v4406 = vunpack.c.l.b16 %v3794
      %v4407 = vunpack.c.h.b16 %v3794
      %v4408 = vunpack.c.l.b16 %v3795
      %v4409 = vunpack.c.h.b16 %v3795
      %v4410 = vunpack.c.l.b16 %v3796
      %v4411 = vunpack.c.h.b16 %v3796
      %v4412 = vunpack.c.l.b16 %v3797
      %v4413 = vunpack.c.h.b16 %v3797
      %v4414 = vunpack.c.l.b16 %v3798
      %v4415 = vunpack.c.h.b16 %v3798
      %v4416 = vunpack.c.l.b16 %v3799
      %v4417 = vunpack.c.h.b16 %v3799
      %v4418 = vunpack.c.l.b16 %v3800
      %v4419 = vunpack.c.h.b16 %v3800
      %v4420 = vunpack.c.l.b16 %v3801
      %v4421 = vunpack.c.h.b16 %v3801
      %v4422 = vunpack.c.l.b16 %v3802
      %v4423 = vunpack.c.h.b16 %v3802
      %v4424 = vunpack.c.l.b16 %v3803
      %v4425 = vunpack.c.h.b16 %v3803
      %v4426 = vunpack.c.l.b16 %v3804
      %v4427 = vunpack.c.h.b16 %v3804
      %v4428 = vunpack.c.l.b16 %v3805
      %v4429 = vunpack.c.h.b16 %v3805
      %v4430 = vunpack.c.l.b16 %v3806
      %v4431 = vunpack.c.h.b16 %v3806
      %v4432 = vunpack.c.l.b16 %v3807
      %v4433 = vunpack.c.h.b16 %v3807
      %v4434 = vunpack.c.l.b16 %v3808
      %v4435 = vunpack.c.h.b16 %v3808
      %v4436 = vunpack.c.l.b16 %v3809
      %v4437 = vunpack.c.h.b16 %v3809
      %v4438 = vunpack.c.l.b16 %v3810
      %v4439 = vunpack.c.h.b16 %v3810
      %v4440 = vunpack.c.l.b16 %v3811
      %v4441 = vunpack.c.h.b16 %v3811
      %v4442 = vunpack.c.l.b16 %v3812
      %v4443 = vunpack.c.h.b16 %v3812
      %v4444 = vunpack.c.l.b16 %v3813
      %v4445 = vunpack.c.h.b16 %v3813
      %v4446 = vunpack.c.l.b16 %v3814
      %v4447 = vunpack.c.h.b16 %v3814
      %v4448 = vunpack.c.l.b16 %v3815
      %v4449 = vunpack.c.h.b16 %v3815
      %v4450 = vunpack.c.l.b16 %v3816
      %v4451 = vunpack.c.h.b16 %v3816
      %v4452 = vunpack.c.l.b16 %v3817
      %v4453 = vunpack.c.h.b16 %v3817
      %v4454 = vunpack.c.l.b16 %v3818
      %v4455 = vunpack.c.h.b16 %v3818
      %v4456 = vunpack.c.l.b16 %v3819
      %v4457 = vunpack.c.h.b16 %v3819
      %v4458 = vunpack.c.l.b16 %v3820
      %v4459 = vunpack.c.h.b16 %v3820
      %v4460 = vunpack.c.l.b16 %v3821
      %v4461 = vunpack.c.h.b16 %v3821
      %v4462 = vunpack.c.l.b16 %v3822
      %v4463 = vunpack.c.h.b16 %v3822
      %v4464 = vunpack.c.l.b16 %v3823
      %v4465 = vunpack.c.h.b16 %v3823
      %v4466 = vunpack.c.l.b16 %v3824
      %v4467 = vunpack.c.h.b16 %v3824
      %v4468 = vunpack.c.l.b16 %v3825
      %v4469 = vunpack.c.h.b16 %v3825
      %v4470 = vunpack.c.l.b16 %v3826
      %v4471 = vunpack.c.h.b16 %v3826
      %v4472 = vunpack.c.l.b16 %v3827
      %v4473 = vunpack.c.h.b16 %v3827
      %v4474 = vunpack.c.l.b16 %v3828
      %v4475 = vunpack.c.h.b16 %v3828
      %v4476 = vunpack.c.l.b16 %v3829
      %v4477 = vunpack.c.h.b16 %v3829
      %v4478 = vunpack.c.l.b16 %v3830
      %v4479 = vunpack.c.h.b16 %v3830
      %v4480 = vunpack.c.l.b16 %v3831
      %v4481 = vunpack.c.h.b16 %v3831
      %v4482 = vunpack.c.l.b16 %v3832
      %v4483 = vunpack.c.h.b16 %v3832
      %v4484 = vunpack.c.l.b16 %v3833
      %v4485 = vunpack.c.h.b16 %v3833
      %v4486 = vunpack.c.l.b16 %v3834
      %v4487 = vunpack.c.h.b16 %v3834
      %v4488 = vunpack.c.l.b16 %v3835
      %v4489 = vunpack.c.h.b16 %v3835
      %v4490 = vunpack.c.l.b16 %v3836
      %v4491 = vunpack.c.h.b16 %v3836
      %v4492 = vunpack.c.l.b16 %v3837
      %v4493 = vunpack.c.h.b16 %v3837
      %v4494 = vunpack.c.l.b16 %v3838
      %v4495 = vunpack.c.h.b16 %v3838
      %v4496 = vunpack.c.l.b16 %v3839
      %v4497 = vunpack.c.h.b16 %v3839
      %v4498 = vunpack.c.l.b16 %v3840
      %v4499 = vunpack.c.h.b16 %v3840
      %v4500 = vunpack.c.l.b16 %v3841
      %v4501 = vunpack.c.h.b16 %v3841
      %v4502 = vunpack.c.l.b16 %v3842
      %v4503 = vunpack.c.h.b16 %v3842
      %v4504 = vunpack.c.l.b16 %v3843
      %v4505 = vunpack.c.h.b16 %v3843
      %v4506 = vunpack.c.l.b16 %v3844
      %v4507 = vunpack.c.h.b16 %v3844
      %v4508 = vunpack.c.l.b16 %v3845
      %v4509 = vunpack.c.h.b16 %v3845
      %v4510 = vunpack.c.l.b16 %v3846
      %v4511 = vunpack.c.h.b16 %v3846
      %v4512 = vunpack.c.l.b16 %v3847
      %v4513 = vunpack.c.h.b16 %v3847
      %v4514 = vunpack.c.l.b16 %v3848
      %v4515 = vunpack.c.h.b16 %v3848
      %v4516 = vunpack.c.l.b16 %v3849
      %v4517 = vunpack.c.h.b16 %v3849
      %v4518 = vunpack.c.l.b16 %v3850
      %v4519 = vunpack.c.h.b16 %v3850
      %v4520 = vunpack.c.l.b16 %v3851
      %v4521 = vunpack.c.h.b16 %v3851
      %v4522 = vunpack.c.l.b16 %v3852
      %v4523 = vunpack.c.h.b16 %v3852
      %v4524 = vunpack.c.l.b16 %v3853
      %v4525 = vunpack.c.h.b16 %v3853
      %v4526 = vunpack.c.l.b16 %v3854
      %v4527 = vunpack.c.h.b16 %v3854
      %v4528 = vunpack.c.l.b16 %v3855
      %v4529 = vunpack.c.h.b16 %v3855
      %v4530 = vunpack.c.l.b16 %v3856
      %v4531 = vunpack.c.h.b16 %v3856
      %v4532 = vunpack.c.l.b16 %v3857
      %v4533 = vunpack.c.h.b16 %v3857
      %v4534 = vunpack.c.l.b16 %v3858
      %v4535 = vunpack.c.h.b16 %v3858
      %v4536 = vunpack.c.l.b16 %v3859
      %v4537 = vunpack.c.h.b16 %v3859
      %v4538 = vunpack.c.l.b16 %v3860
      %v4539 = vunpack.c.h.b16 %v3860
      %v4540 = vunpack.c.l.b16 %v3861
      %v4541 = vunpack.c.h.b16 %v3861
      %v4542 = vunpack.c.l.b16 %v3862
      %v4543 = vunpack.c.h.b16 %v3862
      %v4544 = vunpack.c.l.b16 %v3863
      %v4545 = vunpack.c.h.b16 %v3863
      %v4546 = vunpack.c.l.b16 %v3864
      %v4547 = vunpack.c.h.b16 %v3864
      %v4548 = vunpack.c.l.b16 %v3865
      %v4549 = vunpack.c.h.b16 %v3865
      %v4550 = vunpack.c.l.b16 %v3866
      %v4551 = vunpack.c.h.b16 %v3866
      %v4552 = vunpack.c.l.b16 %v3867
      %v4553 = vunpack.c.h.b16 %v3867
      %v4554 = vunpack.c.l.b16 %v3868
      %v4555 = vunpack.c.h.b16 %v3868
      %v4556 = vunpack.c.l.b16 %v3869
      %v4557 = vunpack.c.h.b16 %v3869
      %v4558 = vunpack.c.l.b16 %v3870
      %v4559 = vunpack.c.h.b16 %v3870
      %v4560 = vunpack.c.l.b16 %v3871
      %v4561 = vunpack.c.h.b16 %v3871
      %v4562 = vunpack.c.l.b16 %v3872
      %v4563 = vunpack.c.h.b16 %v3872
      %v4564 = vunpack.c.l.b16 %v3873
      %v4565 = vunpack.c.h.b16 %v3873
      %v4566 = vunpack.c.l.b16 %v3874
      %v4567 = vunpack.c.h.b16 %v3874
      %v4568 = vunpack.c.l.b16 %v3875
      %v4569 = vunpack.c.h.b16 %v3875
      %v4570 = vunpack.c.l.b16 %v3876
      %v4571 = vunpack.c.h.b16 %v3876
      %v4572 = vunpack.c.l.b16 %v3877
      %v4573 = vunpack.c.h.b16 %v3877
      %v4574 = vunpack.c.l.b16 %v3878
      %v4575 = vunpack.c.h.b16 %v3878
      %v4576 = vunpack.c.l.b16 %v3879
      %v4577 = vunpack.c.h.b16 %v3879
      %v4578 = vunpack.c.l.b16 %v3880
      %v4579 = vunpack.c.h.b16 %v3880
      %v4580 = vunpack.c.l.b16 %v3881
      %v4581 = vunpack.c.h.b16 %v3881
      %v4582 = vunpack.c.l.b16 %v3882
      %v4583 = vunpack.c.h.b16 %v3882
      %v4584 = vunpack.c.l.b16 %v3883
      %v4585 = vunpack.c.h.b16 %v3883
      %v4586 = vunpack.c.l.b16 %v3884
      %v4587 = vunpack.c.h.b16 %v3884
      %v4588 = vunpack.c.l.b16 %v3885
      %v4589 = vunpack.c.h.b16 %v3885
      %v4590 = vunpack.c.l.b16 %v3886
      %v4591 = vunpack.c.h.b16 %v3886
      %v4592 = vunpack.c.l.b16 %v3887
      %v4593 = vunpack.c.h.b16 %v3887
      %v4594 = vunpack.c.l.b16 %v3888
      %v4595 = vunpack.c.h.b16 %v3888
      %v4596 = vunpack.c.l.b16 %v3889
      %v4597 = vunpack.c.h.b16 %v3889
      %v4598 = vunpack.c.l.b16 %v3890
      %v4599 = vunpack.c.h.b16 %v3890
      %v4600 = vunpack.c.l.b16 %v3891
      %v4601 = vunpack.c.h.b16 %v3891
      %v4602 = vunpack.c.l.b16 %v3892
      %v4603 = vunpack.c.h.b16 %v3892
      %v4604 = vunpack.c.l.b16 %v3893
      %v4605 = vunpack.c.h.b16 %v3893
      %v4606 = vunpack.c.l.b16 %v3894
      %v4607 = vunpack.c.h.b16 %v3894
      %v4608 = vunpack.c.l.b16 %v3895
      %v4609 = vunpack.c.h.b16 %v3895
      %v4610 = vunpack.c.l.b16 %v3896
      %v4611 = vunpack.c.h.b16 %v3896
      %v4612 = vunpack.c.l.b16 %v3897
      %v4613 = vunpack.c.h.b16 %v3897
      %v4614 = vunpack.c.l.b16 %v3898
      %v4615 = vunpack.c.h.b16 %v3898
      %v4616 = vunpack.c.l.b16 %v3899
      %v4617 = vunpack.c.h.b16 %v3899
      %v4618 = vunpack.c.l.b16 %v3900
      %v4619 = vunpack.c.h.b16 %v3900
      %v4620 = vunpack.c.l.b16 %v3901
      %v4621 = vunpack.c.h.b16 %v3901
      %v4622 = vunpack.c.l.b16 %v3902
      %v4623 = vunpack.c.h.b16 %v3902
      %v4624 = vunpack.c.l.b16 %v3903
      %v4625 = vunpack.c.h.b16 %v3903
      %v4626 = vunpack.c.l.b16 %v3904
      %v4627 = vunpack.c.h.b16 %v3904
      %v4628 = vunpack.c.l.b16 %v3905
      %v4629 = vunpack.c.h.b16 %v3905
      %v4630 = vunpack.c.l.b16 %v3906
      %v4631 = vunpack.c.h.b16 %v3906
      %v4632 = vunpack.c.l.b16 %v3907
      %v4633 = vunpack.c.h.b16 %v3907
      %v4634 = vunpack.c.l.b16 %v3908
      %v4635 = vunpack.c.h.b16 %v3908
      %v4636 = vunpack.c.l.b16 %v3909
      %v4637 = vunpack.c.h.b16 %v3909
      %v4638 = vunpack.c.l.b16 %v3910
      %v4639 = vunpack.c.h.b16 %v3910
      %v4640 = vunpack.c.l.b16 %v3911
      %v4641 = vunpack.c.h.b16 %v3911
      %v4642 = vunpack.c.l.b16 %v3912
      %v4643 = vunpack.c.h.b16 %v3912
      %v4644 = vunpack.c.l.b16 %v3913
      %v4645 = vunpack.c.h.b16 %v3913
      %v4646 = vunpack.c.l.b16 %v3914
      %v4647 = vunpack.c.h.b16 %v3914
      %v4648 = vunpack.c.l.b16 %v3915
      %v4649 = vunpack.c.h.b16 %v3915
      %v4650 = vunpack.c.l.b16 %v3916
      %v4651 = vunpack.c.h.b16 %v3916
      %v4652 = vunpack.c.l.b16 %v3917
      %v4653 = vunpack.c.h.b16 %v3917
      %v4654 = vunpack.c.l.b16 %v3918
      %v4655 = vunpack.c.h.b16 %v3918
      %v4656 = vunpack.c.l.b16 %v3919
      %v4657 = vunpack.c.h.b16 %v3919
      %v4658 = vunpack.c.l.b16 %v3920
      %v4659 = vunpack.c.h.b16 %v3920
      %v4660 = vunpack.c.l.b16 %v3921
      %v4661 = vunpack.c.h.b16 %v3921
      %v4662 = vunpack.c.l.b16 %v3922
      %v4663 = vunpack.c.h.b16 %v3922
      %v4664 = vunpack.c.l.b16 %v3923
      %v4665 = vunpack.c.h.b16 %v3923
      %v4666 = vunpack.c.l.b16 %v3924
      %v4667 = vunpack.c.h.b16 %v3924
      %v4668 = vunpack.c.l.b16 %v3925
      %v4669 = vunpack.c.h.b16 %v3925
      %v4670 = vunpack.c.l.b16 %v3926
      %v4671 = vunpack.c.h.b16 %v3926
      %v4672 = vunpack.c.l.b16 %v3927
      %v4673 = vunpack.c.h.b16 %v3927
      %v4674 = vunpack.c.l.b16 %v3928
      %v4675 = vunpack.c.h.b16 %v3928
      %v4676 = vunpack.c.l.b16 %v3929
      %v4677 = vunpack.c.h.b16 %v3929
      %v4678 = vunpack.c.l.b16 %v3930
      %v4679 = vunpack.c.h.b16 %v3930
      %v4680 = vunpack.c.l.b16 %v3931
      %v4681 = vunpack.c.h.b16 %v3931
      %v4682 = vunpack.c.l.b16 %v3932
      %v4683 = vunpack.c.h.b16 %v3932
      %v4684 = vunpack.c.l.b16 %v3933
      %v4685 = vunpack.c.h.b16 %v3933
      %v4686 = vunpack.c.l.b16 %v3934
      %v4687 = vunpack.c.h.b16 %v3934
      %v4688 = vunpack.c.l.b16 %v3935
      %v4689 = vunpack.c.h.b16 %v3935
      %v4690 = vunpack.c.l.b16 %v3936
      %v4691 = vunpack.c.h.b16 %v3936
      %v4692 = vunpack.c.l.b16 %v3937
      %v4693 = vunpack.c.h.b16 %v3937
      %v4694 = vunpack.c.l.b16 %v3938
      %v4695 = vunpack.c.h.b16 %v3938
      %v4696 = vunpack.c.l.b16 %v3939
      %v4697 = vunpack.c.h.b16 %v3939
      %v4698 = vunpack.c.l.b16 %v3940
      %v4699 = vunpack.c.h.b16 %v3940
      %v4700 = vunpack.c.l.b16 %v3941
      %v4701 = vunpack.c.h.b16 %v3941
      %v4702 = vunpack.c.l.b16 %v3942
      %v4703 = vunpack.c.h.b16 %v3942
      %v4704 = vunpack.c.l.b16 %v3943
      %v4705 = vunpack.c.h.b16 %v3943
      %v4706 = vunpack.c.l.b16 %v3944
      %v4707 = vunpack.c.h.b16 %v3944
      %v4708 = vunpack.c.l.b16 %v3945
      %v4709 = vunpack.c.h.b16 %v3945
      %v4710 = vunpack.c.l.b16 %v3946
      %v4711 = vunpack.c.h.b16 %v3946
      %v4712 = vunpack.c.l.b16 %v3947
      %v4713 = vunpack.c.h.b16 %v3947
      %v4714 = vunpack.c.l.b16 %v3948
      %v4715 = vunpack.c.h.b16 %v3948
      %v4716 = vunpack.c.l.b16 %v3949
      %v4717 = vunpack.c.h.b16 %v3949
      %v4718 = vpack.c.b16 %v4210, %v4206
      %v4719 = vpack.c.b16 %v4211, %v4207
      %v4720 = vpack.c.b16 %v4212, %v4208
      %v4721 = vpack.c.b16 %v4213, %v4209
      %v4722 = vpack.c.b16 %v4218, %v4214
      %v4723 = vpack.c.b16 %v4219, %v4215
      %v4724 = vpack.c.b16 %v4220, %v4216
      %v4725 = vpack.c.b16 %v4221, %v4217
      %v4726 = vpack.c.b16 %v4226, %v4222
      %v4727 = vpack.c.b16 %v4227, %v4223
      %v4728 = vpack.c.b16 %v4228, %v4224
      %v4729 = vpack.c.b16 %v4229, %v4225
      %v4730 = vpack.c.b16 %v4234, %v4230
      %v4731 = vpack.c.b16 %v4235, %v4231
      %v4732 = vpack.c.b16 %v4236, %v4232
      %v4733 = vpack.c.b16 %v4237, %v4233
      %v4734 = vpack.c.b16 %v4242, %v4238
      %v4735 = vpack.c.b16 %v4243, %v4239
      %v4736 = vpack.c.b16 %v4244, %v4240
      %v4737 = vpack.c.b16 %v4245, %v4241
      %v4738 = vpack.c.b16 %v4250, %v4246
      %v4739 = vpack.c.b16 %v4251, %v4247
      %v4740 = vpack.c.b16 %v4252, %v4248
      %v4741 = vpack.c.b16 %v4253, %v4249
      %v4742 = vpack.c.b16 %v4258, %v4254
      %v4743 = vpack.c.b16 %v4259, %v4255
      %v4744 = vpack.c.b16 %v4260, %v4256
      %v4745 = vpack.c.b16 %v4261, %v4257
      %v4746 = vpack.c.b16 %v4266, %v4262
      %v4747 = vpack.c.b16 %v4267, %v4263
      %v4748 = vpack.c.b16 %v4268, %v4264
      %v4749 = vpack.c.b16 %v4269, %v4265
      %v4750 = vpack.c.b16 %v4274, %v4270
      %v4751 = vpack.c.b16 %v4275, %v4271
      %v4752 = vpack.c.b16 %v4276, %v4272
      %v4753 = vpack.c.b16 %v4277, %v4273
      %v4754 = vpack.c.b16 %v4282, %v4278
      %v4755 = vpack.c.b16 %v4283, %v4279
      %v4756 = vpack.c.b16 %v4284, %v4280
      %v4757 = vpack.c.b16 %v4285, %v4281
      %v4758 = vpack.c.b16 %v4290, %v4286
      %v4759 = vpack.c.b16 %v4291, %v4287
      %v4760 = vpack.c.b16 %v4292, %v4288
      %v4761 = vpack.c.b16 %v4293, %v4289
      %v4762 = vpack.c.b16 %v4298, %v4294
      %v4763 = vpack.c.b16 %v4299, %v4295
      %v4764 = vpack.c.b16 %v4300, %v4296
      %v4765 = vpack.c.b16 %v4301, %v4297
      %v4766 = vpack.c.b16 %v4306, %v4302
      %v4767 = vpack.c.b16 %v4307, %v4303
      %v4768 = vpack.c.b16 %v4308, %v4304
      %v4769 = vpack.c.b16 %v4309, %v4305
      %v4770 = vpack.c.b16 %v4314, %v4310
      %v4771 = vpack.c.b16 %v4315, %v4311
      %v4772 = vpack.c.b16 %v4316, %v4312
      %v4773 = vpack.c.b16 %v4317, %v4313
      %v4774 = vpack.c.b16 %v4322, %v4318
      %v4775 = vpack.c.b16 %v4323, %v4319
      %v4776 = vpack.c.b16 %v4324, %v4320
      %v4777 = vpack.c.b16 %v4325, %v4321
      %v4778 = vpack.c.b16 %v4330, %v4326
      %v4779 = vpack.c.b16 %v4331, %v4327
      %v4780 = vpack.c.b16 %v4332, %v4328
      %v4781 = vpack.c.b16 %v4333, %v4329
      %v4782 = vpack.c.b16 %v4338, %v4334
      %v4783 = vpack.c.b16 %v4339, %v4335
      %v4784 = vpack.c.b16 %v4340, %v4336
      %v4785 = vpack.c.b16 %v4341, %v4337
      %v4786 = vpack.c.b16 %v4346, %v4342
      %v4787 = vpack.c.b16 %v4347, %v4343
      %v4788 = vpack.c.b16 %v4348, %v4344
      %v4789 = vpack.c.b16 %v4349, %v4345
      %v4790 = vpack.c.b16 %v4354, %v4350
      %v4791 = vpack.c.b16 %v4355, %v4351
      %v4792 = vpack.c.b16 %v4356, %v4352
      %v4793 = vpack.c.b16 %v4357, %v4353
      %v4794 = vpack.c.b16 %v4362, %v4358
      %v4795 = vpack.c.b16 %v4363, %v4359
      %v4796 = vpack.c.b16 %v4364, %v4360
      %v4797 = vpack.c.b16 %v4365, %v4361
      %v4798 = vpack.c.b16 %v4370, %v4366
      %v4799 = vpack.c.b16 %v4371, %v4367
      %v4800 = vpack.c.b16 %v4372, %v4368
      %v4801 = vpack.c.b16 %v4373, %v4369
      %v4802 = vpack.c.b16 %v4378, %v4374
      %v4803 = vpack.c.b16 %v4379, %v4375
      %v4804 = vpack.c.b16 %v4380, %v4376
      %v4805 = vpack.c.b16 %v4381, %v4377
      %v4806 = vpack.c.b16 %v4386, %v4382
      %v4807 = vpack.c.b16 %v4387, %v4383
      %v4808 = vpack.c.b16 %v4388, %v4384
      %v4809 = vpack.c.b16 %v4389, %v4385
      %v4810 = vpack.c.b16 %v4394, %v4390
      %v4811 = vpack.c.b16 %v4395, %v4391
      %v4812 = vpack.c.b16 %v4396, %v4392
      %v4813 = vpack.c.b16 %v4397, %v4393
      %v4814 = vpack.c.b16 %v4402, %v4398
      %v4815 = vpack.c.b16 %v4403, %v4399
      %v4816 = vpack.c.b16 %v4404, %v4400
      %v4817 = vpack.c.b16 %v4405, %v4401
      %v4818 = vpack.c.b16 %v4410, %v4406
      %v4819 = vpack.c.b16 %v4411, %v4407
      %v4820 = vpack.c.b16 %v4412, %v4408
      %v4821 = vpack.c.b16 %v4413, %v4409
      %v4822 = vpack.c.b16 %v4418, %v4414
      %v4823 = vpack.c.b16 %v4419, %v4415
      %v4824 = vpack.c.b16 %v4420, %v4416
      %v4825 = vpack.c.b16 %v4421, %v4417
      %v4826 = vpack.c.b16 %v4426, %v4422
      %v4827 = vpack.c.b16 %v4427, %v4423
      %v4828 = vpack.c.b16 %v4428, %v4424
      %v4829 = vpack.c.b16 %v4429, %v4425
      %v4830 = vpack.c.b16 %v4434, %v4430
      %v4831 = vpack.c.b16 %v4435, %v4431
      %v4832 = vpack.c.b16 %v4436, %v4432
      %v4833 = vpack.c.b16 %v4437, %v4433
      %v4834 = vpack.c.b16 %v4442, %v4438
      %v4835 = vpack.c.b16 %v4443, %v4439
      %v4836 = vpack.c.b16 %v4444, %v4440
      %v4837 = vpack.c.b16 %v4445, %v4441
      %v4838 = vpack.c.b16 %v4450, %v4446
      %v4839 = vpack.c.b16 %v4451, %v4447
      %v4840 = vpack.c.b16 %v4452, %v4448
      %v4841 = vpack.c.b16 %v4453, %v4449
      %v4842 = vpack.c.b16 %v4458, %v4454
      %v4843 = vpack.c.b16 %v4459, %v4455
      %v4844 = vpack.c.b16 %v4460, %v4456
      %v4845 = vpack.c.b16 %v4461, %v4457
      %v4846 = vpack.c.b16 %v4466, %v4462
      %v4847 = vpack.c.b16 %v4467, %v4463
      %v4848 = vpack.c.b16 %v4468, %v4464
      %v4849 = vpack.c.b16 %v4469, %v4465
      %v4850 = vpack.c.b16 %v4474, %v4470
      %v4851 = vpack.c.b16 %v4475, %v4471
      %v4852 = vpack.c.b16 %v4476, %v4472
      %v4853 = vpack.c.b16 %v4477, %v4473
      %v4854 = vpack.c.b16 %v4482, %v4478
      %v4855 = vpack.c.b16 %v4483, %v4479
      %v4856 = vpack.c.b16 %v4484, %v4480
      %v4857 = vpack.c.b16 %v4485, %v4481
      %v4858 = vpack.c.b16 %v4490, %v4486
      %v4859 = vpack.c.b16 %v4491, %v4487
      %v4860 = vpack.c.b16 %v4492, %v4488
      %v4861 = vpack.c.b16 %v4493, %v4489
      %v4862 = vpack.c.b16 %v4498, %v4494
      %v4863 = vpack.c.b16 %v4499, %v4495
      %v4864 = vpack.c.b16 %v4500, %v4496
      %v4865 = vpack.c.b16 %v4501, %v4497
      %v4866 = vpack.c.b16 %v4506, %v4502
      %v4867 = vpack.c.b16 %v4507, %v4503
      %v4868 = vpack.c.b16 %v4508, %v4504
      %v4869 = vpack.c.b16 %v4509, %v4505
      %v4870 = vpack.c.b16 %v4514, %v4510
      %v4871 = vpack.c.b16 %v4515, %v4511
      %v4872 = vpack.c.b16 %v4516, %v4512
      %v4873 = vpack.c.b16 %v4517, %v4513
      %v4874 = vpack.c.b16 %v4522, %v4518
      %v4875 = vpack.c.b16 %v4523, %v4519
      %v4876 = vpack.c.b16 %v4524, %v4520
      %v4877 = vpack.c.b16 %v4525, %v4521
      %v4878 = vpack.c.b16 %v4530, %v4526
      %v4879 = vpack.c.b16 %v4531, %v4527
      %v4880 = vpack.c.b16 %v4532, %v4528
      %v4881 = vpack.c.b16 %v4533, %v4529
      %v4882 = vpack.c.b16 %v4538, %v4534
      %v4883 = vpack.c.b16 %v4539, %v4535
      %v4884 = vpack.c.b16 %v4540, %v4536
      %v4885 = vpack.c.b16 %v4541, %v4537
      %v4886 = vpack.c.b16 %v4546, %v4542
      %v4887 = vpack.c.b16 %v4547, %v4543
      %v4888 = vpack.c.b16 %v4548, %v4544
      %v4889 = vpack.c.b16 %v4549, %v4545
      %v4890 = vpack.c.b16 %v4554, %v4550
      %v4891 = vpack.c.b16 %v4555, %v4551
      %v4892 = vpack.c.b16 %v4556, %v4552
      %v4893 = vpack.c.b16 %v4557, %v4553
      %v4894 = vpack.c.b16 %v4562, %v4558
      %v4895 = vpack.c.b16 %v4563, %v4559
      %v4896 = vpack.c.b16 %v4564, %v4560
      %v4897 = vpack.c.b16 %v4565, %v4561
      %v4898 = vpack.c.b16 %v4570, %v4566
      %v4899 = vpack.c.b16 %v4571, %v4567
      %v4900 = vpack.c.b16 %v4572, %v4568
      %v4901 = vpack.c.b16 %v4573, %v4569
      %v4902 = vpack.c.b16 %v4578, %v4574
      %v4903 = vpack.c.b16 %v4579, %v4575
      %v4904 = vpack.c.b16 %v4580, %v4576
      %v4905 = vpack.c.b16 %v4581, %v4577
      %v4906 = vpack.c.b16 %v4586, %v4582
      %v4907 = vpack.c.b16 %v4587, %v4583
      %v4908 = vpack.c.b16 %v4588, %v4584
      %v4909 = vpack.c.b16 %v4589, %v4585
      %v4910 = vpack.c.b16 %v4594, %v4590
      %v4911 = vpack.c.b16 %v4595, %v4591
      %v4912 = vpack.c.b16 %v4596, %v4592
      %v4913 = vpack.c.b16 %v4597, %v4593
      %v4914 = vpack.c.b16 %v4602, %v4598
      %v4915 = vpack.c.b16 %v4603, %v4599
      %v4916 = vpack.c.b16 %v4604, %v4600
      %v4917 = vpack.c.b16 %v4605, %v4601
      %v4918 = vpack.c.b16 %v4610, %v4606
      %v4919 = vpack.c.b16 %v4611, %v4607
      %v4920 = vpack.c.b16 %v4612, %v4608
      %v4921 = vpack.c.b16 %v4613, %v4609
      %v4922 = vpack.c.b16 %v4618, %v4614
      %v4923 = vpack.c.b16 %v4619, %v4615
      %v4924 = vpack.c.b16 %v4620, %v4616
      %v4925 = vpack.c.b16 %v4621, %v4617
      %v4926 = vpack.c.b16 %v4626, %v4622
      %v4927 = vpack.c.b16 %v4627, %v4623
      %v4928 = vpack.c.b16 %v4628, %v4624
      %v4929 = vpack.c.b16 %v4629, %v4625
      %v4930 = vpack.c.b16 %v4634, %v4630
      %v4931 = vpack.c.b16 %v4635, %v4631
      %v4932 = vpack.c.b16 %v4636, %v4632
      %v4933 = vpack.c.b16 %v4637, %v4633
      %v4934 = vpack.c.b16 %v4642, %v4638
      %v4935 = vpack.c.b16 %v4643, %v4639
      %v4936 = vpack.c.b16 %v4644, %v4640
      %v4937 = vpack.c.b16 %v4645, %v4641
      %v4938 = vpack.c.b16 %v4650, %v4646
      %v4939 = vpack.c.b16 %v4651, %v4647
      %v4940 = vpack.c.b16 %v4652, %v4648
      %v4941 = vpack.c.b16 %v4653, %v4649
      %v4942 = vpack.c.b16 %v4658, %v4654
      %v4943 = vpack.c.b16 %v4659, %v4655
      %v4944 = vpack.c.b16 %v4660, %v4656
      %v4945 = vpack.c.b16 %v4661, %v4657
      %v4946 = vpack.c.b16 %v4666, %v4662
      %v4947 = vpack.c.b16 %v4667, %v4663
      %v4948 = vpack.c.b16 %v4668, %v4664
      %v4949 = vpack.c.b16 %v4669, %v4665
      %v4950 = vpack.c.b16 %v4674, %v4670
      %v4951 = vpack.c.b16 %v4675, %v4671
      %v4952 = vpack.c.b16 %v4676, %v4672
      %v4953 = vpack.c.b16 %v4677, %v4673
      %v4954 = vpack.c.b16 %v4682, %v4678
      %v4955 = vpack.c.b16 %v4683, %v4679
      %v4956 = vpack.c.b16 %v4684, %v4680
      %v4957 = vpack.c.b16 %v4685, %v4681
      %v4958 = vpack.c.b16 %v4690, %v4686
      %v4959 = vpack.c.b16 %v4691, %v4687
      %v4960 = vpack.c.b16 %v4692, %v4688
      %v4961 = vpack.c.b16 %v4693, %v4689
      %v4962 = vpack.c.b16 %v4698, %v4694
      %v4963 = vpack.c.b16 %v4699, %v4695
      %v4964 = vpack.c.b16 %v4700, %v4696
      %v4965 = vpack.c.b16 %v4701, %v4697
      %v4966 = vpack.c.b16 %v4706, %v4702
      %v4967 = vpack.c.b16 %v4707, %v4703
      %v4968 = vpack.c.b16 %v4708, %v4704
      %v4969 = vpack.c.b16 %v4709, %v4705
      %v4970 = vpack.c.b16 %v4714, %v4710
      %v4971 = vpack.c.b16 %v4715, %v4711
      %v4972 = vpack.c.b16 %v4716, %v4712
      %v4973 = vpack.c.b16 %v4717, %v4713
      %5230 = vmatpush.bf16.msra.mxu0 %v4746
      %5231 = vmatpush.bf16.msra.mxu0 %v4742
      %5232 = vmatpush.bf16.msra.mxu0 %v4738
      %5233 = vmatpush.bf16.msra.mxu0 %v4734
      %5234 = vmatpush.bf16.msra.mxu0 %v4730
      %5235 = vmatpush.bf16.msra.mxu0 %v4726
      %5236 = vmatpush.bf16.msra.mxu0 %v4722
      %5237 = vmatpush.bf16.msra.mxu0 %v4718
      %5238 = vmatmul.bf16.gmra.mxu0 %v3686
      %v5239 = vpop.f32.mrf.mxu0
      %v5240 = vadd.f32 0.0, %v5239
      %v5241 = vpop.f32.mrf.mxu0
      %v5242 = vadd.f32 0.0, %v5241
      %5243 = vdwg.mxu0
      %5244 = vmatpush.bf16.msra.mxu0 %v4778
      %5245 = vmatpush.bf16.msra.mxu0 %v4774
      %5246 = vmatpush.bf16.msra.mxu0 %v4770
      %5247 = vmatpush.bf16.msra.mxu0 %v4766
      %5248 = vmatpush.bf16.msra.mxu0 %v4762
      %5249 = vmatpush.bf16.msra.mxu0 %v4758
      %5250 = vmatpush.bf16.msra.mxu0 %v4754
      %5251 = vmatpush.bf16.msra.mxu0 %v4750
      %5252 = vmatmul.bf16.gmra.mxu0 %v3687
      %v5253 = vpop.f32.mrf.mxu0
      %v5254 = vadd.f32 %v5240, %v5253
      %v5255 = vpop.f32.mrf.mxu0
      %v5256 = vadd.f32 %v5242, %v5255
      %5257 = vdwg.mxu0
      %5258 = vmatpush.bf16.msra.mxu0 %v4810
      %5259 = vmatpush.bf16.msra.mxu0 %v4806
      %5260 = vmatpush.bf16.msra.mxu0 %v4802
      %5261 = vmatpush.bf16.msra.mxu0 %v4798
      %5262 = vmatpush.bf16.msra.mxu0 %v4794
      %5263 = vmatpush.bf16.msra.mxu0 %v4790
      %5264 = vmatpush.bf16.msra.mxu0 %v4786
      %5265 = vmatpush.bf16.msra.mxu0 %v4782
      %5266 = vmatmul.bf16.gmra.mxu0 %v3688
      %v5267 = vpop.f32.mrf.mxu0
      %v5268 = vadd.f32 %v5254, %v5267
      %v5269 = vpop.f32.mrf.mxu0
      %v5270 = vadd.f32 %v5256, %v5269
      %5271 = vdwg.mxu0
      %5272 = vmatpush.bf16.msra.mxu0 %v4842
      %5273 = vmatpush.bf16.msra.mxu0 %v4838
      %5274 = vmatpush.bf16.msra.mxu0 %v4834
      %5275 = vmatpush.bf16.msra.mxu0 %v4830
      %5276 = vmatpush.bf16.msra.mxu0 %v4826
      %5277 = vmatpush.bf16.msra.mxu0 %v4822
      %5278 = vmatpush.bf16.msra.mxu0 %v4818
      %5279 = vmatpush.bf16.msra.mxu0 %v4814
      %5280 = vmatmul.bf16.gmra.mxu0 %v3689
      %v5281 = vpop.f32.mrf.mxu0
      %v5282 = vadd.f32 %v5268, %v5281
      %v5283 = vpop.f32.mrf.mxu0
      %v5284 = vadd.f32 %v5270, %v5283
      %5285 = vdwg.mxu0
      %5286 = vmatpush.bf16.msra.mxu0 %v4874
      %5287 = vmatpush.bf16.msra.mxu0 %v4870
      %5288 = vmatpush.bf16.msra.mxu0 %v4866
      %5289 = vmatpush.bf16.msra.mxu0 %v4862
      %5290 = vmatpush.bf16.msra.mxu0 %v4858
      %5291 = vmatpush.bf16.msra.mxu0 %v4854
      %5292 = vmatpush.bf16.msra.mxu0 %v4850
      %5293 = vmatpush.bf16.msra.mxu0 %v4846
      %5294 = vmatmul.bf16.gmra.mxu0 %v3690
      %v5295 = vpop.f32.mrf.mxu0
      %v5296 = vadd.f32 %v5282, %v5295
      %v5297 = vpop.f32.mrf.mxu0
      %v5298 = vadd.f32 %v5284, %v5297
      %5299 = vdwg.mxu0
      %5300 = vmatpush.bf16.msra.mxu0 %v4906
      %5301 = vmatpush.bf16.msra.mxu0 %v4902
      %5302 = vmatpush.bf16.msra.mxu0 %v4898
      %5303 = vmatpush.bf16.msra.mxu0 %v4894
      %5304 = vmatpush.bf16.msra.mxu0 %v4890
      %5305 = vmatpush.bf16.msra.mxu0 %v4886
      %5306 = vmatpush.bf16.msra.mxu0 %v4882
      %5307 = vmatpush.bf16.msra.mxu0 %v4878
      %5308 = vmatmul.bf16.gmra.mxu0 %v3691
      %v5309 = vpop.f32.mrf.mxu0
      %v5310 = vadd.f32 %v5296, %v5309
      %v5311 = vpop.f32.mrf.mxu0
      %v5312 = vadd.f32 %v5298, %v5311
      %5313 = vdwg.mxu0
      %5314 = vmatpush.bf16.msra.mxu0 %v4938
      %5315 = vmatpush.bf16.msra.mxu0 %v4934
      %5316 = vmatpush.bf16.msra.mxu0 %v4930
      %5317 = vmatpush.bf16.msra.mxu0 %v4926
      %5318 = vmatpush.bf16.msra.mxu0 %v4922
      %5319 = vmatpush.bf16.msra.mxu0 %v4918
      %5320 = vmatpush.bf16.msra.mxu0 %v4914
      %5321 = vmatpush.bf16.msra.mxu0 %v4910
      %5322 = vmatmul.bf16.gmra.mxu0 %v3692
      %v5323 = vpop.f32.mrf.mxu0
      %v5324 = vadd.f32 %v5310, %v5323
      %v5325 = vpop.f32.mrf.mxu0
      %v5326 = vadd.f32 %v5312, %v5325
      %5327 = vdwg.mxu0
      %5328 = vmatpush.bf16.msra.mxu0 %v4970
      %5329 = vmatpush.bf16.msra.mxu0 %v4966
      %5330 = vmatpush.bf16.msra.mxu0 %v4962
      %5331 = vmatpush.bf16.msra.mxu0 %v4958
      %5332 = vmatpush.bf16.msra.mxu0 %v4954
      %5333 = vmatpush.bf16.msra.mxu0 %v4950
      %5334 = vmatpush.bf16.msra.mxu0 %v4946
      %5335 = vmatpush.bf16.msra.mxu0 %v4942
      %5336 = vmatmul.bf16.gmra.mxu0 %v3693
      %v5337 = vpop.f32.mrf.mxu0
      %v5338 = vadd.f32 %v5324, %v5337
      %v5339 = vpop.f32.mrf.mxu0
      %v5340 = vadd.f32 %v5326, %v5339
      %5341 = vdwg.mxu0
      %5342 = vmatpush.bf16.msra.mxu0 %v4747
      %5343 = vmatpush.bf16.msra.mxu0 %v4743
      %5344 = vmatpush.bf16.msra.mxu0 %v4739
      %5345 = vmatpush.bf16.msra.mxu0 %v4735
      %5346 = vmatpush.bf16.msra.mxu0 %v4731
      %5347 = vmatpush.bf16.msra.mxu0 %v4727
      %5348 = vmatpush.bf16.msra.mxu0 %v4723
      %5349 = vmatpush.bf16.msra.mxu0 %v4719
      %5350 = vmatmul.bf16.gmra.mxu0 %v3686
      %v5351 = vpop.f32.mrf.mxu0
      %v5352 = vadd.f32 0.0, %v5351
      %v5353 = vpop.f32.mrf.mxu0
      %v5354 = vadd.f32 0.0, %v5353
      %5355 = vdwg.mxu0
      %5356 = vmatpush.bf16.msra.mxu0 %v4779
      %5357 = vmatpush.bf16.msra.mxu0 %v4775
      %5358 = vmatpush.bf16.msra.mxu0 %v4771
      %5359 = vmatpush.bf16.msra.mxu0 %v4767
      %5360 = vmatpush.bf16.msra.mxu0 %v4763
      %5361 = vmatpush.bf16.msra.mxu0 %v4759
      %5362 = vmatpush.bf16.msra.mxu0 %v4755
      %5363 = vmatpush.bf16.msra.mxu0 %v4751
      %5364 = vmatmul.bf16.gmra.mxu0 %v3687
      %v5365 = vpop.f32.mrf.mxu0
      %v5366 = vadd.f32 %v5352, %v5365
      %v5367 = vpop.f32.mrf.mxu0
      %v5368 = vadd.f32 %v5354, %v5367
      %5369 = vdwg.mxu0
      %5370 = vmatpush.bf16.msra.mxu0 %v4811
      %5371 = vmatpush.bf16.msra.mxu0 %v4807
      %5372 = vmatpush.bf16.msra.mxu0 %v4803
      %5373 = vmatpush.bf16.msra.mxu0 %v4799
      %5374 = vmatpush.bf16.msra.mxu0 %v4795
      %5375 = vmatpush.bf16.msra.mxu0 %v4791
      %5376 = vmatpush.bf16.msra.mxu0 %v4787
      %5377 = vmatpush.bf16.msra.mxu0 %v4783
      %5378 = vmatmul.bf16.gmra.mxu0 %v3688
      %v5379 = vpop.f32.mrf.mxu0
      %v5380 = vadd.f32 %v5366, %v5379
      %v5381 = vpop.f32.mrf.mxu0
      %v5382 = vadd.f32 %v5368, %v5381
      %5383 = vdwg.mxu0
      %5384 = vmatpush.bf16.msra.mxu0 %v4843
      %5385 = vmatpush.bf16.msra.mxu0 %v4839
      %5386 = vmatpush.bf16.msra.mxu0 %v4835
      %5387 = vmatpush.bf16.msra.mxu0 %v4831
      %5388 = vmatpush.bf16.msra.mxu0 %v4827
      %5389 = vmatpush.bf16.msra.mxu0 %v4823
      %5390 = vmatpush.bf16.msra.mxu0 %v4819
      %5391 = vmatpush.bf16.msra.mxu0 %v4815
      %5392 = vmatmul.bf16.gmra.mxu0 %v3689
      %v5393 = vpop.f32.mrf.mxu0
      %v5394 = vadd.f32 %v5380, %v5393
      %v5395 = vpop.f32.mrf.mxu0
      %v5396 = vadd.f32 %v5382, %v5395
      %5397 = vdwg.mxu0
      %5398 = vmatpush.bf16.msra.mxu0 %v4875
      %5399 = vmatpush.bf16.msra.mxu0 %v4871
      %5400 = vmatpush.bf16.msra.mxu0 %v4867
      %5401 = vmatpush.bf16.msra.mxu0 %v4863
      %5402 = vmatpush.bf16.msra.mxu0 %v4859
      %5403 = vmatpush.bf16.msra.mxu0 %v4855
      %5404 = vmatpush.bf16.msra.mxu0 %v4851
      %5405 = vmatpush.bf16.msra.mxu0 %v4847
      %5406 = vmatmul.bf16.gmra.mxu0 %v3690
      %v5407 = vpop.f32.mrf.mxu0
      %v5408 = vadd.f32 %v5394, %v5407
      %v5409 = vpop.f32.mrf.mxu0
      %v5410 = vadd.f32 %v5396, %v5409
      %5411 = vdwg.mxu0
      %5412 = vmatpush.bf16.msra.mxu0 %v4907
      %5413 = vmatpush.bf16.msra.mxu0 %v4903
      %5414 = vmatpush.bf16.msra.mxu0 %v4899
      %5415 = vmatpush.bf16.msra.mxu0 %v4895
      %5416 = vmatpush.bf16.msra.mxu0 %v4891
      %5417 = vmatpush.bf16.msra.mxu0 %v4887
      %5418 = vmatpush.bf16.msra.mxu0 %v4883
      %5419 = vmatpush.bf16.msra.mxu0 %v4879
      %5420 = vmatmul.bf16.gmra.mxu0 %v3691
      %v5421 = vpop.f32.mrf.mxu0
      %v5422 = vadd.f32 %v5408, %v5421
      %v5423 = vpop.f32.mrf.mxu0
      %v5424 = vadd.f32 %v5410, %v5423
      %5425 = vdwg.mxu0
      %5426 = vmatpush.bf16.msra.mxu0 %v4939
      %5427 = vmatpush.bf16.msra.mxu0 %v4935
      %5428 = vmatpush.bf16.msra.mxu0 %v4931
      %5429 = vmatpush.bf16.msra.mxu0 %v4927
      %5430 = vmatpush.bf16.msra.mxu0 %v4923
      %5431 = vmatpush.bf16.msra.mxu0 %v4919
      %5432 = vmatpush.bf16.msra.mxu0 %v4915
      %5433 = vmatpush.bf16.msra.mxu0 %v4911
      %5434 = vmatmul.bf16.gmra.mxu0 %v3692
      %v5435 = vpop.f32.mrf.mxu0
      %v5436 = vadd.f32 %v5422, %v5435
      %v5437 = vpop.f32.mrf.mxu0
      %v5438 = vadd.f32 %v5424, %v5437
      %5439 = vdwg.mxu0
      %5440 = vmatpush.bf16.msra.mxu0 %v4971
      %5441 = vmatpush.bf16.msra.mxu0 %v4967
      %5442 = vmatpush.bf16.msra.mxu0 %v4963
      %5443 = vmatpush.bf16.msra.mxu0 %v4959
      %5444 = vmatpush.bf16.msra.mxu0 %v4955
      %5445 = vmatpush.bf16.msra.mxu0 %v4951
      %5446 = vmatpush.bf16.msra.mxu0 %v4947
      %5447 = vmatpush.bf16.msra.mxu0 %v4943
      %5448 = vmatmul.bf16.gmra.mxu0 %v3693
      %v5449 = vpop.f32.mrf.mxu0
      %v5450 = vadd.f32 %v5436, %v5449
      %v5451 = vpop.f32.mrf.mxu0
      %v5452 = vadd.f32 %v5438, %v5451
      %5453 = vdwg.mxu0
      %5454 = vmatpush.bf16.msra.mxu0 %v4748
      %5455 = vmatpush.bf16.msra.mxu0 %v4744
      %5456 = vmatpush.bf16.msra.mxu0 %v4740
      %5457 = vmatpush.bf16.msra.mxu0 %v4736
      %5458 = vmatpush.bf16.msra.mxu0 %v4732
      %5459 = vmatpush.bf16.msra.mxu0 %v4728
      %5460 = vmatpush.bf16.msra.mxu0 %v4724
      %5461 = vmatpush.bf16.msra.mxu0 %v4720
      %5462 = vmatmul.bf16.gmra.mxu0 %v3686
      %v5463 = vpop.f32.mrf.mxu0
      %v5464 = vadd.f32 0.0, %v5463
      %v5465 = vpop.f32.mrf.mxu0
      %v5466 = vadd.f32 0.0, %v5465
      %5467 = vdwg.mxu0
      %5468 = vmatpush.bf16.msra.mxu0 %v4780
      %5469 = vmatpush.bf16.msra.mxu0 %v4776
      %5470 = vmatpush.bf16.msra.mxu0 %v4772
      %5471 = vmatpush.bf16.msra.mxu0 %v4768
      %5472 = vmatpush.bf16.msra.mxu0 %v4764
      %5473 = vmatpush.bf16.msra.mxu0 %v4760
      %5474 = vmatpush.bf16.msra.mxu0 %v4756
      %5475 = vmatpush.bf16.msra.mxu0 %v4752
      %5476 = vmatmul.bf16.gmra.mxu0 %v3687
      %v5477 = vpop.f32.mrf.mxu0
      %v5478 = vadd.f32 %v5464, %v5477
      %v5479 = vpop.f32.mrf.mxu0
      %v5480 = vadd.f32 %v5466, %v5479
      %5481 = vdwg.mxu0
      %5482 = vmatpush.bf16.msra.mxu0 %v4812
      %5483 = vmatpush.bf16.msra.mxu0 %v4808
      %5484 = vmatpush.bf16.msra.mxu0 %v4804
      %5485 = vmatpush.bf16.msra.mxu0 %v4800
      %5486 = vmatpush.bf16.msra.mxu0 %v4796
      %5487 = vmatpush.bf16.msra.mxu0 %v4792
      %5488 = vmatpush.bf16.msra.mxu0 %v4788
      %5489 = vmatpush.bf16.msra.mxu0 %v4784
      %5490 = vmatmul.bf16.gmra.mxu0 %v3688
      %v5491 = vpop.f32.mrf.mxu0
      %v5492 = vadd.f32 %v5478, %v5491
      %v5493 = vpop.f32.mrf.mxu0
      %v5494 = vadd.f32 %v5480, %v5493
      %5495 = vdwg.mxu0
      %5496 = vmatpush.bf16.msra.mxu0 %v4844
      %5497 = vmatpush.bf16.msra.mxu0 %v4840
      %5498 = vmatpush.bf16.msra.mxu0 %v4836
      %5499 = vmatpush.bf16.msra.mxu0 %v4832
      %5500 = vmatpush.bf16.msra.mxu0 %v4828
      %5501 = vmatpush.bf16.msra.mxu0 %v4824
      %5502 = vmatpush.bf16.msra.mxu0 %v4820
      %5503 = vmatpush.bf16.msra.mxu0 %v4816
      %5504 = vmatmul.bf16.gmra.mxu0 %v3689
      %v5505 = vpop.f32.mrf.mxu0
      %v5506 = vadd.f32 %v5492, %v5505
      %v5507 = vpop.f32.mrf.mxu0
      %v5508 = vadd.f32 %v5494, %v5507
      %5509 = vdwg.mxu0
      %5510 = vmatpush.bf16.msra.mxu0 %v4876
      %5511 = vmatpush.bf16.msra.mxu0 %v4872
      %5512 = vmatpush.bf16.msra.mxu0 %v4868
      %5513 = vmatpush.bf16.msra.mxu0 %v4864
      %5514 = vmatpush.bf16.msra.mxu0 %v4860
      %5515 = vmatpush.bf16.msra.mxu0 %v4856
      %5516 = vmatpush.bf16.msra.mxu0 %v4852
      %5517 = vmatpush.bf16.msra.mxu0 %v4848
      %5518 = vmatmul.bf16.gmra.mxu0 %v3690
      %v5519 = vpop.f32.mrf.mxu0
      %v5520 = vadd.f32 %v5506, %v5519
      %v5521 = vpop.f32.mrf.mxu0
      %v5522 = vadd.f32 %v5508, %v5521
      %5523 = vdwg.mxu0
      %5524 = vmatpush.bf16.msra.mxu0 %v4908
      %5525 = vmatpush.bf16.msra.mxu0 %v4904
      %5526 = vmatpush.bf16.msra.mxu0 %v4900
      %5527 = vmatpush.bf16.msra.mxu0 %v4896
      %5528 = vmatpush.bf16.msra.mxu0 %v4892
      %5529 = vmatpush.bf16.msra.mxu0 %v4888
      %5530 = vmatpush.bf16.msra.mxu0 %v4884
      %5531 = vmatpush.bf16.msra.mxu0 %v4880
      %5532 = vmatmul.bf16.gmra.mxu0 %v3691
      %v5533 = vpop.f32.mrf.mxu0
      %v5534 = vadd.f32 %v5520, %v5533
      %v5535 = vpop.f32.mrf.mxu0
      %v5536 = vadd.f32 %v5522, %v5535
      %5537 = vdwg.mxu0
      %5538 = vmatpush.bf16.msra.mxu0 %v4940
      %5539 = vmatpush.bf16.msra.mxu0 %v4936
      %5540 = vmatpush.bf16.msra.mxu0 %v4932
      %5541 = vmatpush.bf16.msra.mxu0 %v4928
      %5542 = vmatpush.bf16.msra.mxu0 %v4924
      %5543 = vmatpush.bf16.msra.mxu0 %v4920
      %5544 = vmatpush.bf16.msra.mxu0 %v4916
      %5545 = vmatpush.bf16.msra.mxu0 %v4912
      %5546 = vmatmul.bf16.gmra.mxu0 %v3692
      %v5547 = vpop.f32.mrf.mxu0
      %v5548 = vadd.f32 %v5534, %v5547
      %v5549 = vpop.f32.mrf.mxu0
      %v5550 = vadd.f32 %v5536, %v5549
      %5551 = vdwg.mxu0
      %5552 = vmatpush.bf16.msra.mxu0 %v4972
      %5553 = vmatpush.bf16.msra.mxu0 %v4968
      %5554 = vmatpush.bf16.msra.mxu0 %v4964
      %5555 = vmatpush.bf16.msra.mxu0 %v4960
      %5556 = vmatpush.bf16.msra.mxu0 %v4956
      %5557 = vmatpush.bf16.msra.mxu0 %v4952
      %5558 = vmatpush.bf16.msra.mxu0 %v4948
      %5559 = vmatpush.bf16.msra.mxu0 %v4944
      %5560 = vmatmul.bf16.gmra.mxu0 %v3693
      %v5561 = vpop.f32.mrf.mxu0
      %v5562 = vadd.f32 %v5548, %v5561
      %v5563 = vpop.f32.mrf.mxu0
      %v5564 = vadd.f32 %v5550, %v5563
      %5565 = vdwg.mxu0
      %5566 = vmatpush.bf16.msra.mxu0 %v4749
      %5567 = vmatpush.bf16.msra.mxu0 %v4745
      %5568 = vmatpush.bf16.msra.mxu0 %v4741
      %5569 = vmatpush.bf16.msra.mxu0 %v4737
      %5570 = vmatpush.bf16.msra.mxu0 %v4733
      %5571 = vmatpush.bf16.msra.mxu0 %v4729
      %5572 = vmatpush.bf16.msra.mxu0 %v4725
      %5573 = vmatpush.bf16.msra.mxu0 %v4721
      %5574 = vmatmul.bf16.gmra.mxu0 %v3686
      %v5575 = vpop.f32.mrf.mxu0
      %v5576 = vadd.f32 0.0, %v5575
      %v5577 = vpop.f32.mrf.mxu0
      %v5578 = vadd.f32 0.0, %v5577
      %5579 = vdwg.mxu0
      %5580 = vmatpush.bf16.msra.mxu0 %v4781
      %5581 = vmatpush.bf16.msra.mxu0 %v4777
      %5582 = vmatpush.bf16.msra.mxu0 %v4773
      %5583 = vmatpush.bf16.msra.mxu0 %v4769
      %5584 = vmatpush.bf16.msra.mxu0 %v4765
      %5585 = vmatpush.bf16.msra.mxu0 %v4761
      %5586 = vmatpush.bf16.msra.mxu0 %v4757
      %5587 = vmatpush.bf16.msra.mxu0 %v4753
      %5588 = vmatmul.bf16.gmra.mxu0 %v3687
      %v5589 = vpop.f32.mrf.mxu0
      %v5590 = vadd.f32 %v5576, %v5589
      %v5591 = vpop.f32.mrf.mxu0
      %v5592 = vadd.f32 %v5578, %v5591
      %5593 = vdwg.mxu0
      %5594 = vmatpush.bf16.msra.mxu0 %v4813
      %5595 = vmatpush.bf16.msra.mxu0 %v4809
      %5596 = vmatpush.bf16.msra.mxu0 %v4805
      %5597 = vmatpush.bf16.msra.mxu0 %v4801
      %5598 = vmatpush.bf16.msra.mxu0 %v4797
      %5599 = vmatpush.bf16.msra.mxu0 %v4793
      %5600 = vmatpush.bf16.msra.mxu0 %v4789
      %5601 = vmatpush.bf16.msra.mxu0 %v4785
      %5602 = vmatmul.bf16.gmra.mxu0 %v3688
      %v5603 = vpop.f32.mrf.mxu0
      %v5604 = vadd.f32 %v5590, %v5603
      %v5605 = vpop.f32.mrf.mxu0
      %v5606 = vadd.f32 %v5592, %v5605
      %5607 = vdwg.mxu0
      %5608 = vmatpush.bf16.msra.mxu0 %v4845
      %5609 = vmatpush.bf16.msra.mxu0 %v4841
      %5610 = vmatpush.bf16.msra.mxu0 %v4837
      %5611 = vmatpush.bf16.msra.mxu0 %v4833
      %5612 = vmatpush.bf16.msra.mxu0 %v4829
      %5613 = vmatpush.bf16.msra.mxu0 %v4825
      %5614 = vmatpush.bf16.msra.mxu0 %v4821
      %5615 = vmatpush.bf16.msra.mxu0 %v4817
      %5616 = vmatmul.bf16.gmra.mxu0 %v3689
      %v5617 = vpop.f32.mrf.mxu0
      %v5618 = vadd.f32 %v5604, %v5617
      %v5619 = vpop.f32.mrf.mxu0
      %v5620 = vadd.f32 %v5606, %v5619
      %5621 = vdwg.mxu0
      %5622 = vmatpush.bf16.msra.mxu0 %v4877
      %5623 = vmatpush.bf16.msra.mxu0 %v4873
      %5624 = vmatpush.bf16.msra.mxu0 %v4869
      %5625 = vmatpush.bf16.msra.mxu0 %v4865
      %5626 = vmatpush.bf16.msra.mxu0 %v4861
      %5627 = vmatpush.bf16.msra.mxu0 %v4857
      %5628 = vmatpush.bf16.msra.mxu0 %v4853
      %5629 = vmatpush.bf16.msra.mxu0 %v4849
      %5630 = vmatmul.bf16.gmra.mxu0 %v3690
      %v5631 = vpop.f32.mrf.mxu0
      %v5632 = vadd.f32 %v5618, %v5631
      %v5633 = vpop.f32.mrf.mxu0
      %v5634 = vadd.f32 %v5620, %v5633
      %5635 = vdwg.mxu0
      %5636 = vmatpush.bf16.msra.mxu0 %v4909
      %5637 = vmatpush.bf16.msra.mxu0 %v4905
      %5638 = vmatpush.bf16.msra.mxu0 %v4901
      %5639 = vmatpush.bf16.msra.mxu0 %v4897
      %5640 = vmatpush.bf16.msra.mxu0 %v4893
      %5641 = vmatpush.bf16.msra.mxu0 %v4889
      %5642 = vmatpush.bf16.msra.mxu0 %v4885
      %5643 = vmatpush.bf16.msra.mxu0 %v4881
      %5644 = vmatmul.bf16.gmra.mxu0 %v3691
      %v5645 = vpop.f32.mrf.mxu0
      %v5646 = vadd.f32 %v5632, %v5645
      %v5647 = vpop.f32.mrf.mxu0
      %v5648 = vadd.f32 %v5634, %v5647
      %5649 = vdwg.mxu0
      %5650 = vmatpush.bf16.msra.mxu0 %v4941
      %5651 = vmatpush.bf16.msra.mxu0 %v4937
      %5652 = vmatpush.bf16.msra.mxu0 %v4933
      %5653 = vmatpush.bf16.msra.mxu0 %v4929
      %5654 = vmatpush.bf16.msra.mxu0 %v4925
      %5655 = vmatpush.bf16.msra.mxu0 %v4921
      %5656 = vmatpush.bf16.msra.mxu0 %v4917
      %5657 = vmatpush.bf16.msra.mxu0 %v4913
      %5658 = vmatmul.bf16.gmra.mxu0 %v3692
      %v5659 = vpop.f32.mrf.mxu0
      %v5660 = vadd.f32 %v5646, %v5659
      %v5661 = vpop.f32.mrf.mxu0
      %v5662 = vadd.f32 %v5648, %v5661
      %5663 = vdwg.mxu0
      %5664 = vmatpush.bf16.msra.mxu0 %v4973
      %5665 = vmatpush.bf16.msra.mxu0 %v4969
      %5666 = vmatpush.bf16.msra.mxu0 %v4965
      %5667 = vmatpush.bf16.msra.mxu0 %v4961
      %5668 = vmatpush.bf16.msra.mxu0 %v4957
      %5669 = vmatpush.bf16.msra.mxu0 %v4953
      %5670 = vmatpush.bf16.msra.mxu0 %v4949
      %5671 = vmatpush.bf16.msra.mxu0 %v4945
      %5672 = vmatmul.bf16.gmra.mxu0 %v3693
      %v5673 = vpop.f32.mrf.mxu0
      %v5674 = vadd.f32 %v5660, %v5673
      %v5675 = vpop.f32.mrf.mxu0
      %v5676 = vadd.f32 %v5662, %v5675
      %5677 = vdwg.mxu0
      %v5678 = vpack.c.bf16 %v5450, %v5338
      %v5679 = vpack.c.bf16 %v5674, %v5562
      %v5680 = vpack.c.bf16 %v5452, %v5340
      %v5681 = vpack.c.bf16 %v5676, %v5564
      %v5682 = vld [vmem:[%s4] sm:$0xf]
      %5684 = vst [vmem:[#allocation1] ss:$9 sm:$0xff] %v5682
      %v5685 = vld [vmem:[#allocation1] sm:$0xff]
      %v5686 = vld [vmem:[#allocation1 + $0x9] sm:$0xff]
      %v5687 = vld [vmem:[#allocation1 + $0x12] sm:$0xff]
      %v5688 = vld [vmem:[#allocation1 + $0x1b] sm:$0xff]
      %v5689 = vpack.i.b16 %v5685, %v5685
      %v5691 = vperm.slane %v5689, 0
      %v5692 = vpack.i.b16 %v5686, %v5686
      %v5694 = vperm.slane %v5692, 0
      %v5695 = vpack.i.b16 %v5687, %v5687
      %v5697 = vperm.slane %v5695, 0
      %v5698 = vpack.i.b16 %v5688, %v5688
      %v5700 = vperm.slane %v5698, 0
      %v5701 = vunpack.c.l.bf16 %v5678
      %v5702 = vunpack.c.h.bf16 %v5678
      %v5703 = vunpack.c.l.bf16 %v5679
      %v5704 = vunpack.c.h.bf16 %v5679
      %v5705 = vunpack.c.l.bf16 %v5680
      %v5706 = vunpack.c.h.bf16 %v5680
      %v5707 = vunpack.c.l.bf16 %v5681
      %v5708 = vunpack.c.h.bf16 %v5681
      %v5709 = vunpack.c.l.bf16 %v5691
      %v5710 = vunpack.c.l.bf16 %v5694
      %v5711 = vunpack.c.l.bf16 %v5697
      %v5712 = vunpack.c.l.bf16 %v5700
      %v5713 = vadd.f32 %v5701, %v5709
      %v5714 = vadd.f32 %v5702, %v5710
      %v5715 = vadd.f32 %v5703, %v5711
      %v5716 = vadd.f32 %v5704, %v5712
      %v5717 = vadd.f32 %v5705, %v5709
      %v5718 = vadd.f32 %v5706, %v5710
      %v5719 = vadd.f32 %v5707, %v5711
      %v5720 = vadd.f32 %v5708, %v5712
      %v5721 = vpack.c.bf16 %v5714, %v5713
      %v5722 = vpack.c.bf16 %v5716, %v5715
      %v5723 = vpack.c.bf16 %v5718, %v5717
      %v5724 = vpack.c.bf16 %v5720, %v5719
      %v5725 = vunpack.c.l.bf16 %v5721
      %v5726 = vunpack.c.h.bf16 %v5721
      %v5727 = vunpack.c.l.bf16 %v5722
      %v5728 = vunpack.c.h.bf16 %v5722
      %v5729 = vunpack.c.l.bf16 %v5723
      %v5730 = vunpack.c.h.bf16 %v5723
      %v5731 = vunpack.c.l.bf16 %v5724
      %v5732 = vunpack.c.h.bf16 %v5724
      %v5733 = vmul.f32 %v5725, 0.20019531
      %v5734 = vmul.f32 %v5726, 0.20019531
      %v5735 = vmul.f32 %v5727, 0.20019531
      %v5736 = vmul.f32 %v5728, 0.20019531
      %v5737 = vmul.f32 %v5729, 0.20019531
      %v5738 = vmul.f32 %v5730, 0.20019531
      %v5739 = vmul.f32 %v5731, 0.20019531
      %v5740 = vmul.f32 %v5732, 0.20019531
      %v5741 = vpack.c.bf16 %v5734, %v5733
      %v5742 = vpack.c.bf16 %v5736, %v5735
      %v5743 = vpack.c.bf16 %v5738, %v5737
      %v5744 = vpack.c.bf16 %v5740, %v5739
      %v5745 = vunpack.c.l.bf16 %v5741
      %v5746 = vunpack.c.h.bf16 %v5741
      %v5747 = vunpack.c.l.bf16 %v5742
      %v5748 = vunpack.c.h.bf16 %v5742
      %v5749 = vunpack.c.l.bf16 %v5743
      %v5750 = vunpack.c.h.bf16 %v5743
      %v5751 = vunpack.c.l.bf16 %v5744
      %v5752 = vunpack.c.h.bf16 %v5744
      %v5753 = vmax.f32 %v5725, %v5745
      %v5754 = vmax.f32 %v5726, %v5746
      %v5755 = vmax.f32 %v5727, %v5747
      %v5756 = vmax.f32 %v5728, %v5748
      %v5757 = vmax.f32 %v5729, %v5749
      %v5758 = vmax.f32 %v5730, %v5750
      %v5759 = vmax.f32 %v5731, %v5751
      %v5760 = vmax.f32 %v5732, %v5752
      %v5761 = vpack.c.bf16 %v5757, %v5753
      %v5762 = vpack.c.bf16 %v5758, %v5754
      %v5763 = vpack.c.bf16 %v5759, %v5755
      %v5764 = vpack.c.bf16 %v5760, %v5756
      %v5765 = vld [vmem:[%s5] sm:$0xff]
      %v5766 = vld [vmem:[%s5 + $0x8] sm:$0xff]
      %v5767 = vld [vmem:[%s5 + $0x10] sm:$0xff]
      %v5768 = vld [vmem:[%s5 + $0x18] sm:$0xff]
      %v5769 = vld [vmem:[%s5 + $0x20] sm:$0xff]
      %v5770 = vld [vmem:[%s5 + $0x28] sm:$0xff]
      %v5771 = vld [vmem:[%s5 + $0x30] sm:$0xff]
      %v5772 = vld [vmem:[%s5 + $0x38] sm:$0xff]
      %v5773 = vld [vmem:[%s5 + $0x40] sm:$0xff]
      %v5774 = vld [vmem:[%s5 + $0x48] sm:$0xff]
      %v5775 = vld [vmem:[%s5 + $0x50] sm:$0xff]
      %v5776 = vld [vmem:[%s5 + $0x58] sm:$0xff]
      %v5777 = vld [vmem:[%s5 + $0x60] sm:$0xff]
      %v5778 = vld [vmem:[%s5 + $0x68] sm:$0xff]
      %v5779 = vld [vmem:[%s5 + $0x70] sm:$0xff]
      %v5780 = vld [vmem:[%s5 + $0x78] sm:$0xff]
      %v5781 = vld [vmem:[%s5 + $0x80] sm:$0xff]
      %v5782 = vld [vmem:[%s5 + $0x88] sm:$0xff]
      %v5783 = vld [vmem:[%s5 + $0x90] sm:$0xff]
      %v5784 = vld [vmem:[%s5 + $0x98] sm:$0xff]
      %v5785 = vld [vmem:[%s5 + $0xa0] sm:$0xff]
      %v5786 = vld [vmem:[%s5 + $0xa8] sm:$0xff]
      %v5787 = vld [vmem:[%s5 + $0xb0] sm:$0xff]
      %v5788 = vld [vmem:[%s5 + $0xb8] sm:$0xff]
      %v5789 = vld [vmem:[%s5 + $0xc0] sm:$0xff]
      %v5790 = vld [vmem:[%s5 + $0xc8] sm:$0xff]
      %v5791 = vld [vmem:[%s5 + $0xd0] sm:$0xff]
      %v5792 = vld [vmem:[%s5 + $0xd8] sm:$0xff]
      %v5793 = vld [vmem:[%s5 + $0xe0] sm:$0xff]
      %v5794 = vld [vmem:[%s5 + $0xe8] sm:$0xff]
      %v5795 = vld [vmem:[%s5 + $0xf0] sm:$0xff]
      %v5796 = vld [vmem:[%s5 + $0xf8] sm:$0xff]
      %v5797 = vld [vmem:[%s5 + $0x100] sm:$0xff]
      %v5798 = vld [vmem:[%s5 + $0x108] sm:$0xff]
      %v5799 = vld [vmem:[%s5 + $0x110] sm:$0xff]
      %v5800 = vld [vmem:[%s5 + $0x118] sm:$0xff]
      %v5801 = vld [vmem:[%s5 + $0x120] sm:$0xff]
      %v5802 = vld [vmem:[%s5 + $0x128] sm:$0xff]
      %v5803 = vld [vmem:[%s5 + $0x130] sm:$0xff]
      %v5804 = vld [vmem:[%s5 + $0x138] sm:$0xff]
      %v5805 = vld [vmem:[%s5 + $0x140] sm:$0xff]
      %v5806 = vld [vmem:[%s5 + $0x148] sm:$0xff]
      %v5807 = vld [vmem:[%s5 + $0x150] sm:$0xff]
      %v5808 = vld [vmem:[%s5 + $0x158] sm:$0xff]
      %v5809 = vld [vmem:[%s5 + $0x160] sm:$0xff]
      %v5810 = vld [vmem:[%s5 + $0x168] sm:$0xff]
      %v5811 = vld [vmem:[%s5 + $0x170] sm:$0xff]
      %v5812 = vld [vmem:[%s5 + $0x178] sm:$0xff]
      %v5813 = vld [vmem:[%s5 + $0x180] sm:$0xff]
      %v5814 = vld [vmem:[%s5 + $0x188] sm:$0xff]
      %v5815 = vld [vmem:[%s5 + $0x190] sm:$0xff]
      %v5816 = vld [vmem:[%s5 + $0x198] sm:$0xff]
      %v5817 = vld [vmem:[%s5 + $0x1a0] sm:$0xff]
      %v5818 = vld [vmem:[%s5 + $0x1a8] sm:$0xff]
      %v5819 = vld [vmem:[%s5 + $0x1b0] sm:$0xff]
      %v5820 = vld [vmem:[%s5 + $0x1b8] sm:$0xff]
      %v5821 = vld [vmem:[%s5 + $0x1c0] sm:$0xff]
      %v5822 = vld [vmem:[%s5 + $0x1c8] sm:$0xff]
      %v5823 = vld [vmem:[%s5 + $0x1d0] sm:$0xff]
      %v5824 = vld [vmem:[%s5 + $0x1d8] sm:$0xff]
      %v5825 = vld [vmem:[%s5 + $0x1e0] sm:$0xff]
      %v5826 = vld [vmem:[%s5 + $0x1e8] sm:$0xff]
      %v5827 = vld [vmem:[%s5 + $0x1f0] sm:$0xff]
      %v5828 = vld [vmem:[%s5 + $0x1f8] sm:$0xff]
      %v5893 = vunpack.c.l.b16 %v5765
      %v5894 = vunpack.c.h.b16 %v5765
      %v5895 = vunpack.c.l.b16 %v5766
      %v5896 = vunpack.c.h.b16 %v5766
      %v5897 = vunpack.c.l.b16 %v5767
      %v5898 = vunpack.c.h.b16 %v5767
      %v5899 = vunpack.c.l.b16 %v5768
      %v5900 = vunpack.c.h.b16 %v5768
      %v5901 = vunpack.c.l.b16 %v5769
      %v5902 = vunpack.c.h.b16 %v5769
      %v5903 = vunpack.c.l.b16 %v5770
      %v5904 = vunpack.c.h.b16 %v5770
      %v5905 = vunpack.c.l.b16 %v5771
      %v5906 = vunpack.c.h.b16 %v5771
      %v5907 = vunpack.c.l.b16 %v5772
      %v5908 = vunpack.c.h.b16 %v5772
      %v5909 = vunpack.c.l.b16 %v5773
      %v5910 = vunpack.c.h.b16 %v5773
      %v5911 = vunpack.c.l.b16 %v5774
      %v5912 = vunpack.c.h.b16 %v5774
      %v5913 = vunpack.c.l.b16 %v5775
      %v5914 = vunpack.c.h.b16 %v5775
      %v5915 = vunpack.c.l.b16 %v5776
      %v5916 = vunpack.c.h.b16 %v5776
      %v5917 = vunpack.c.l.b16 %v5777
      %v5918 = vunpack.c.h.b16 %v5777
      %v5919 = vunpack.c.l.b16 %v5778
      %v5920 = vunpack.c.h.b16 %v5778
      %v5921 = vunpack.c.l.b16 %v5779
      %v5922 = vunpack.c.h.b16 %v5779
      %v5923 = vunpack.c.l.b16 %v5780
      %v5924 = vunpack.c.h.b16 %v5780
      %v5925 = vunpack.c.l.b16 %v5781
      %v5926 = vunpack.c.h.b16 %v5781
      %v5927 = vunpack.c.l.b16 %v5782
      %v5928 = vunpack.c.h.b16 %v5782
      %v5929 = vunpack.c.l.b16 %v5783
      %v5930 = vunpack.c.h.b16 %v5783
      %v5931 = vunpack.c.l.b16 %v5784
      %v5932 = vunpack.c.h.b16 %v5784
      %v5933 = vunpack.c.l.b16 %v5785
      %v5934 = vunpack.c.h.b16 %v5785
      %v5935 = vunpack.c.l.b16 %v5786
      %v5936 = vunpack.c.h.b16 %v5786
      %v5937 = vunpack.c.l.b16 %v5787
      %v5938 = vunpack.c.h.b16 %v5787
      %v5939 = vunpack.c.l.b16 %v5788
      %v5940 = vunpack.c.h.b16 %v5788
      %v5941 = vunpack.c.l.b16 %v5789
      %v5942 = vunpack.c.h.b16 %v5789
      %v5943 = vunpack.c.l.b16 %v5790
      %v5944 = vunpack.c.h.b16 %v5790
      %v5945 = vunpack.c.l.b16 %v5791
      %v5946 = vunpack.c.h.b16 %v5791
      %v5947 = vunpack.c.l.b16 %v5792
      %v5948 = vunpack.c.h.b16 %v5792
      %v5949 = vunpack.c.l.b16 %v5793
      %v5950 = vunpack.c.h.b16 %v5793
      %v5951 = vunpack.c.l.b16 %v5794
      %v5952 = vunpack.c.h.b16 %v5794
      %v5953 = vunpack.c.l.b16 %v5795
      %v5954 = vunpack.c.h.b16 %v5795
      %v5955 = vunpack.c.l.b16 %v5796
      %v5956 = vunpack.c.h.b16 %v5796
      %v5957 = vunpack.c.l.b16 %v5797
      %v5958 = vunpack.c.h.b16 %v5797
      %v5959 = vunpack.c.l.b16 %v5798
      %v5960 = vunpack.c.h.b16 %v5798
      %v5961 = vunpack.c.l.b16 %v5799
      %v5962 = vunpack.c.h.b16 %v5799
      %v5963 = vunpack.c.l.b16 %v5800
      %v5964 = vunpack.c.h.b16 %v5800
      %v5965 = vunpack.c.l.b16 %v5801
      %v5966 = vunpack.c.h.b16 %v5801
      %v5967 = vunpack.c.l.b16 %v5802
      %v5968 = vunpack.c.h.b16 %v5802
      %v5969 = vunpack.c.l.b16 %v5803
      %v5970 = vunpack.c.h.b16 %v5803
      %v5971 = vunpack.c.l.b16 %v5804
      %v5972 = vunpack.c.h.b16 %v5804
      %v5973 = vunpack.c.l.b16 %v5805
      %v5974 = vunpack.c.h.b16 %v5805
      %v5975 = vunpack.c.l.b16 %v5806
      %v5976 = vunpack.c.h.b16 %v5806
      %v5977 = vunpack.c.l.b16 %v5807
      %v5978 = vunpack.c.h.b16 %v5807
      %v5979 = vunpack.c.l.b16 %v5808
      %v5980 = vunpack.c.h.b16 %v5808
      %v5981 = vunpack.c.l.b16 %v5809
      %v5982 = vunpack.c.h.b16 %v5809
      %v5983 = vunpack.c.l.b16 %v5810
      %v5984 = vunpack.c.h.b16 %v5810
      %v5985 = vunpack.c.l.b16 %v5811
      %v5986 = vunpack.c.h.b16 %v5811
      %v5987 = vunpack.c.l.b16 %v5812
      %v5988 = vunpack.c.h.b16 %v5812
      %v5989 = vunpack.c.l.b16 %v5813
      %v5990 = vunpack.c.h.b16 %v5813
      %v5991 = vunpack.c.l.b16 %v5814
      %v5992 = vunpack.c.h.b16 %v5814
      %v5993 = vunpack.c.l.b16 %v5815
      %v5994 = vunpack.c.h.b16 %v5815
      %v5995 = vunpack.c.l.b16 %v5816
      %v5996 = vunpack.c.h.b16 %v5816
      %v5997 = vunpack.c.l.b16 %v5817
      %v5998 = vunpack.c.h.b16 %v5817
      %v5999 = vunpack.c.l.b16 %v5818
      %v6000 = vunpack.c.h.b16 %v5818
      %v6001 = vunpack.c.l.b16 %v5819
      %v6002 = vunpack.c.h.b16 %v5819
      %v6003 = vunpack.c.l.b16 %v5820
      %v6004 = vunpack.c.h.b16 %v5820
      %v6005 = vunpack.c.l.b16 %v5821
      %v6006 = vunpack.c.h.b16 %v5821
      %v6007 = vunpack.c.l.b16 %v5822
      %v6008 = vunpack.c.h.b16 %v5822
      %v6009 = vunpack.c.l.b16 %v5823
      %v6010 = vunpack.c.h.b16 %v5823
      %v6011 = vunpack.c.l.b16 %v5824
      %v6012 = vunpack.c.h.b16 %v5824
      %v6013 = vunpack.c.l.b16 %v5825
      %v6014 = vunpack.c.h.b16 %v5825
      %v6015 = vunpack.c.l.b16 %v5826
      %v6016 = vunpack.c.h.b16 %v5826
      %v6017 = vunpack.c.l.b16 %v5827
      %v6018 = vunpack.c.h.b16 %v5827
      %v6019 = vunpack.c.l.b16 %v5828
      %v6020 = vunpack.c.h.b16 %v5828
      %v6021 = vpack.c.b16 %v5895, %v5893
      %v6022 = vpack.c.b16 %v5896, %v5894
      %v6023 = vpack.c.b16 %v5899, %v5897
      %v6024 = vpack.c.b16 %v5900, %v5898
      %v6025 = vpack.c.b16 %v5903, %v5901
      %v6026 = vpack.c.b16 %v5904, %v5902
      %v6027 = vpack.c.b16 %v5907, %v5905
      %v6028 = vpack.c.b16 %v5908, %v5906
      %v6029 = vpack.c.b16 %v5911, %v5909
      %v6030 = vpack.c.b16 %v5912, %v5910
      %v6031 = vpack.c.b16 %v5915, %v5913
      %v6032 = vpack.c.b16 %v5916, %v5914
      %v6033 = vpack.c.b16 %v5919, %v5917
      %v6034 = vpack.c.b16 %v5920, %v5918
      %v6035 = vpack.c.b16 %v5923, %v5921
      %v6036 = vpack.c.b16 %v5924, %v5922
      %v6037 = vpack.c.b16 %v5927, %v5925
      %v6038 = vpack.c.b16 %v5928, %v5926
      %v6039 = vpack.c.b16 %v5931, %v5929
      %v6040 = vpack.c.b16 %v5932, %v5930
      %v6041 = vpack.c.b16 %v5935, %v5933
      %v6042 = vpack.c.b16 %v5936, %v5934
      %v6043 = vpack.c.b16 %v5939, %v5937
      %v6044 = vpack.c.b16 %v5940, %v5938
      %v6045 = vpack.c.b16 %v5943, %v5941
      %v6046 = vpack.c.b16 %v5944, %v5942
      %v6047 = vpack.c.b16 %v5947, %v5945
      %v6048 = vpack.c.b16 %v5948, %v5946
      %v6049 = vpack.c.b16 %v5951, %v5949
      %v6050 = vpack.c.b16 %v5952, %v5950
      %v6051 = vpack.c.b16 %v5955, %v5953
      %v6052 = vpack.c.b16 %v5956, %v5954
      %v6053 = vpack.c.b16 %v5959, %v5957
      %v6054 = vpack.c.b16 %v5960, %v5958
      %v6055 = vpack.c.b16 %v5963, %v5961
      %v6056 = vpack.c.b16 %v5964, %v5962
      %v6057 = vpack.c.b16 %v5967, %v5965
      %v6058 = vpack.c.b16 %v5968, %v5966
      %v6059 = vpack.c.b16 %v5971, %v5969
      %v6060 = vpack.c.b16 %v5972, %v5970
      %v6061 = vpack.c.b16 %v5975, %v5973
      %v6062 = vpack.c.b16 %v5976, %v5974
      %v6063 = vpack.c.b16 %v5979, %v5977
      %v6064 = vpack.c.b16 %v5980, %v5978
      %v6065 = vpack.c.b16 %v5983, %v5981
      %v6066 = vpack.c.b16 %v5984, %v5982
      %v6067 = vpack.c.b16 %v5987, %v5985
      %v6068 = vpack.c.b16 %v5988, %v5986
      %v6069 = vpack.c.b16 %v5991, %v5989
      %v6070 = vpack.c.b16 %v5992, %v5990
      %v6071 = vpack.c.b16 %v5995, %v5993
      %v6072 = vpack.c.b16 %v5996, %v5994
      %v6073 = vpack.c.b16 %v5999, %v5997
      %v6074 = vpack.c.b16 %v6000, %v5998
      %v6075 = vpack.c.b16 %v6003, %v6001
      %v6076 = vpack.c.b16 %v6004, %v6002
      %v6077 = vpack.c.b16 %v6007, %v6005
      %v6078 = vpack.c.b16 %v6008, %v6006
      %v6079 = vpack.c.b16 %v6011, %v6009
      %v6080 = vpack.c.b16 %v6012, %v6010
      %v6081 = vpack.c.b16 %v6015, %v6013
      %v6082 = vpack.c.b16 %v6016, %v6014
      %v6083 = vpack.c.b16 %v6019, %v6017
      %v6084 = vpack.c.b16 %v6020, %v6018
      %6149 = vmatpush.bf16.msra.mxu0 %v6035
      %6150 = vmatpush.bf16.msra.mxu0 %v6033
      %6151 = vmatpush.bf16.msra.mxu0 %v6031
      %6152 = vmatpush.bf16.msra.mxu0 %v6029
      %6153 = vmatpush.bf16.msra.mxu0 %v6027
      %6154 = vmatpush.bf16.msra.mxu0 %v6025
      %6155 = vmatpush.bf16.msra.mxu0 %v6023
      %6156 = vmatpush.bf16.msra.mxu0 %v6021
      %6157 = vmatmul.bf16.gmra.mxu0 %v5761
      %v6158 = vpop.f32.mrf.mxu0
      %v6159 = vadd.f32 0.0, %v6158
      %v6160 = vpop.f32.mrf.mxu0
      %v6161 = vadd.f32 0.0, %v6160
      %6162 = vdwg.mxu0
      %6163 = vmatpush.bf16.msra.mxu0 %v6051
      %6164 = vmatpush.bf16.msra.mxu0 %v6049
      %6165 = vmatpush.bf16.msra.mxu0 %v6047
      %6166 = vmatpush.bf16.msra.mxu0 %v6045
      %6167 = vmatpush.bf16.msra.mxu0 %v6043
      %6168 = vmatpush.bf16.msra.mxu0 %v6041
      %6169 = vmatpush.bf16.msra.mxu0 %v6039
      %6170 = vmatpush.bf16.msra.mxu0 %v6037
      %6171 = vmatmul.bf16.gmra.mxu0 %v5762
      %v6172 = vpop.f32.mrf.mxu0
      %v6173 = vadd.f32 %v6159, %v6172
      %v6174 = vpop.f32.mrf.mxu0
      %v6175 = vadd.f32 %v6161, %v6174
      %6176 = vdwg.mxu0
      %6177 = vmatpush.bf16.msra.mxu0 %v6067
      %6178 = vmatpush.bf16.msra.mxu0 %v6065
      %6179 = vmatpush.bf16.msra.mxu0 %v6063
      %6180 = vmatpush.bf16.msra.mxu0 %v6061
      %6181 = vmatpush.bf16.msra.mxu0 %v6059
      %6182 = vmatpush.bf16.msra.mxu0 %v6057
      %6183 = vmatpush.bf16.msra.mxu0 %v6055
      %6184 = vmatpush.bf16.msra.mxu0 %v6053
      %6185 = vmatmul.bf16.gmra.mxu0 %v5763
      %v6186 = vpop.f32.mrf.mxu0
      %v6187 = vadd.f32 %v6173, %v6186
      %v6188 = vpop.f32.mrf.mxu0
      %v6189 = vadd.f32 %v6175, %v6188
      %6190 = vdwg.mxu0
      %6191 = vmatpush.bf16.msra.mxu0 %v6083
      %6192 = vmatpush.bf16.msra.mxu0 %v6081
      %6193 = vmatpush.bf16.msra.mxu0 %v6079
      %6194 = vmatpush.bf16.msra.mxu0 %v6077
      %6195 = vmatpush.bf16.msra.mxu0 %v6075
      %6196 = vmatpush.bf16.msra.mxu0 %v6073
      %6197 = vmatpush.bf16.msra.mxu0 %v6071
      %6198 = vmatpush.bf16.msra.mxu0 %v6069
      %6199 = vmatmul.bf16.gmra.mxu0 %v5764
      %v6200 = vpop.f32.mrf.mxu0
      %v6201 = vadd.f32 %v6187, %v6200
      %v6202 = vpop.f32.mrf.mxu0
      %v6203 = vadd.f32 %v6189, %v6202
      %6204 = vdwg.mxu0
      %6205 = vmatpush.bf16.msra.mxu0 %v6036
      %6206 = vmatpush.bf16.msra.mxu0 %v6034
      %6207 = vmatpush.bf16.msra.mxu0 %v6032
      %6208 = vmatpush.bf16.msra.mxu0 %v6030
      %6209 = vmatpush.bf16.msra.mxu0 %v6028
      %6210 = vmatpush.bf16.msra.mxu0 %v6026
      %6211 = vmatpush.bf16.msra.mxu0 %v6024
      %6212 = vmatpush.bf16.msra.mxu0 %v6022
      %6213 = vmatmul.bf16.gmra.mxu0 %v5761
      %v6214 = vpop.f32.mrf.mxu0
      %v6215 = vadd.f32 0.0, %v6214
      %v6216 = vpop.f32.mrf.mxu0
      %v6217 = vadd.f32 0.0, %v6216
      %6218 = vdwg.mxu0
      %6219 = vmatpush.bf16.msra.mxu0 %v6052
      %6220 = vmatpush.bf16.msra.mxu0 %v6050
      %6221 = vmatpush.bf16.msra.mxu0 %v6048
      %6222 = vmatpush.bf16.msra.mxu0 %v6046
      %6223 = vmatpush.bf16.msra.mxu0 %v6044
      %6224 = vmatpush.bf16.msra.mxu0 %v6042
      %6225 = vmatpush.bf16.msra.mxu0 %v6040
      %6226 = vmatpush.bf16.msra.mxu0 %v6038
      %6227 = vmatmul.bf16.gmra.mxu0 %v5762
      %v6228 = vpop.f32.mrf.mxu0
      %v6229 = vadd.f32 %v6215, %v6228
      %v6230 = vpop.f32.mrf.mxu0
      %v6231 = vadd.f32 %v6217, %v6230
      %6232 = vdwg.mxu0
      %6233 = vmatpush.bf16.msra.mxu0 %v6068
      %6234 = vmatpush.bf16.msra.mxu0 %v6066
      %6235 = vmatpush.bf16.msra.mxu0 %v6064
      %6236 = vmatpush.bf16.msra.mxu0 %v6062
      %6237 = vmatpush.bf16.msra.mxu0 %v6060
      %6238 = vmatpush.bf16.msra.mxu0 %v6058
      %6239 = vmatpush.bf16.msra.mxu0 %v6056
      %6240 = vmatpush.bf16.msra.mxu0 %v6054
      %6241 = vmatmul.bf16.gmra.mxu0 %v5763
      %v6242 = vpop.f32.mrf.mxu0
      %v6243 = vadd.f32 %v6229, %v6242
      %v6244 = vpop.f32.mrf.mxu0
      %v6245 = vadd.f32 %v6231, %v6244
      %6246 = vdwg.mxu0
      %6247 = vmatpush.bf16.msra.mxu0 %v6084
      %6248 = vmatpush.bf16.msra.mxu0 %v6082
      %6249 = vmatpush.bf16.msra.mxu0 %v6080
      %6250 = vmatpush.bf16.msra.mxu0 %v6078
      %6251 = vmatpush.bf16.msra.mxu0 %v6076
      %6252 = vmatpush.bf16.msra.mxu0 %v6074
      %6253 = vmatpush.bf16.msra.mxu0 %v6072
      %6254 = vmatpush.bf16.msra.mxu0 %v6070
      %6255 = vmatmul.bf16.gmra.mxu0 %v5764
      %v6256 = vpop.f32.mrf.mxu0
      %v6257 = vadd.f32 %v6243, %v6256
      %v6258 = vpop.f32.mrf.mxu0
      %v6259 = vadd.f32 %v6245, %v6258
      %6260 = vdwg.mxu0
      %v6261 = vpack.c.bf16 %v6257, %v6201
      %v6262 = vpack.c.bf16 %v6259, %v6203
      %v6263 = vld [vmem:[%s6] sm:$0x3]
      %6265 = vst [vmem:[#allocation1] ss:$9 sm:$0xff] %v6263
      %v6266 = vld [vmem:[#allocation1] sm:$0xff]
      %v6267 = vld [vmem:[#allocation1 + $0x9] sm:$0xff]
      %v6268 = vpack.i.b16 %v6266, %v6266
      %v6270 = vperm.slane %v6268, 0
      %v6271 = vpack.i.b16 %v6267, %v6267
      %v6273 = vperm.slane %v6271, 0
      %v6274 = vunpack.c.l.bf16 %v6261
      %v6275 = vunpack.c.h.bf16 %v6261
      %v6276 = vunpack.c.l.bf16 %v6262
      %v6277 = vunpack.c.h.bf16 %v6262
      %v6278 = vunpack.c.l.bf16 %v6270
      %v6279 = vunpack.c.l.bf16 %v6273
      %v6280 = vadd.f32 %v6274, %v6278
      %v6281 = vadd.f32 %v6275, %v6279
      %v6282 = vadd.f32 %v6276, %v6278
      %v6283 = vadd.f32 %v6277, %v6279
      %v6284 = vpack.c.bf16 %v6281, %v6280
      %v6285 = vpack.c.bf16 %v6283, %v6282
      %v6286 = vunpack.c.l.bf16 %v6284
      %v6287 = vunpack.c.h.bf16 %v6284
      %v6288 = vunpack.c.l.bf16 %v6285
      %v6289 = vunpack.c.h.bf16 %v6285
      %v6290 = vmul.f32 %v6286, 0.20019531
      %v6291 = vmul.f32 %v6287, 0.20019531
      %v6292 = vmul.f32 %v6288, 0.20019531
      %v6293 = vmul.f32 %v6289, 0.20019531
      %v6294 = vpack.c.bf16 %v6291, %v6290
      %v6295 = vpack.c.bf16 %v6293, %v6292
      %v6296 = vunpack.c.l.bf16 %v6294
      %v6297 = vunpack.c.h.bf16 %v6294
      %v6298 = vunpack.c.l.bf16 %v6295
      %v6299 = vunpack.c.h.bf16 %v6295
      %v6300 = vmax.f32 %v6286, %v6296
      %v6301 = vmax.f32 %v6287, %v6297
      %v6302 = vmax.f32 %v6288, %v6298
      %v6303 = vmax.f32 %v6289, %v6299
      %v6304 = vpack.c.bf16 %v6301, %v6300
      %v6305 = vpack.c.bf16 %v6303, %v6302
      %v6306 = vunpack.c.l.bf16 %v6304
      %v6307 = vunpack.c.h.bf16 %v6304
      %v6308 = vunpack.c.l.bf16 %v6305
      %v6309 = vunpack.c.h.bf16 %v6305
      %v6310 = vld [vmem:[%s7] sm:$0x3]
      %v6312 = vperm.slane %v6310, 0
      %v6313 = vperm.slane %v6310, 1
      %v6316 = vmul.f32 %v6306, %v6312
      %v6317 = vmul.f32 %v6307, %v6313
      %v6318 = vmul.f32 %v6308, %v6312
      %v6319 = vmul.f32 %v6309, %v6313
      %v6320 = vadd.f32 %v6316, %v6317
      %6321 = vadd.xlane.f32.xlu0 %v6320
      %v6322 = vpop.xlane.xlu0 %6321
      %v6323 = vadd.f32 %v6318, %v6319
      %6324 = vadd.xlane.f32.xlu0 %v6323
      %v6325 = vpop.xlane.xlu0 %6324
      %v6326 = vld [vmem:[#allocation2] sm:$0x1]
      %6328 = vset.pattern.permute.xlu0 0
      %6329 = vperm.xlu0 %6328, %v6326
      %v6330 = vpop.permute.xlu0 %6329
      %v6332 = vperm.slane %v6330, 0
      %v6333 = vadd.f32 %v6322, %v6332
      %v6334 = vadd.f32 %v6325, %v6332
      %v6335 = vxor.u32 %v6333, 2147483648
      %v6336 = vxor.u32 %v6334, 2147483648
      %v6337 = vmul.f32 %v6335, 1.442695
      %v6338 = vpow.pop %v6337
      %v6339 = vmul.f32 %v6336, 1.442695
      %v6340 = vpow.pop %v6339
      %v6341 = vadd.f32 %v6338, 1.0
      %v6342 = vadd.f32 %v6340, 1.0
      %v6343 = vrcp.pop %v6341
      %v6344 = vmul.f32 %v6341, %v6343
      %v6345 = vsub.f32 1.0, %v6344
      %v6346 = vmul.f32 %v6343, %v6345
      %v6347 = vadd.f32 %v6343, %v6346
      %vm6348 = vweird.f32 %v6341
      %vm6349 = vweird.f32 %v6343
      %vm6350 = vmor %vm6348, %vm6349
      %v6351 = vsel %vm6350, %v6343, %v6347
      %v6352 = vand.u32 2147483647, %v6341
      %vm6353 = vcmp.eq.f32.partialorder %v6352, 8.507059e+37
      %v6354 = vand.u32 %v6341, 2147483648
      %v6355 = vor.u32 1.1754944e-38, %v6354
      %v6356 = vsel %vm6353, %v6355, %v6351
      %v6357 = vmul.f32 1.0, %v6356
      %v6358 = vrcp.pop %v6342
      %v6359 = vmul.f32 %v6342, %v6358
      %v6360 = vsub.f32 1.0, %v6359
      %v6361 = vmul.f32 %v6358, %v6360
      %v6362 = vadd.f32 %v6358, %v6361
      %vm6363 = vweird.f32 %v6342
      %vm6364 = vweird.f32 %v6358
      %vm6365 = vmor %vm6363, %vm6364
      %v6366 = vsel %vm6365, %v6358, %v6362
      %v6367 = vand.u32 2147483647, %v6342
      %vm6368 = vcmp.eq.f32.partialorder %v6367, 8.507059e+37
      %v6369 = vand.u32 %v6342, 2147483648
      %v6370 = vor.u32 1.1754944e-38, %v6369
      %v6371 = vsel %vm6368, %v6370, %v6366
      %v6372 = vmul.f32 1.0, %v6371
      %v6375 = vlaneseq
      %v6376 = vand.u32 %v6375, 127
      %v6377 = vperm.slane %v6357, %v6376
      %v6378 = vadd.s32 %v6376, 4294967288
      %v6379 = vperm.slane %v6372, %v6378
      %vm6380 = vcmask 130112
      %v6381 = vsel %vm6380, %v6379, %v6377
      %vm6383 = vcmask 122880
      %6384 = vst.msk [vmem:[%s360] sm:$0x1] %vm6383, %v6381
      %p6385 = scmp.lt.s32.totalorder %s22, 1
      %s6386 = scalar_select %p6385, %s22, 1
      %s6387 = scalar_lea.vmem %s9, %s6386
      // Predicated region
      $region57: #{discriminator_forward.1} parent=55 // pred_check
        %p6388 = pneg %p234
      $region58: #{discriminator_forward.1} parent=55 // pred_check_branch
        %6390 = sbr.rel (%p6388) target = $region60
      $region59: #{discriminator_forward.1} parent=55 // pred_region
        _
      $region60: #{discriminator_forward.1} parent=55 // pred_fallthru
        _
    $region56: #{discriminator_forward.1} parent=5 // pred_fallthru
      _
    %p6391 = scmp.le.s32.totalorder 2, %s17
    // Predicated region
    $region61: #{discriminator_forward.1} parent=5 // pred_check
      %p6392 = pneg %p6391
    $region62: #{discriminator_forward.1} parent=5 // pred_check_branch
      %6394 = sbr.rel (%p6392) target = $region64
    $region63: #{discriminator_forward.1} parent=5 // pred_region
      %s6395 = ssub.s32 %s17, 2
      // Predicated region
      $region65: #{discriminator_forward.1} parent=63 // pred_check
        %p6396 = pneg %p240
      $region66: #{discriminator_forward.1} parent=63 // pred_check_branch
        %6398 = sbr.rel (%p6396) target = $region68
      $region67: #{discriminator_forward.1} parent=63 // pred_region
        %p6399 = scmp.lt.s32.totalorder %s23, 1
        %s6400 = scalar_select %p6399, %s23, 1
        %s6401 = scalar_lea.vmem %s9, %s6400
      $region68: #{discriminator_forward.1} parent=63 // pred_fallthru
        _
    $region64: #{discriminator_forward.1} parent=5 // pred_fallthru
      _
  $region6: #{discriminator_forward.1} parent=0 // loop_footer
    %s21 = sadd.s32 1, %s17
  $region7: #{discriminator_forward.1} parent=0 // loop_footer_branch
    %16 = sbr.rel target = $region3
  $region8: #{discriminator_forward.1} parent=0 // loop_exit
    _

</llo_original>
